<compile_context>
chip_gen: v5e
topology: v5e:2x2
jax: 0.10.0
libtpu: 0.0.40
codegen_flags: <defaults>
</compile_context>

<pallas_src>
import numpy as np
import jax
import jax.numpy as jnp
from jax.experimental import pallas as pl
from jax.experimental.pallas import tpu as pltpu

_BN_EPS = 1e-5
_MAX_TILE_POINTS = 2048


def _round_up(a, m):
    return (a + m - 1) // m * m


# ----------------------------------------------------------------------------
# Parameter init (deterministic) and BatchNorm folding
# ----------------------------------------------------------------------------
def init_pointnet_encoder(key, zdim, input_dim=3):
    def linear(k, din, dout):
        kw, kb = jax.random.split(k)
        bound = 1.0 / np.sqrt(din)
        w = jax.random.uniform(kw, (din, dout), jnp.float32, -bound, bound)
        b = jax.random.uniform(kb, (1, dout), jnp.float32, -bound, bound)
        return w, b

    def batchnorm(k, dim):
        k1, k2, k3, k4 = jax.random.split(k, 4)
        gamma = 1.0 + 0.1 * jax.random.normal(k1, (1, dim), jnp.float32)
        beta = 0.1 * jax.random.normal(k2, (1, dim), jnp.float32)
        mean = 0.1 * jax.random.normal(k3, (1, dim), jnp.float32)
        var = jax.random.uniform(k4, (1, dim), jnp.float32, 0.5, 1.5)
        return gamma, beta, mean, var

    dims = [(input_dim, 128), (128, 128), (128, 256), (256, 512),   # conv1..4
            (512, 256), (256, 128), (128, zdim)]                    # fc1_m..fc3_m
    has_bn = [True, True, True, True, True, True, False]

    layers = []
    for (din, dout), hb in zip(dims, has_bn):
        key, k1, k2 = jax.random.split(key, 3)
        w, b = linear(k1, din, dout)
        bn = batchnorm(k2, dout) if hb else None
        layers.append({"w": w, "b": b, "bn": bn})
    return layers


def _fold_bn(layers):
    """Fold inference-mode BatchNorm into (W, b) in f32: y = (xW + b)*s + t."""
    folded = []
    for layer in layers:
        w, b = layer["w"], layer["b"]
        if layer["bn"] is not None:
            gamma, beta, mean, var = layer["bn"]
            scale = gamma * jax.lax.rsqrt(var + _BN_EPS)     # (1, dout)
            w = w * scale
            b = (b - mean) * scale + beta
        folded.append((w, b))
    return folded


# ----------------------------------------------------------------------------
# Forward wrapper (single fused pallas_call)
# ----------------------------------------------------------------------------
def pointnet_encoder_forward(layers, x):
    """x: (B, N, input_dim) point cloud -> (B, zdim)."""
    B, N, in_dim = x.shape
    folded = _fold_bn(layers)
    zdim = folded[-1][0].shape[1]
    zdim_pad = _round_up(zdim, 128)

    # ---- point-axis tiling: pad N to a multiple of 128 with repeated points
    # (duplicated points cannot change the max-pool), then pick the largest
    # aligned tile <= 2048 that divides the padded length.
    n_pad = _round_up(N, 128)
    TN = 128
    for cand in (_MAX_TILE_POINTS, 1024, 512, 256):
        if n_pad % cand == 0:
            TN = cand
            break
    n_tiles = n_pad // TN
    if n_pad != N:
        x = jnp.pad(x, ((0, 0), (0, n_pad - N), (0, 0)), mode="edge")
    x_cf = jnp.transpose(x, (0, 2, 1))        # (B, in_dim, n_pad): lane-dense

    # ---- pack weights: point MLP transposed (dout, din); bf16 for the MXU --
    conv_w, conv_b = [], []
    for i in range(4):
        w, b = folded[i]
        wt = jnp.transpose(w)                                  # (dout, din)
        conv_w.append(wt if i == 0 else wt.astype(jnp.bfloat16))  # conv1 stays f32 (VPU)
        conv_b.append(jnp.reshape(b, (-1, 1)))                 # (dout, 1) f32
    head_w, head_b = [], []
    for i in range(4, 7):
        w, b = folded[i]
        if i == 6 and zdim_pad != zdim:
            w = jnp.pad(w, ((0, 0), (0, zdim_pad - zdim)))
            b = jnp.pad(b, ((0, 0), (0, zdim_pad - zdim)))
        head_w.append(w.astype(jnp.bfloat16))                  # (din, dout) bf16
        head_b.append(b)                                       # (1, dout) f32

    def kernel(x_ref,
               w1_ref, b1_ref, w2_ref, b2_ref, w3_ref, b3_ref, w4_ref, b4_ref,
               wm1_ref, bm1_ref, wm2_ref, bm2_ref, wm3_ref, bm3_ref,
               out_ref, pooled_ref):
        t = pl.program_id(1)

        @pl.when(t == 0)
        def _():
            pooled_ref[...] = jnp.full(pooled_ref.shape, -jnp.inf,
                                       pooled_ref.dtype)

        xt = x_ref[0]                                   # (in_dim, TN) f32
        # ---- conv1 (K = in_dim = 3): VPU broadcast FMAs, not the MXU -------
        h = w1_ref[:, 0:1] * xt[0:1, :]
        for d in range(1, in_dim):
            h = h + w1_ref[:, d:d + 1] * xt[d:d + 1, :]
        h = jnp.maximum(h + b1_ref[...], 0.0)           # (128, TN) f32

        # ---- conv2..conv4: bf16 MXU, f32 accumulate, channels-first --------
        h = jnp.maximum(
            jnp.dot(w2_ref[...], h.astype(jnp.bfloat16),
                    preferred_element_type=jnp.float32) + b2_ref[...], 0.0)
        h = jnp.maximum(
            jnp.dot(w3_ref[...], h.astype(jnp.bfloat16),
                    preferred_element_type=jnp.float32) + b3_ref[...], 0.0)
        h = jnp.dot(w4_ref[...], h.astype(jnp.bfloat16),
                    preferred_element_type=jnp.float32) + b4_ref[...]
        #                                                (512, TN), BN only (no ReLU)

        # ---- running max over points: VPU-only fold of 128-lane chunks -----
        part = h[:, 0:128]
        for j in range(1, TN // 128):
            part = jnp.maximum(part, h[:, j * 128:(j + 1) * 128])
        pooled_ref[...] = jnp.maximum(pooled_ref[...], part)

        # ---- head MLP: once per batch element, on the last point tile ------
        @pl.when(t == pl.num_programs(1) - 1)
        def _():
            g = jnp.max(jnp.transpose(pooled_ref[...]), axis=0,
                        keepdims=True)                              # (1, 512)
            g = jnp.maximum(
                jnp.dot(g.astype(jnp.bfloat16), wm1_ref[...],
                        preferred_element_type=jnp.float32) + bm1_ref[...], 0.0)
            g = jnp.maximum(
                jnp.dot(g.astype(jnp.bfloat16), wm2_ref[...],
                        preferred_element_type=jnp.float32) + bm2_ref[...], 0.0)
            m = jnp.dot(g.astype(jnp.bfloat16), wm3_ref[...],
                        preferred_element_type=jnp.float32) + bm3_ref[...]
            out_ref[0] = m.astype(out_ref.dtype)                    # (1, zdim_pad)

    params = []
    for w, bias in zip(conv_w, conv_b):
        params += [w, bias]
    for w, bias in zip(head_w, head_b):
        params += [w, bias]

    in_specs = [pl.BlockSpec((1, in_dim, TN), lambda b, t: (b, 0, t))]
    for p in params:
        in_specs.append(pl.BlockSpec(p.shape, lambda b, t: (0, 0)))

    out = pl.pallas_call(
        kernel,
        out_shape=jax.ShapeDtypeStruct((B, 1, zdim_pad), x.dtype),
        grid_spec=pltpu.PrefetchScalarGridSpec(
            num_scalar_prefetch=0,
            grid=(B, n_tiles),
            in_specs=in_specs,
            out_specs=pl.BlockSpec((1, 1, zdim_pad), lambda b, t: (b, 0, 0)),
            scratch_shapes=[pltpu.VMEM((512, 128), jnp.float32)],
        ),
        compiler_params=pltpu.CompilerParams(
            dimension_semantics=("parallel", "arbitrary"),
            vmem_limit_bytes=32 * 1024 * 1024),
    )(x_cf, *params)
    return out[:, 0, :zdim]


# ----------------------------------------------------------------------------
# Pure-JAX reference (f32, explicit un-folded BatchNorm) for correctness check
# ----------------------------------------------------------------------------
def pointnet_encoder_reference(layers, x):
    def bn_apply(h, bn):
        gamma, beta, mean, var = bn
        return (h - mean) * jax.lax.rsqrt(var + _BN_EPS) * gamma + beta

    h = x
    for i in range(4):                       # conv1..conv4 (pointwise)
        layer = layers[i]
        h = h @ layer["w"] + layer["b"]
        h = bn_apply(h, layer["bn"])
        if i < 3:
            h = jnp.maximum(h, 0.0)          # conv4 has BN but no ReLU
    g = jnp.max(h, axis=1)                   # max over points -> (B, 512)
    for i in range(4, 7):                    # fc1_m, fc2_m, fc3_m
        layer = layers[i]
        g = g @ layer["w"] + layer["b"]
        if layer["bn"] is not None:
            g = bn_apply(g, layer["bn"])
            g = jnp.maximum(g, 0.0)
    return g


if __name__ == "__main__":
    zdim = 128
    input_dim = 3
    B, N = 2, 2500   # pads to 2560 points -> five 512-point tiles per batch elem

    key = jax.random.PRNGKey(0)
    kp, kx = jax.random.split(key)

    layers = init_pointnet_encoder(kp, zdim, input_dim)
    x = jax.random.normal(kx, (B, N, input_dim), jnp.float32)

    out = jax.block_until_ready(pointnet_encoder_forward(layers, x))
    ref = jax.block_until_ready(pointnet_encoder_reference(layers, x))

    # bf16 MXU operands (f32 accumulation) -> tolerance loosened vs f32 ref.
    np.testing.assert_allclose(np.asarray(out), np.asarray(ref),
                               rtol=5e-2, atol=5e-2)
    print("KERNEL_OK")
</pallas_src>

<mosaic_0001>
module attributes {stable_mosaic.version = 11 : i64} {
  func.func @kernel(%arg0: i32, %arg1: i32, %arg2: memref<1x3x512xf32, #tpu.memory_space<vmem>>, %arg3: memref<128x3xf32, #tpu.memory_space<vmem>>, %arg4: memref<128x1xf32, #tpu.memory_space<vmem>>, %arg5: memref<128x128xbf16, #tpu.memory_space<vmem>>, %arg6: memref<128x1xf32, #tpu.memory_space<vmem>>, %arg7: memref<256x128xbf16, #tpu.memory_space<vmem>>, %arg8: memref<256x1xf32, #tpu.memory_space<vmem>>, %arg9: memref<512x256xbf16, #tpu.memory_space<vmem>>, %arg10: memref<512x1xf32, #tpu.memory_space<vmem>>, %arg11: memref<512x256xbf16, #tpu.memory_space<vmem>>, %arg12: memref<1x256xf32, #tpu.memory_space<vmem>>, %arg13: memref<256x128xbf16, #tpu.memory_space<vmem>>, %arg14: memref<1x128xf32, #tpu.memory_space<vmem>>, %arg15: memref<128x128xbf16, #tpu.memory_space<vmem>>, %arg16: memref<1x128xf32, #tpu.memory_space<vmem>>, %arg17: memref<1x1x128xf32, #tpu.memory_space<vmem>>, %arg18: memref<512x128xf32, #tpu.memory_space<vmem>>) attributes {dimension_semantics = [#tpu.dimension_semantics<parallel>, #tpu.dimension_semantics<arbitrary>], iteration_bounds = array<i64: 2, 5>, scalar_prefetch = 0 : i64, scratch_operands = 1 : i64, tpu.core_type = #tpu.core_type<tc>, window_params = [{transform_indices = @transform_0, window_bounds = array<i64: 1, 3, 512>}, {pipeline_mode = #tpu.pipeline_mode<synchronous>, transform_indices = @transform_1, window_bounds = array<i64: 128, 3>}, {pipeline_mode = #tpu.pipeline_mode<synchronous>, transform_indices = @transform_2, window_bounds = array<i64: 128, 1>}, {pipeline_mode = #tpu.pipeline_mode<synchronous>, transform_indices = @transform_3, window_bounds = array<i64: 128, 128>}, {pipeline_mode = #tpu.pipeline_mode<synchronous>, transform_indices = @transform_4, window_bounds = array<i64: 128, 1>}, {pipeline_mode = #tpu.pipeline_mode<synchronous>, transform_indices = @transform_5, window_bounds = array<i64: 256, 128>}, {pipeline_mode = #tpu.pipeline_mode<synchronous>, transform_indices = @transform_6, window_bounds = array<i64: 256, 1>}, {pipeline_mode = #tpu.pipeline_mode<synchronous>, transform_indices = @transform_7, window_bounds = array<i64: 512, 256>}, {pipeline_mode = #tpu.pipeline_mode<synchronous>, transform_indices = @transform_8, window_bounds = array<i64: 512, 1>}, {pipeline_mode = #tpu.pipeline_mode<synchronous>, transform_indices = @transform_9, window_bounds = array<i64: 512, 256>}, {pipeline_mode = #tpu.pipeline_mode<synchronous>, transform_indices = @transform_10, window_bounds = array<i64: 1, 256>}, {pipeline_mode = #tpu.pipeline_mode<synchronous>, transform_indices = @transform_11, window_bounds = array<i64: 256, 128>}, {pipeline_mode = #tpu.pipeline_mode<synchronous>, transform_indices = @transform_12, window_bounds = array<i64: 1, 128>}, {pipeline_mode = #tpu.pipeline_mode<synchronous>, transform_indices = @transform_13, window_bounds = array<i64: 128, 128>}, {pipeline_mode = #tpu.pipeline_mode<synchronous>, transform_indices = @transform_14, window_bounds = array<i64: 1, 128>}, {transform_indices = @transform_15, window_bounds = array<i64: 1, 1, 128>}]} {
    %c0_i32 = arith.constant 0 : i32
    %0 = arith.cmpi eq, %arg1, %c0_i32 : i32
    %1 = arith.extui %0 : i1 to i32
    %c0_i32_0 = arith.constant 0 : i32
    %2 = arith.cmpi ne, %1, %c0_i32_0 : i32
    scf.if %2 {
      %cst_31 = arith.constant 0xFF800000 : f32
      %62 = vector.broadcast %cst_31 : f32 to vector<512x128xf32>
      %c0_32 = arith.constant 0 : index
      %c0_33 = arith.constant 0 : index
      %63 = vector.load %arg18[%c0_32, %c0_33] : memref<512x128xf32, #tpu.memory_space<vmem>>, vector<512x128xf32>
      tpu.vector_store %arg18[%c0_32, %c0_33], %62 {strides = array<i32>} : memref<512x128xf32, #tpu.memory_space<vmem>>, vector<512x128xf32>,
    } else {
    }
    %c0 = arith.constant 0 : index
    %c0_1 = arith.constant 0 : index
    %c0_2 = arith.constant 0 : index
    %3 = vector.load %arg2[%c0, %c0_1, %c0_2] : memref<1x3x512xf32, #tpu.memory_space<vmem>>, vector<1x3x512xf32>
    %4 = vector.shape_cast %3 : vector<1x3x512xf32> to vector<3x512xf32>
    %c0_3 = arith.constant 0 : index
    %c0_4 = arith.constant 0 : index
    %5 = vector.load %arg3[%c0_3, %c0_4] : memref<128x3xf32, #tpu.memory_space<vmem>>, vector<128x1xf32>
    %6 = vector.extract_strided_slice %4 {offsets = [0, 0], sizes = [1, 512], strides = [1, 1]} : vector<3x512xf32> to vector<1x512xf32>
    %7 = vector.broadcast %5 : vector<128x1xf32> to vector<128x512xf32>
    %8 = vector.broadcast %6 : vector<1x512xf32> to vector<128x512xf32>
    %9 = arith.mulf %7, %8 : vector<128x512xf32>
    %c0_5 = arith.constant 0 : index
    %c1 = arith.constant 1 : index
    %10 = vector.load %arg3[%c0_5, %c1] : memref<128x3xf32, #tpu.memory_space<vmem>>, vector<128x1xf32>
    %11 = vector.extract_strided_slice %4 {offsets = [1, 0], sizes = [1, 512], strides = [1, 1]} : vector<3x512xf32> to vector<1x512xf32>
    %12 = vector.broadcast %10 : vector<128x1xf32> to vector<128x512xf32>
    %13 = vector.broadcast %11 : vector<1x512xf32> to vector<128x512xf32>
    %14 = arith.mulf %12, %13 : vector<128x512xf32>
    %15 = arith.addf %9, %14 : vector<128x512xf32>
    %c0_6 = arith.constant 0 : index
    %c2 = arith.constant 2 : index
    %16 = vector.load %arg3[%c0_6, %c2] : memref<128x3xf32, #tpu.memory_space<vmem>>, vector<128x1xf32>
    %17 = vector.extract_strided_slice %4 {offsets = [2, 0], sizes = [1, 512], strides = [1, 1]} : vector<3x512xf32> to vector<1x512xf32>
    %18 = vector.broadcast %16 : vector<128x1xf32> to vector<128x512xf32>
    %19 = vector.broadcast %17 : vector<1x512xf32> to vector<128x512xf32>
    %20 = arith.mulf %18, %19 : vector<128x512xf32>
    %21 = arith.addf %15, %20 : vector<128x512xf32>
    %c0_7 = arith.constant 0 : index
    %c0_8 = arith.constant 0 : index
    %22 = vector.load %arg4[%c0_7, %c0_8] : memref<128x1xf32, #tpu.memory_space<vmem>>, vector<128x1xf32>
    %23 = vector.broadcast %22 : vector<128x1xf32> to vector<128x512xf32>
    %24 = arith.addf %21, %23 : vector<128x512xf32>
    %cst = arith.constant 0.000000e+00 : f32
    %25 = vector.broadcast %cst : f32 to vector<128x512xf32>
    %26 = arith.maximumf %24, %25 : vector<128x512xf32>
    %c0_9 = arith.constant 0 : index
    %c0_10 = arith.constant 0 : index
    %27 = vector.load %arg5[%c0_9, %c0_10] : memref<128x128xbf16, #tpu.memory_space<vmem>>, vector<128x128xbf16>
    %28 = arith.truncf %26 : vector<128x512xf32> to vector<128x512xbf16>
    %cst_11 = arith.constant dense<0.000000e+00> : vector<128x512xf32>
    %29 = tpu.matmul %27, %28, %cst_11 {dimension_numbers = #tpu.dot_dimension_numbers<[1], [0], [0], [1], [0, 0, 1, 1], [], []>} : vector<128x128xbf16>, vector<128x512xbf16>, vector<128x512xf32> -> vector<128x512xf32>
    %c0_12 = arith.constant 0 : index
    %c0_13 = arith.constant 0 : index
    %30 = vector.load %arg6[%c0_12, %c0_13] : memref<128x1xf32, #tpu.memory_space<vmem>>, vector<128x1xf32>
    %31 = vector.broadcast %30 : vector<128x1xf32> to vector<128x512xf32>
    %32 = arith.addf %29, %31 : vector<128x512xf32>
    %cst_14 = arith.constant 0.000000e+00 : f32
    %33 = vector.broadcast %cst_14 : f32 to vector<128x512xf32>
    %34 = arith.maximumf %32, %33 : vector<128x512xf32>
    %c0_15 = arith.constant 0 : index
    %c0_16 = arith.constant 0 : index
    %35 = vector.load %arg7[%c0_15, %c0_16] : memref<256x128xbf16, #tpu.memory_space<vmem>>, vector<256x128xbf16>
    %36 = arith.truncf %34 : vector<128x512xf32> to vector<128x512xbf16>
    %cst_17 = arith.constant dense<0.000000e+00> : vector<256x512xf32>
    %37 = tpu.matmul %35, %36, %cst_17 {dimension_numbers = #tpu.dot_dimension_numbers<[1], [0], [0], [1], [0, 0, 1, 1], [], []>} : vector<256x128xbf16>, vector<128x512xbf16>, vector<256x512xf32> -> vector<256x512xf32>
    %c0_18 = arith.constant 0 : index
    %c0_19 = arith.constant 0 : index
    %38 = vector.load %arg8[%c0_18, %c0_19] : memref<256x1xf32, #tpu.memory_space<vmem>>, vector<256x1xf32>
    %39 = vector.broadcast %38 : vector<256x1xf32> to vector<256x512xf32>
    %40 = arith.addf %37, %39 : vector<256x512xf32>
    %cst_20 = arith.constant 0.000000e+00 : f32
    %41 = vector.broadcast %cst_20 : f32 to vector<256x512xf32>
    %42 = arith.maximumf %40, %41 : vector<256x512xf32>
    %c0_21 = arith.constant 0 : index
    %c0_22 = arith.constant 0 : index
    %43 = vector.load %arg9[%c0_21, %c0_22] : memref<512x256xbf16, #tpu.memory_space<vmem>>, vector<512x256xbf16>
    %44 = arith.truncf %42 : vector<256x512xf32> to vector<256x512xbf16>
    %cst_23 = arith.constant dense<0.000000e+00> : vector<512x512xf32>
    %45 = tpu.matmul %43, %44, %cst_23 {dimension_numbers = #tpu.dot_dimension_numbers<[1], [0], [0], [1], [0, 0, 1, 1], [], []>} : vector<512x256xbf16>, vector<256x512xbf16>, vector<512x512xf32> -> vector<512x512xf32>
    %c0_24 = arith.constant 0 : index
    %c0_25 = arith.constant 0 : index
    %46 = vector.load %arg10[%c0_24, %c0_25] : memref<512x1xf32, #tpu.memory_space<vmem>>, vector<512x1xf32>
    %47 = vector.broadcast %46 : vector<512x1xf32> to vector<512x512xf32>
    %48 = arith.addf %45, %47 : vector<512x512xf32>
    %49 = vector.extract_strided_slice %48 {offsets = [0, 0], sizes = [512, 128], strides = [1, 1]} : vector<512x512xf32> to vector<512x128xf32>
    %50 = vector.extract_strided_slice %48 {offsets = [0, 128], sizes = [512, 128], strides = [1, 1]} : vector<512x512xf32> to vector<512x128xf32>
    %51 = arith.maximumf %49, %50 : vector<512x128xf32>
    %52 = vector.extract_strided_slice %48 {offsets = [0, 256], sizes = [512, 128], strides = [1, 1]} : vector<512x512xf32> to vector<512x128xf32>
    %53 = arith.maximumf %51, %52 : vector<512x128xf32>
    %54 = vector.extract_strided_slice %48 {offsets = [0, 384], sizes = [512, 128], strides = [1, 1]} : vector<512x512xf32> to vector<512x128xf32>
    %55 = arith.maximumf %53, %54 : vector<512x128xf32>
    %c0_26 = arith.constant 0 : index
    %c0_27 = arith.constant 0 : index
    %56 = vector.load %arg18[%c0_26, %c0_27] : memref<512x128xf32, #tpu.memory_space<vmem>>, vector<512x128xf32>
    %57 = arith.maximumf %56, %55 : vector<512x128xf32>
    %c0_28 = arith.constant 0 : index
    %c0_29 = arith.constant 0 : index
    %58 = vector.load %arg18[%c0_28, %c0_29] : memref<512x128xf32, #tpu.memory_space<vmem>>, vector<512x128xf32>
    tpu.vector_store %arg18[%c0_28, %c0_29], %57 {strides = array<i32>} : memref<512x128xf32, #tpu.memory_space<vmem>>, vector<512x128xf32>,
    %c4_i32 = arith.constant 4 : i32
    %59 = arith.cmpi eq, %arg1, %c4_i32 : i32
    %60 = arith.extui %59 : i1 to i32
    %c0_i32_30 = arith.constant 0 : i32
    %61 = arith.cmpi ne, %60, %c0_i32_30 : i32
    scf.if %61 {
      %c0_31 = arith.constant 0 : index
      %c0_32 = arith.constant 0 : index
      %62 = vector.load %arg18[%c0_31, %c0_32] : memref<512x128xf32, #tpu.memory_space<vmem>>, vector<512x128xf32>
      %63 = tpu.transpose %62, [1, 0] : vector<512x128xf32> -> vector<128x512xf32>
      %cst_33 = arith.constant dense<0xFF800000> : vector<512xf32>
      %64 = vector.multi_reduction <maximumf>, %63, %cst_33 [0] : vector<128x512xf32> to vector<512xf32>
      %65 = vector.shape_cast %64 : vector<512xf32> to vector<1x512xf32>
      %66 = arith.truncf %65 : vector<1x512xf32> to vector<1x512xbf16>
      %c0_34 = arith.constant 0 : index
      %c0_35 = arith.constant 0 : index
      %67 = vector.load %arg11[%c0_34, %c0_35] : memref<512x256xbf16, #tpu.memory_space<vmem>>, vector<512x256xbf16>
      %cst_36 = arith.constant dense<0.000000e+00> : vector<1x256xf32>
      %68 = tpu.matmul %66, %67, %cst_36 {dimension_numbers = #tpu.dot_dimension_numbers<[1], [0], [0], [1], [0, 0, 1, 1], [], []>} : vector<1x512xbf16>, vector<512x256xbf16>, vector<1x256xf32> -> vector<1x256xf32>
      %c0_37 = arith.constant 0 : index
      %c0_38 = arith.constant 0 : index
      %69 = vector.load %arg12[%c0_37, %c0_38] : memref<1x256xf32, #tpu.memory_space<vmem>>, vector<1x256xf32>
      %70 = arith.addf %68, %69 : vector<1x256xf32>
      %cst_39 = arith.constant 0.000000e+00 : f32
      %71 = vector.broadcast %cst_39 : f32 to vector<1x256xf32>
      %72 = arith.maximumf %70, %71 : vector<1x256xf32>
      %73 = arith.truncf %72 : vector<1x256xf32> to vector<1x256xbf16>
      %c0_40 = arith.constant 0 : index
      %c0_41 = arith.constant 0 : index
      %74 = vector.load %arg13[%c0_40, %c0_41] : memref<256x128xbf16, #tpu.memory_space<vmem>>, vector<256x128xbf16>
      %cst_42 = arith.constant dense<0.000000e+00> : vector<1x128xf32>
      %75 = tpu.matmul %73, %74, %cst_42 {dimension_numbers = #tpu.dot_dimension_numbers<[1], [0], [0], [1], [0, 0, 1, 1], [], []>} : vector<1x256xbf16>, vector<256x128xbf16>, vector<1x128xf32> -> vector<1x128xf32>
      %c0_43 = arith.constant 0 : index
      %c0_44 = arith.constant 0 : index
      %76 = vector.load %arg14[%c0_43, %c0_44] : memref<1x128xf32, #tpu.memory_space<vmem>>, vector<1x128xf32>
      %77 = arith.addf %75, %76 : vector<1x128xf32>
      %cst_45 = arith.constant 0.000000e+00 : f32
      %78 = vector.broadcast %cst_45 : f32 to vector<1x128xf32>
      %79 = arith.maximumf %77, %78 : vector<1x128xf32>
      %80 = arith.truncf %79 : vector<1x128xf32> to vector<1x128xbf16>
      %c0_46 = arith.constant 0 : index
      %c0_47 = arith.constant 0 : index
      %81 = vector.load %arg15[%c0_46, %c0_47] : memref<128x128xbf16, #tpu.memory_space<vmem>>, vector<128x128xbf16>
      %cst_48 = arith.constant dense<0.000000e+00> : vector<1x128xf32>
      %82 = tpu.matmul %80, %81, %cst_48 {dimension_numbers = #tpu.dot_dimension_numbers<[1], [0], [0], [1], [0, 0, 1, 1], [], []>} : vector<1x128xbf16>, vector<128x128xbf16>, vector<1x128xf32> -> vector<1x128xf32>
      %c0_49 = arith.constant 0 : index
      %c0_50 = arith.constant 0 : index
      %83 = vector.load %arg16[%c0_49, %c0_50] : memref<1x128xf32, #tpu.memory_space<vmem>>, vector<1x128xf32>
      %84 = arith.addf %82, %83 : vector<1x128xf32>
      %c0_51 = arith.constant 0 : index
      %c0_52 = arith.constant 0 : index
      %c0_53 = arith.constant 0 : index
      %85 = vector.load %arg17[%c0_51, %c0_52, %c0_53] : memref<1x1x128xf32, #tpu.memory_space<vmem>>, vector<1x1x128xf32>
      %86 = vector.shape_cast %85 : vector<1x1x128xf32> to vector<1x128xf32>
      %87 = vector.shape_cast %84 : vector<1x128xf32> to vector<1x1x128xf32>
      tpu.vector_store %arg17[%c0_51, %c0_52, %c0_53], %87 {strides = array<i32>} : memref<1x1x128xf32, #tpu.memory_space<vmem>>, vector<1x1x128xf32>,
    } else {
    }
    return
  }
  func.func @transform_0(%arg0: i32, %arg1: i32) -> (i32, i32, i32) {
    %c0_i32 = arith.constant 0 : i32
    %c0_i32_0 = arith.constant 0 : i32
    return %arg0, %c0_i32, %arg1 : i32, i32, i32
  }
  func.func @transform_1(%arg0: i32, %arg1: i32) -> (i32, i32) {
    %c0_i32 = arith.constant 0 : i32
    %c0_i32_0 = arith.constant 0 : i32
    %c0_i32_1 = arith.constant 0 : i32
    return %c0_i32, %c0_i32_0 : i32, i32
  }
  func.func @transform_2(%arg0: i32, %arg1: i32) -> (i32, i32) {
    %c0_i32 = arith.constant 0 : i32
    %c0_i32_0 = arith.constant 0 : i32
    %c0_i32_1 = arith.constant 0 : i32
    return %c0_i32, %c0_i32_0 : i32, i32
  }
  func.func @transform_3(%arg0: i32, %arg1: i32) -> (i32, i32) {
    %c0_i32 = arith.constant 0 : i32
    %c0_i32_0 = arith.constant 0 : i32
    %c0_i32_1 = arith.constant 0 : i32
    return %c0_i32, %c0_i32_0 : i32, i32
  }
  func.func @transform_4(%arg0: i32, %arg1: i32) -> (i32, i32) {
    %c0_i32 = arith.constant 0 : i32
    %c0_i32_0 = arith.constant 0 : i32
    %c0_i32_1 = arith.constant 0 : i32
    return %c0_i32, %c0_i32_0 : i32, i32
  }
  func.func @transform_5(%arg0: i32, %arg1: i32) -> (i32, i32) {
    %c0_i32 = arith.constant 0 : i32
    %c0_i32_0 = arith.constant 0 : i32
    %c0_i32_1 = arith.constant 0 : i32
    return %c0_i32, %c0_i32_0 : i32, i32
  }
  func.func @transform_6(%arg0: i32, %arg1: i32) -> (i32, i32) {
    %c0_i32 = arith.constant 0 : i32
    %c0_i32_0 = arith.constant 0 : i32
    %c0_i32_1 = arith.constant 0 : i32
    return %c0_i32, %c0_i32_0 : i32, i32
  }
  func.func @transform_7(%arg0: i32, %arg1: i32) -> (i32, i32) {
    %c0_i32 = arith.constant 0 : i32
    %c0_i32_0 = arith.constant 0 : i32
    %c0_i32_1 = arith.constant 0 : i32
    return %c0_i32, %c0_i32_0 : i32, i32
  }
  func.func @transform_8(%arg0: i32, %arg1: i32) -> (i32, i32) {
    %c0_i32 = arith.constant 0 : i32
    %c0_i32_0 = arith.constant 0 : i32
    %c0_i32_1 = arith.constant 0 : i32
    return %c0_i32, %c0_i32_0 : i32, i32
  }
  func.func @transform_9(%arg0: i32, %arg1: i32) -> (i32, i32) {
    %c0_i32 = arith.constant 0 : i32
    %c0_i32_0 = arith.constant 0 : i32
    %c0_i32_1 = arith.constant 0 : i32
    return %c0_i32, %c0_i32_0 : i32, i32
  }
  func.func @transform_10(%arg0: i32, %arg1: i32) -> (i32, i32) {
    %c0_i32 = arith.constant 0 : i32
    %c0_i32_0 = arith.constant 0 : i32
    %c0_i32_1 = arith.constant 0 : i32
    return %c0_i32, %c0_i32_0 : i32, i32
  }
  func.func @transform_11(%arg0: i32, %arg1: i32) -> (i32, i32) {
    %c0_i32 = arith.constant 0 : i32
    %c0_i32_0 = arith.constant 0 : i32
    %c0_i32_1 = arith.constant 0 : i32
    return %c0_i32, %c0_i32_0 : i32, i32
  }
  func.func @transform_12(%arg0: i32, %arg1: i32) -> (i32, i32) {
    %c0_i32 = arith.constant 0 : i32
    %c0_i32_0 = arith.constant 0 : i32
    %c0_i32_1 = arith.constant 0 : i32
    return %c0_i32, %c0_i32_0 : i32, i32
  }
  func.func @transform_13(%arg0: i32, %arg1: i32) -> (i32, i32) {
    %c0_i32 = arith.constant 0 : i32
    %c0_i32_0 = arith.constant 0 : i32
    %c0_i32_1 = arith.constant 0 : i32
    return %c0_i32, %c0_i32_0 : i32, i32
  }
  func.func @transform_14(%arg0: i32, %arg1: i32) -> (i32, i32) {
    %c0_i32 = arith.constant 0 : i32
    %c0_i32_0 = arith.constant 0 : i32
    %c0_i32_1 = arith.constant 0 : i32
    return %c0_i32, %c0_i32_0 : i32, i32
  }
  func.func @transform_15(%arg0: i32, %arg1: i32) -> (i32, i32, i32) {
    %c0_i32 = arith.constant 0 : i32
    %c0_i32_0 = arith.constant 0 : i32
    %c0_i32_1 = arith.constant 0 : i32
    return %arg0, %c0_i32, %c0_i32_0 : i32, i32, i32
  }
}

</mosaic_0001>

<llo_original>
// kernel: tpu_custom_call.1
$region0: #{tpu_custom_call.1}
  #allocation0 [shape = 'u32[]', space=smem, size = 0x4, offset = 0x4, fixed_abs, tag = 'smem constant byte address 0x4 - core index']
  #allocation1 [shape = 'u32[72,128]{1,0:T(1,128)}', space=vmem, size = 0x9000, scoped, tag = 'internal scratch']
  #allocation2 [shape = 'f32[512,128]{1,0:T(8,128)}', space=vmem, size = 0x40000, scoped, tag = 'scratch operand']
  %s0 = inlined_call_operand.vmem [shape: f32[2,3,2560], index: 0, kind: input, shape index: {}]
  %s1 = inlined_call_operand.vmem [shape: f32[128,3], index: 1, kind: input, shape index: {}]
  %s2 = inlined_call_operand.vmem [shape: f32[128,1], index: 2, kind: input, shape index: {}]
  %s3 = inlined_call_operand.hbm [shape: bf16[128,128], index: 3, kind: input, shape index: {}]
  %s4 = inlined_call_operand.vmem [shape: f32[128,1], index: 4, kind: input, shape index: {}]
  %s5 = inlined_call_operand.vmem [shape: bf16[256,128], index: 5, kind: input, shape index: {}]
  %s6 = inlined_call_operand.vmem [shape: f32[256,1], index: 6, kind: input, shape index: {}]
  %s7 = inlined_call_operand.vmem [shape: bf16[512,256], index: 7, kind: input, shape index: {}]
  %s8 = inlined_call_operand.vmem [shape: f32[512,1], index: 8, kind: input, shape index: {}]
  %s9 = inlined_call_operand.vmem [shape: bf16[512,256], index: 9, kind: input, shape index: {}]
  %s10 = inlined_call_operand.vmem [shape: f32[1,256], index: 10, kind: input, shape index: {}]
  %s11 = inlined_call_operand.vmem [shape: bf16[256,128], index: 11, kind: input, shape index: {}]
  %s12 = inlined_call_operand.vmem [shape: f32[1,128], index: 12, kind: input, shape index: {}]
  %s13 = inlined_call_operand.hbm [shape: bf16[128,128], index: 13, kind: input, shape index: {}]
  %s14 = inlined_call_operand.vmem [shape: f32[1,128], index: 14, kind: input, shape index: {}]
  %s15 = inlined_call_operand.hbm [shape: f32[2,1,128], index: 15, kind: output, shape index: {}]
  %s16 = sld [smem:[#allocation0]]
  $region109: #{tpu_custom_call.1} parent=0
    _
  %s18 = ssub.s32 1, %s16
  %s19 = scalar_select 0, %s18, %s16
  $region1: #{tpu_custom_call.1} parent=0
    #allocation3 [shape = 'u8[32768]{0}', space=vmem, size = 0x8000, scoped, tag = 'input window, operand 3, single buffered']
    #allocation4 [shape = 's32[2]{0}', space=sflag, size = 0x8, scoped, tag = 'scoped memory for tpu_custom_call.1']
    #allocation5 [shape = 's32[2]{0}', space=sflag, size = 0x8, scoped, tag = 'scoped memory for tpu_custom_call.1']
    #allocation6 [shape = 'u8[32768]{0}', space=vmem, size = 0x8000, scoped, tag = 'input window, operand 13, single buffered']
    #allocation7 [shape = 's32[1]{0}', space=sflag, size = 0x4, scoped, tag = 'scoped memory for tpu_custom_call.1']
    #allocation8 [shape = 'u8[1024]{0}', space=vmem, size = 0x400, scoped, tag = 'output window, operand 0']
    %20 = vsyncpa [#allocation4], 0
    %21 = vsyncpa [#allocation7], 0
    %22 = vsyncpa [#allocation5], 0
    %s23 = scalar_lea.sflag [#allocation5], 1
    %24 = vsyncpa %s23, 0
    loop: start=0, step=1, limit=12
    $region2: #{tpu_custom_call.1} parent=1 // loop_pre_header
      _
    $region3: #{tpu_custom_call.1} parent=1 // loop_header
      %s26 = sphi 0, %s30
      %p27 = scmp.ge.s32.totalorder %s26, 12
      %s33 = sphi 0, %s45
      %s34 = sphi 0, %s41
      %s35 = sphi 0, %s33
      %s36 = sphi 0, %s34
      %s37 = sphi 0, %s35
      %s38 = sphi 0, %s36
      %s50 = sphi 0, %s52
      %s53 = sphi 0, %s50
      %s54 = sphi 0, %s53
      %s70 = sphi 0, %s54
      %s74 = sphi 0, %s74
      %s76 = sphi 0, %s74
      %s77 = sphi 0, %s76
      %s91 = sphi 0, %s77
      %s95 = sphi 0, %s95
      %s97 = sphi 0, %s95
      %s98 = sphi 0, %s97
      %s112 = sphi 0, %s98
      %s116 = sphi 0, %s116
      %s118 = sphi 0, %s116
      %s119 = sphi 0, %s118
      %s133 = sphi 0, %s119
      %s137 = sphi 0, %s137
      %s139 = sphi 0, %s137
      %s140 = sphi 0, %s139
      %s154 = sphi 0, %s140
      %s158 = sphi 0, %s158
      %s160 = sphi 0, %s158
      %s161 = sphi 0, %s160
      %s175 = sphi 0, %s161
      %s179 = sphi 0, %s179
      %s181 = sphi 0, %s179
      %s182 = sphi 0, %s181
      %s196 = sphi 0, %s182
      %s200 = sphi 0, %s200
      %s202 = sphi 0, %s200
      %s203 = sphi 0, %s202
      %s217 = sphi 0, %s203
      %s221 = sphi 0, %s221
      %s223 = sphi 0, %s221
      %s224 = sphi 0, %s223
      %s238 = sphi 0, %s224
      %s242 = sphi 0, %s242
      %s244 = sphi 0, %s242
      %s245 = sphi 0, %s244
      %s259 = sphi 0, %s245
      %s263 = sphi 0, %s263
      %s265 = sphi 0, %s263
      %s266 = sphi 0, %s265
      %s280 = sphi 0, %s266
      %s284 = sphi 0, %s284
      %s286 = sphi 0, %s284
      %s287 = sphi 0, %s286
      %s301 = sphi 0, %s287
      %s305 = sphi 0, %s305
      %s307 = sphi 0, %s305
      %s308 = sphi 0, %s307
      %s322 = sphi 0, %s308
      %s326 = sphi 0, %s326
      %s328 = sphi 0, %s326
      %s329 = sphi 0, %s328
      %s343 = sphi 0, %s329
      %s347 = sphi 0, %s347
      %s349 = sphi 0, %s347
      %s350 = sphi 0, %s349
      %s364 = sphi 0, %s350
      %s370 = sphi 0, %s372
      %s373 = sphi 0, %s370
      %s374 = sphi 0, %s373
      %s390 = sphi 0, %s374
    $region4: #{tpu_custom_call.1} parent=1 // loop_header_branch
      %29 = sbr.rel (%p27) target = $region8
    $region5: #{tpu_custom_call.1} parent=1 // loop_body
      %s31 = ssub.s32 %s26, 1
      %s32 = ssub.s32 %s26, 2
      %s39 = sadd.s32 1, %s34
      %p40 = scmp.ge.s32.totalorder %s39, 5
      %s41 = scalar_select %p40, 0, %s39
      %s42 = sadd.s32 1, %s33
      %s43 = scalar_select %p40, %s42, %s33
      %p44 = scmp.ge.s32.totalorder %s43, 2
      %s45 = scalar_select %p44, 0, %s43
      %s46 = ssub.s32 %s33, %s45
      %s47 = ssub.s32 %s34, %s41
      %s48 = sor.u32 %s46, %s47
      %p49 = scmp.eq.s32.totalorder %s48, 0
      %s51 = sadd.s32 %s50, 1
      %s52 = scalar_select %p49, %s50, %s51
      %p55 = pneg %p49
      %p56 = scmp.eq.s32.totalorder %s26, 9
      %p57 = por %p55, %p56
      %p58 = scmp.ne.s32.totalorder %s50, %s53
      %p59 = scmp.eq.s32.totalorder %s26, 0
      %p60 = por %p58, %p59
      %p61 = scmp.ne.s32.totalorder %s50, %s53
      %p62 = scmp.eq.s32.totalorder %s31, 9
      %p63 = por %p61, %p62
      %p64 = scmp.ne.s32.totalorder %s53, %s54
      %p65 = scmp.eq.s32.totalorder %s31, 0
      %p66 = por %p64, %p65
      %p67 = scmp.ne.s32.totalorder %s53, %s54
      %p68 = scmp.eq.s32.totalorder %s32, 9
      %p69 = por %p67, %p68
      %p71 = scmp.ne.s32.totalorder %s54, %s70
      %p72 = scmp.eq.s32.totalorder %s32, 0
      %p73 = por %p71, %p72
      %s75 = sadd.s32 %s74, 1
      %p78 = scmp.eq.s32.totalorder %s26, 9
      %p79 = scmp.ne.s32.totalorder %s74, %s76
      %p80 = scmp.eq.s32.totalorder %s26, 0
      %p81 = por %p79, %p80
      %p82 = scmp.ne.s32.totalorder %s74, %s76
      %p83 = scmp.eq.s32.totalorder %s31, 9
      %p84 = por %p82, %p83
      %p85 = scmp.ne.s32.totalorder %s76, %s77
      %p86 = scmp.eq.s32.totalorder %s31, 0
      %p87 = por %p85, %p86
      %p88 = scmp.ne.s32.totalorder %s76, %s77
      %p89 = scmp.eq.s32.totalorder %s32, 9
      %p90 = por %p88, %p89
      %p92 = scmp.ne.s32.totalorder %s77, %s91
      %p93 = scmp.eq.s32.totalorder %s32, 0
      %p94 = por %p92, %p93
      %s96 = sadd.s32 %s95, 1
      %p99 = scmp.eq.s32.totalorder %s26, 9
      %p100 = scmp.ne.s32.totalorder %s95, %s97
      %p101 = scmp.eq.s32.totalorder %s26, 0
      %p102 = por %p100, %p101
      %p103 = scmp.ne.s32.totalorder %s95, %s97
      %p104 = scmp.eq.s32.totalorder %s31, 9
      %p105 = por %p103, %p104
      %p106 = scmp.ne.s32.totalorder %s97, %s98
      %p107 = scmp.eq.s32.totalorder %s31, 0
      %p108 = por %p106, %p107
      %p109 = scmp.ne.s32.totalorder %s97, %s98
      %p110 = scmp.eq.s32.totalorder %s32, 9
      %p111 = por %p109, %p110
      %p113 = scmp.ne.s32.totalorder %s98, %s112
      %p114 = scmp.eq.s32.totalorder %s32, 0
      %p115 = por %p113, %p114
      %s117 = sadd.s32 %s116, 1
      %p120 = scmp.eq.s32.totalorder %s26, 9
      %p121 = scmp.ne.s32.totalorder %s116, %s118
      %p122 = scmp.eq.s32.totalorder %s26, 0
      %p123 = por %p121, %p122
      %p124 = scmp.ne.s32.totalorder %s116, %s118
      %p125 = scmp.eq.s32.totalorder %s31, 9
      %p126 = por %p124, %p125
      %p127 = scmp.ne.s32.totalorder %s118, %s119
      %p128 = scmp.eq.s32.totalorder %s31, 0
      %p129 = por %p127, %p128
      %p130 = scmp.ne.s32.totalorder %s118, %s119
      %p131 = scmp.eq.s32.totalorder %s32, 9
      %p132 = por %p130, %p131
      %p134 = scmp.ne.s32.totalorder %s119, %s133
      %p135 = scmp.eq.s32.totalorder %s32, 0
      %p136 = por %p134, %p135
      %s138 = sadd.s32 %s137, 1
      %p141 = scmp.eq.s32.totalorder %s26, 9
      %p142 = scmp.ne.s32.totalorder %s137, %s139
      %p143 = scmp.eq.s32.totalorder %s26, 0
      %p144 = por %p142, %p143
      %p145 = scmp.ne.s32.totalorder %s137, %s139
      %p146 = scmp.eq.s32.totalorder %s31, 9
      %p147 = por %p145, %p146
      %p148 = scmp.ne.s32.totalorder %s139, %s140
      %p149 = scmp.eq.s32.totalorder %s31, 0
      %p150 = por %p148, %p149
      %p151 = scmp.ne.s32.totalorder %s139, %s140
      %p152 = scmp.eq.s32.totalorder %s32, 9
      %p153 = por %p151, %p152
      %p155 = scmp.ne.s32.totalorder %s140, %s154
      %p156 = scmp.eq.s32.totalorder %s32, 0
      %p157 = por %p155, %p156
      %s159 = sadd.s32 %s158, 1
      %p162 = scmp.eq.s32.totalorder %s26, 9
      %p163 = scmp.ne.s32.totalorder %s158, %s160
      %p164 = scmp.eq.s32.totalorder %s26, 0
      %p165 = por %p163, %p164
      %p166 = scmp.ne.s32.totalorder %s158, %s160
      %p167 = scmp.eq.s32.totalorder %s31, 9
      %p168 = por %p166, %p167
      %p169 = scmp.ne.s32.totalorder %s160, %s161
      %p170 = scmp.eq.s32.totalorder %s31, 0
      %p171 = por %p169, %p170
      %p172 = scmp.ne.s32.totalorder %s160, %s161
      %p173 = scmp.eq.s32.totalorder %s32, 9
      %p174 = por %p172, %p173
      %p176 = scmp.ne.s32.totalorder %s161, %s175
      %p177 = scmp.eq.s32.totalorder %s32, 0
      %p178 = por %p176, %p177
      %s180 = sadd.s32 %s179, 1
      %p183 = scmp.eq.s32.totalorder %s26, 9
      %p184 = scmp.ne.s32.totalorder %s179, %s181
      %p185 = scmp.eq.s32.totalorder %s26, 0
      %p186 = por %p184, %p185
      %p187 = scmp.ne.s32.totalorder %s179, %s181
      %p188 = scmp.eq.s32.totalorder %s31, 9
      %p189 = por %p187, %p188
      %p190 = scmp.ne.s32.totalorder %s181, %s182
      %p191 = scmp.eq.s32.totalorder %s31, 0
      %p192 = por %p190, %p191
      %p193 = scmp.ne.s32.totalorder %s181, %s182
      %p194 = scmp.eq.s32.totalorder %s32, 9
      %p195 = por %p193, %p194
      %p197 = scmp.ne.s32.totalorder %s182, %s196
      %p198 = scmp.eq.s32.totalorder %s32, 0
      %p199 = por %p197, %p198
      %s201 = sadd.s32 %s200, 1
      %p204 = scmp.eq.s32.totalorder %s26, 9
      %p205 = scmp.ne.s32.totalorder %s200, %s202
      %p206 = scmp.eq.s32.totalorder %s26, 0
      %p207 = por %p205, %p206
      %p208 = scmp.ne.s32.totalorder %s200, %s202
      %p209 = scmp.eq.s32.totalorder %s31, 9
      %p210 = por %p208, %p209
      %p211 = scmp.ne.s32.totalorder %s202, %s203
      %p212 = scmp.eq.s32.totalorder %s31, 0
      %p213 = por %p211, %p212
      %p214 = scmp.ne.s32.totalorder %s202, %s203
      %p215 = scmp.eq.s32.totalorder %s32, 9
      %p216 = por %p214, %p215
      %p218 = scmp.ne.s32.totalorder %s203, %s217
      %p219 = scmp.eq.s32.totalorder %s32, 0
      %p220 = por %p218, %p219
      %s222 = sadd.s32 %s221, 1
      %p225 = scmp.eq.s32.totalorder %s26, 9
      %p226 = scmp.ne.s32.totalorder %s221, %s223
      %p227 = scmp.eq.s32.totalorder %s26, 0
      %p228 = por %p226, %p227
      %p229 = scmp.ne.s32.totalorder %s221, %s223
      %p230 = scmp.eq.s32.totalorder %s31, 9
      %p231 = por %p229, %p230
      %p232 = scmp.ne.s32.totalorder %s223, %s224
      %p233 = scmp.eq.s32.totalorder %s31, 0
      %p234 = por %p232, %p233
      %p235 = scmp.ne.s32.totalorder %s223, %s224
      %p236 = scmp.eq.s32.totalorder %s32, 9
      %p237 = por %p235, %p236
      %p239 = scmp.ne.s32.totalorder %s224, %s238
      %p240 = scmp.eq.s32.totalorder %s32, 0
      %p241 = por %p239, %p240
      %s243 = sadd.s32 %s242, 1
      %p246 = scmp.eq.s32.totalorder %s26, 9
      %p247 = scmp.ne.s32.totalorder %s242, %s244
      %p248 = scmp.eq.s32.totalorder %s26, 0
      %p249 = por %p247, %p248
      %p250 = scmp.ne.s32.totalorder %s242, %s244
      %p251 = scmp.eq.s32.totalorder %s31, 9
      %p252 = por %p250, %p251
      %p253 = scmp.ne.s32.totalorder %s244, %s245
      %p254 = scmp.eq.s32.totalorder %s31, 0
      %p255 = por %p253, %p254
      %p256 = scmp.ne.s32.totalorder %s244, %s245
      %p257 = scmp.eq.s32.totalorder %s32, 9
      %p258 = por %p256, %p257
      %p260 = scmp.ne.s32.totalorder %s245, %s259
      %p261 = scmp.eq.s32.totalorder %s32, 0
      %p262 = por %p260, %p261
      %s264 = sadd.s32 %s263, 1
      %p267 = scmp.eq.s32.totalorder %s26, 9
      %p268 = scmp.ne.s32.totalorder %s263, %s265
      %p269 = scmp.eq.s32.totalorder %s26, 0
      %p270 = por %p268, %p269
      %p271 = scmp.ne.s32.totalorder %s263, %s265
      %p272 = scmp.eq.s32.totalorder %s31, 9
      %p273 = por %p271, %p272
      %p274 = scmp.ne.s32.totalorder %s265, %s266
      %p275 = scmp.eq.s32.totalorder %s31, 0
      %p276 = por %p274, %p275
      %p277 = scmp.ne.s32.totalorder %s265, %s266
      %p278 = scmp.eq.s32.totalorder %s32, 9
      %p279 = por %p277, %p278
      %p281 = scmp.ne.s32.totalorder %s266, %s280
      %p282 = scmp.eq.s32.totalorder %s32, 0
      %p283 = por %p281, %p282
      %s285 = sadd.s32 %s284, 1
      %p288 = scmp.eq.s32.totalorder %s26, 9
      %p289 = scmp.ne.s32.totalorder %s284, %s286
      %p290 = scmp.eq.s32.totalorder %s26, 0
      %p291 = por %p289, %p290
      %p292 = scmp.ne.s32.totalorder %s284, %s286
      %p293 = scmp.eq.s32.totalorder %s31, 9
      %p294 = por %p292, %p293
      %p295 = scmp.ne.s32.totalorder %s286, %s287
      %p296 = scmp.eq.s32.totalorder %s31, 0
      %p297 = por %p295, %p296
      %p298 = scmp.ne.s32.totalorder %s286, %s287
      %p299 = scmp.eq.s32.totalorder %s32, 9
      %p300 = por %p298, %p299
      %p302 = scmp.ne.s32.totalorder %s287, %s301
      %p303 = scmp.eq.s32.totalorder %s32, 0
      %p304 = por %p302, %p303
      %s306 = sadd.s32 %s305, 1
      %p309 = scmp.eq.s32.totalorder %s26, 9
      %p310 = scmp.ne.s32.totalorder %s305, %s307
      %p311 = scmp.eq.s32.totalorder %s26, 0
      %p312 = por %p310, %p311
      %p313 = scmp.ne.s32.totalorder %s305, %s307
      %p314 = scmp.eq.s32.totalorder %s31, 9
      %p315 = por %p313, %p314
      %p316 = scmp.ne.s32.totalorder %s307, %s308
      %p317 = scmp.eq.s32.totalorder %s31, 0
      %p318 = por %p316, %p317
      %p319 = scmp.ne.s32.totalorder %s307, %s308
      %p320 = scmp.eq.s32.totalorder %s32, 9
      %p321 = por %p319, %p320
      %p323 = scmp.ne.s32.totalorder %s308, %s322
      %p324 = scmp.eq.s32.totalorder %s32, 0
      %p325 = por %p323, %p324
      %s327 = sadd.s32 %s326, 1
      %p330 = scmp.eq.s32.totalorder %s26, 9
      %p331 = scmp.ne.s32.totalorder %s326, %s328
      %p332 = scmp.eq.s32.totalorder %s26, 0
      %p333 = por %p331, %p332
      %p334 = scmp.ne.s32.totalorder %s326, %s328
      %p335 = scmp.eq.s32.totalorder %s31, 9
      %p336 = por %p334, %p335
      %p337 = scmp.ne.s32.totalorder %s328, %s329
      %p338 = scmp.eq.s32.totalorder %s31, 0
      %p339 = por %p337, %p338
      %p340 = scmp.ne.s32.totalorder %s328, %s329
      %p341 = scmp.eq.s32.totalorder %s32, 9
      %p342 = por %p340, %p341
      %p344 = scmp.ne.s32.totalorder %s329, %s343
      %p345 = scmp.eq.s32.totalorder %s32, 0
      %p346 = por %p344, %p345
      %s348 = sadd.s32 %s347, 1
      %p351 = scmp.eq.s32.totalorder %s26, 9
      %p352 = scmp.ne.s32.totalorder %s347, %s349
      %p353 = scmp.eq.s32.totalorder %s26, 0
      %p354 = por %p352, %p353
      %p355 = scmp.ne.s32.totalorder %s347, %s349
      %p356 = scmp.eq.s32.totalorder %s31, 9
      %p357 = por %p355, %p356
      %p358 = scmp.ne.s32.totalorder %s349, %s350
      %p359 = scmp.eq.s32.totalorder %s31, 0
      %p360 = por %p358, %p359
      %p361 = scmp.ne.s32.totalorder %s349, %s350
      %p362 = scmp.eq.s32.totalorder %s32, 9
      %p363 = por %p361, %p362
      %p365 = scmp.ne.s32.totalorder %s350, %s364
      %p366 = scmp.eq.s32.totalorder %s32, 0
      %p367 = por %p365, %p366
      %s368 = ssub.s32 %s33, %s45
      %p369 = scmp.eq.s32.totalorder %s368, 0
      %s371 = sadd.s32 %s370, 1
      %s372 = scalar_select %p369, %s370, %s371
      %p375 = pneg %p369
      %p376 = scmp.eq.s32.totalorder %s26, 9
      %p377 = por %p375, %p376
      %p378 = scmp.ne.s32.totalorder %s370, %s373
      %p379 = scmp.eq.s32.totalorder %s26, 0
      %p380 = por %p378, %p379
      %p381 = scmp.ne.s32.totalorder %s370, %s373
      %p382 = scmp.eq.s32.totalorder %s31, 9
      %p383 = por %p381, %p382
      %p384 = scmp.ne.s32.totalorder %s373, %s374
      %p385 = scmp.eq.s32.totalorder %s31, 0
      %p386 = por %p384, %p385
      %p387 = scmp.ne.s32.totalorder %s373, %s374
      %p388 = scmp.eq.s32.totalorder %s32, 9
      %p389 = por %p387, %p388
      %p391 = scmp.ne.s32.totalorder %s374, %s390
      %p392 = scmp.eq.s32.totalorder %s32, 0
      %p393 = por %p391, %p392
      %p394 = scmp.le.s32.totalorder 1, %s26
      %p395 = scmp.lt.s32.totalorder %s26, 11
      %p396 = pnand %p394, %p395
      %p397 = pneg %p396
      // Predicated region
      $region9: #{tpu_custom_call.1} parent=5 // pred_check
        _
      $region10: #{tpu_custom_call.1} parent=5 // pred_check_branch
        %399 = sbr.rel (%p396) target = $region12
      $region11: #{tpu_custom_call.1} parent=5 // pred_region
        %s400 = ssub.s32 %s26, 1
        // Predicated region
        $region13: #{tpu_custom_call.1} parent=11 // pred_check
          %p401 = pneg %p87
        $region14: #{tpu_custom_call.1} parent=11 // pred_check_branch
          %403 = sbr.rel (%p401) target = $region16
        $region15: #{tpu_custom_call.1} parent=11 // pred_region
          _
        $region16: #{tpu_custom_call.1} parent=11 // pred_fallthru
          _
        // Predicated region
        $region17: #{tpu_custom_call.1} parent=11 // pred_check
          %p404 = pneg %p108
        $region18: #{tpu_custom_call.1} parent=11 // pred_check_branch
          %406 = sbr.rel (%p404) target = $region20
        $region19: #{tpu_custom_call.1} parent=11 // pred_region
          _
        $region20: #{tpu_custom_call.1} parent=11 // pred_fallthru
          _
        // Predicated region
        $region21: #{tpu_custom_call.1} parent=11 // pred_check
          %p407 = pneg %p129
        $region22: #{tpu_custom_call.1} parent=11 // pred_check_branch
          %409 = sbr.rel (%p407) target = $region24
        $region23: #{tpu_custom_call.1} parent=11 // pred_region
          %411 = vsyncadd [#allocation4], 0
          %s412 = sshll.u32 %s3, 4
          %s413 = int_to_ptr.hbm [resolvable:$true] %s412
          %s414 = sshll.u32 [#allocation3], 4
          %s415 = int_to_ptr.vmem [resolvable:$true] %s414
          %420 = dma.hbm_to_vmem [thread:$0]  %s413, 1024, %s415, [#allocation4], 64, 64, 4
        $region24: #{tpu_custom_call.1} parent=11 // pred_fallthru
          _
        // Predicated region
        $region25: #{tpu_custom_call.1} parent=11 // pred_check
          %p421 = pneg %p150
        $region26: #{tpu_custom_call.1} parent=11 // pred_check_branch
          %423 = sbr.rel (%p421) target = $region28
        $region27: #{tpu_custom_call.1} parent=11 // pred_region
          _
        $region28: #{tpu_custom_call.1} parent=11 // pred_fallthru
          _
        // Predicated region
        $region29: #{tpu_custom_call.1} parent=11 // pred_check
          %p424 = pneg %p171
        $region30: #{tpu_custom_call.1} parent=11 // pred_check_branch
          %426 = sbr.rel (%p424) target = $region32
        $region31: #{tpu_custom_call.1} parent=11 // pred_region
          _
        $region32: #{tpu_custom_call.1} parent=11 // pred_fallthru
          _
        // Predicated region
        $region33: #{tpu_custom_call.1} parent=11 // pred_check
          %p427 = pneg %p192
        $region34: #{tpu_custom_call.1} parent=11 // pred_check_branch
          %429 = sbr.rel (%p427) target = $region36
        $region35: #{tpu_custom_call.1} parent=11 // pred_region
          _
        $region36: #{tpu_custom_call.1} parent=11 // pred_fallthru
          _
        // Predicated region
        $region37: #{tpu_custom_call.1} parent=11 // pred_check
          %p430 = pneg %p213
        $region38: #{tpu_custom_call.1} parent=11 // pred_check_branch
          %432 = sbr.rel (%p430) target = $region40
        $region39: #{tpu_custom_call.1} parent=11 // pred_region
          _
        $region40: #{tpu_custom_call.1} parent=11 // pred_fallthru
          _
        // Predicated region
        $region41: #{tpu_custom_call.1} parent=11 // pred_check
          %p433 = pneg %p234
        $region42: #{tpu_custom_call.1} parent=11 // pred_check_branch
          %435 = sbr.rel (%p433) target = $region44
        $region43: #{tpu_custom_call.1} parent=11 // pred_region
          _
        $region44: #{tpu_custom_call.1} parent=11 // pred_fallthru
          _
        // Predicated region
        $region45: #{tpu_custom_call.1} parent=11 // pred_check
          %p436 = pneg %p255
        $region46: #{tpu_custom_call.1} parent=11 // pred_check_branch
          %438 = sbr.rel (%p436) target = $region48
        $region47: #{tpu_custom_call.1} parent=11 // pred_region
          _
        $region48: #{tpu_custom_call.1} parent=11 // pred_fallthru
          _
        // Predicated region
        $region49: #{tpu_custom_call.1} parent=11 // pred_check
          %p439 = pneg %p276
        $region50: #{tpu_custom_call.1} parent=11 // pred_check_branch
          %441 = sbr.rel (%p439) target = $region52
        $region51: #{tpu_custom_call.1} parent=11 // pred_region
          _
        $region52: #{tpu_custom_call.1} parent=11 // pred_fallthru
          _
        // Predicated region
        $region53: #{tpu_custom_call.1} parent=11 // pred_check
          %p442 = pneg %p297
        $region54: #{tpu_custom_call.1} parent=11 // pred_check_branch
          %444 = sbr.rel (%p442) target = $region56
        $region55: #{tpu_custom_call.1} parent=11 // pred_region
          _
        $region56: #{tpu_custom_call.1} parent=11 // pred_fallthru
          _
        // Predicated region
        $region57: #{tpu_custom_call.1} parent=11 // pred_check
          %p445 = pneg %p318
        $region58: #{tpu_custom_call.1} parent=11 // pred_check_branch
          %447 = sbr.rel (%p445) target = $region60
        $region59: #{tpu_custom_call.1} parent=11 // pred_region
          _
        $region60: #{tpu_custom_call.1} parent=11 // pred_fallthru
          _
        // Predicated region
        $region61: #{tpu_custom_call.1} parent=11 // pred_check
          %p448 = pneg %p339
        $region62: #{tpu_custom_call.1} parent=11 // pred_check_branch
          %450 = sbr.rel (%p448) target = $region64
        $region63: #{tpu_custom_call.1} parent=11 // pred_region
          %452 = vsyncadd [#allocation7], 0
          %s453 = sshll.u32 %s13, 4
          %s454 = int_to_ptr.hbm [resolvable:$true] %s453
          %s455 = sshll.u32 [#allocation6], 4
          %s456 = int_to_ptr.vmem [resolvable:$true] %s455
          %461 = dma.hbm_to_vmem [thread:$0]  %s454, 1024, %s456, [#allocation7], 64, 64, 4
        $region64: #{tpu_custom_call.1} parent=11 // pred_fallthru
          _
        // Predicated region
        $region65: #{tpu_custom_call.1} parent=11 // pred_check
          %p462 = pneg %p360
        $region66: #{tpu_custom_call.1} parent=11 // pred_check_branch
          %464 = sbr.rel (%p462) target = $region68
        $region67: #{tpu_custom_call.1} parent=11 // pred_region
          _
        $region68: #{tpu_custom_call.1} parent=11 // pred_fallthru
          _
      $region12: #{tpu_custom_call.1} parent=5 // pred_fallthru
        _
      %p465 = scmp.lt.s32.totalorder %s26, 10
      // Predicated region
      $region69: #{tpu_custom_call.1} parent=5 // pred_check
        %p466 = pneg %p465
      $region70: #{tpu_custom_call.1} parent=5 // pred_check_branch
        %468 = sbr.rel (%p466) target = $region72
      $region71: #{tpu_custom_call.1} parent=5 // pred_region
        // Predicated region
        $region73: #{tpu_custom_call.1} parent=71 // pred_check
          %p469 = pneg %p60
        $region74: #{tpu_custom_call.1} parent=71 // pred_check_branch
          %471 = sbr.rel (%p469) target = $region76
        $region75: #{tpu_custom_call.1} parent=71 // pred_region
          %s472 = smul.u32 4, %s34
          %p473 = scmp.lt.s32.totalorder %s33, 1
          %s474 = scalar_select %p473, %s33, 1
          %p475 = scmp.lt.s32.totalorder %s472, 19
          %s476 = scalar_select %p475, %s472, 19
          %s477 = smul.addr %s474, 20
          %s478 = sadd.s32 %s476, %s477
          %s479 = smul.addr %s478, 4
          %s480 = scalar_lea.vmem %s0, %s479
          %s481 = smul.u32 4, %s34
        $region76: #{tpu_custom_call.1} parent=71 // pred_fallthru
          _
      $region72: #{tpu_custom_call.1} parent=5 // pred_fallthru
        _
      %p482 = scmp.le.s32.totalorder 1, %s26
      %p483 = scmp.lt.s32.totalorder %s26, 11
      %p484 = pnand %p482, %p483
      %p485 = pneg %p484
      // Predicated region
      $region77: #{tpu_custom_call.1} parent=5 // pred_check
        _
      $region78: #{tpu_custom_call.1} parent=5 // pred_check_branch
        %487 = sbr.rel (%p484) target = $region80
      $region79: #{tpu_custom_call.1} parent=5 // pred_region
        %s488 = ssub.s32 %s26, 1
        // Predicated region
        $region81: #{tpu_custom_call.1} parent=79 // pred_check
          %p489 = pneg %p129
        $region82: #{tpu_custom_call.1} parent=79 // pred_check_branch
          %491 = sbr.rel (%p489) target = $region84
        $region83: #{tpu_custom_call.1} parent=79 // pred_region
          %493 = dma.done [#allocation4], 1024
        $region84: #{tpu_custom_call.1} parent=79 // pred_fallthru
          _
        // Predicated region
        $region85: #{tpu_custom_call.1} parent=79 // pred_check
          %p494 = pneg %p339
        $region86: #{tpu_custom_call.1} parent=79 // pred_check_branch
          %496 = sbr.rel (%p494) target = $region88
        $region87: #{tpu_custom_call.1} parent=79 // pred_region
          %498 = dma.done [#allocation7], 1024
        $region88: #{tpu_custom_call.1} parent=79 // pred_fallthru
          _
        %s499 = smul.u32 4, %s36
        %p500 = scmp.lt.s32.totalorder %s35, 1
        %s501 = scalar_select %p500, %s35, 1
        %p502 = scmp.lt.s32.totalorder %s499, 19
        %s503 = scalar_select %p502, %s499, 19
        %s504 = smul.addr %s501, 20
        %s505 = sadd.s32 %s503, %s504
        %s506 = smul.addr %s505, 4
        %s507 = scalar_lea.vmem %s0, %s506
        %p508 = pneg %p66
        %p509 = pneg %p63
        %p510 = pneg %p87
        %p511 = pneg %p84
        %p512 = pneg %p108
        %p513 = pneg %p105
        %p514 = pneg %p129
        %p515 = pneg %p126
        %p516 = pneg %p150
        %p517 = pneg %p147
        %p518 = pneg %p171
        %p519 = pneg %p168
        %p520 = pneg %p192
        %p521 = pneg %p189
        %p522 = pneg %p213
        %p523 = pneg %p210
        %p524 = pneg %p234
        %p525 = pneg %p231
        %p526 = pneg %p255
        %p527 = pneg %p252
        %p528 = pneg %p276
        %p529 = pneg %p273
        %p530 = pneg %p297
        %p531 = pneg %p294
        %p532 = pneg %p318
        %p533 = pneg %p315
        %p534 = pneg %p339
        %p535 = pneg %p336
        %p536 = pneg %p360
        %p537 = pneg %p357
        %p538 = pneg %p386
        %p539 = pneg %p383
        %s540 = sand.u32 %s373, 1
        %s541 = scalar_lea.sflag [#allocation5], %s540
        %s542 = sand.u32 %s373, 1
        %s543 = scalar_lea.vmem [#allocation8], %s542
        %s544 = smul.u32 4, %s36
        %p545 = scmp.lt.s32.totalorder %s35, 1
        %s546 = scalar_select %p545, %s35, 1
        %p547 = scmp.lt.s32.totalorder %s544, 19
        %s548 = scalar_select %p547, %s544, 19
        %s549 = smul.addr %s546, 20
        %s550 = sadd.s32 %s548, %s549
        %s551 = smul.addr %s550, 4
        %s552 = scalar_lea.vmem %s0, %s551
        %s553 = smul.u32 4, %s36
        %p554 = scmp.eq.s32.totalorder %s36, 0
        // Predicated region
        $region89: #{tpu_custom_call.1} parent=79 // pred_check
          %p555 = pneg %p554
        $region90: #{tpu_custom_call.1} parent=79 // pred_check_branch
          %557 = sbr.rel (%p555) target = $region92
        $region91: #{tpu_custom_call.1} parent=79 // pred_region
          %558 = vst [vmem:[#allocation2] sm:$0xff] -inf
          %559 = vst [vmem:[#allocation2 + $0x8] sm:$0xff] -inf
          %560 = vst [vmem:[#allocation2 + $0x10] sm:$0xff] -inf
          %561 = vst [vmem:[#allocation2 + $0x18] sm:$0xff] -inf
          %562 = vst [vmem:[#allocation2 + $0x20] sm:$0xff] -inf
          %563 = vst [vmem:[#allocation2 + $0x28] sm:$0xff] -inf
          %564 = vst [vmem:[#allocation2 + $0x30] sm:$0xff] -inf
          %565 = vst [vmem:[#allocation2 + $0x38] sm:$0xff] -inf
          %566 = vst [vmem:[#allocation2 + $0x40] sm:$0xff] -inf
          %567 = vst [vmem:[#allocation2 + $0x48] sm:$0xff] -inf
          %568 = vst [vmem:[#allocation2 + $0x50] sm:$0xff] -inf
          %569 = vst [vmem:[#allocation2 + $0x58] sm:$0xff] -inf
          %570 = vst [vmem:[#allocation2 + $0x60] sm:$0xff] -inf
          %571 = vst [vmem:[#allocation2 + $0x68] sm:$0xff] -inf
          %572 = vst [vmem:[#allocation2 + $0x70] sm:$0xff] -inf
          %573 = vst [vmem:[#allocation2 + $0x78] sm:$0xff] -inf
          %574 = vst [vmem:[#allocation2 + $0x80] sm:$0xff] -inf
          %575 = vst [vmem:[#allocation2 + $0x88] sm:$0xff] -inf
          %576 = vst [vmem:[#allocation2 + $0x90] sm:$0xff] -inf
          %577 = vst [vmem:[#allocation2 + $0x98] sm:$0xff] -inf
          %578 = vst [vmem:[#allocation2 + $0xa0] sm:$0xff] -inf
          %579 = vst [vmem:[#allocation2 + $0xa8] sm:$0xff] -inf
          %580 = vst [vmem:[#allocation2 + $0xb0] sm:$0xff] -inf
          %581 = vst [vmem:[#allocation2 + $0xb8] sm:$0xff] -inf
          %582 = vst [vmem:[#allocation2 + $0xc0] sm:$0xff] -inf
          %583 = vst [vmem:[#allocation2 + $0xc8] sm:$0xff] -inf
          %584 = vst [vmem:[#allocation2 + $0xd0] sm:$0xff] -inf
          %585 = vst [vmem:[#allocation2 + $0xd8] sm:$0xff] -inf
          %586 = vst [vmem:[#allocation2 + $0xe0] sm:$0xff] -inf
          %587 = vst [vmem:[#allocation2 + $0xe8] sm:$0xff] -inf
          %588 = vst [vmem:[#allocation2 + $0xf0] sm:$0xff] -inf
          %589 = vst [vmem:[#allocation2 + $0xf8] sm:$0xff] -inf
          %590 = vst [vmem:[#allocation2 + $0x100] sm:$0xff] -inf
          %591 = vst [vmem:[#allocation2 + $0x108] sm:$0xff] -inf
          %592 = vst [vmem:[#allocation2 + $0x110] sm:$0xff] -inf
          %593 = vst [vmem:[#allocation2 + $0x118] sm:$0xff] -inf
          %594 = vst [vmem:[#allocation2 + $0x120] sm:$0xff] -inf
          %595 = vst [vmem:[#allocation2 + $0x128] sm:$0xff] -inf
          %596 = vst [vmem:[#allocation2 + $0x130] sm:$0xff] -inf
          %597 = vst [vmem:[#allocation2 + $0x138] sm:$0xff] -inf
          %598 = vst [vmem:[#allocation2 + $0x140] sm:$0xff] -inf
          %599 = vst [vmem:[#allocation2 + $0x148] sm:$0xff] -inf
          %600 = vst [vmem:[#allocation2 + $0x150] sm:$0xff] -inf
          %601 = vst [vmem:[#allocation2 + $0x158] sm:$0xff] -inf
          %602 = vst [vmem:[#allocation2 + $0x160] sm:$0xff] -inf
          %603 = vst [vmem:[#allocation2 + $0x168] sm:$0xff] -inf
          %604 = vst [vmem:[#allocation2 + $0x170] sm:$0xff] -inf
          %605 = vst [vmem:[#allocation2 + $0x178] sm:$0xff] -inf
          %606 = vst [vmem:[#allocation2 + $0x180] sm:$0xff] -inf
          %607 = vst [vmem:[#allocation2 + $0x188] sm:$0xff] -inf
          %608 = vst [vmem:[#allocation2 + $0x190] sm:$0xff] -inf
          %609 = vst [vmem:[#allocation2 + $0x198] sm:$0xff] -inf
          %610 = vst [vmem:[#allocation2 + $0x1a0] sm:$0xff] -inf
          %611 = vst [vmem:[#allocation2 + $0x1a8] sm:$0xff] -inf
          %612 = vst [vmem:[#allocation2 + $0x1b0] sm:$0xff] -inf
          %613 = vst [vmem:[#allocation2 + $0x1b8] sm:$0xff] -inf
          %614 = vst [vmem:[#allocation2 + $0x1c0] sm:$0xff] -inf
          %615 = vst [vmem:[#allocation2 + $0x1c8] sm:$0xff] -inf
          %616 = vst [vmem:[#allocation2 + $0x1d0] sm:$0xff] -inf
          %617 = vst [vmem:[#allocation2 + $0x1d8] sm:$0xff] -inf
          %618 = vst [vmem:[#allocation2 + $0x1e0] sm:$0xff] -inf
          %619 = vst [vmem:[#allocation2 + $0x1e8] sm:$0xff] -inf
          %620 = vst [vmem:[#allocation2 + $0x1f0] sm:$0xff] -inf
          %621 = vst [vmem:[#allocation2 + $0x1f8] sm:$0xff] -inf
        $region92: #{tpu_custom_call.1} parent=79 // pred_fallthru
          _
        %v622 = vld [vmem:[%s552] sm:$0x77]
        %v623 = vld [vmem:[%s552 + $0x8] sm:$0x77]
        %v624 = vld [vmem:[%s1] sm:$0xff]
        %v625 = vld [vmem:[%s1 + $0x8] sm:$0xff]
        %v626 = vld [vmem:[%s1 + $0x10] sm:$0xff]
        %v627 = vld [vmem:[%s1 + $0x18] sm:$0xff]
        %v628 = vld [vmem:[%s1 + $0x20] sm:$0xff]
        %v629 = vld [vmem:[%s1 + $0x28] sm:$0xff]
        %v630 = vld [vmem:[%s1 + $0x30] sm:$0xff]
        %v631 = vld [vmem:[%s1 + $0x38] sm:$0xff]
        %v632 = vld [vmem:[%s1 + $0x40] sm:$0xff]
        %v633 = vld [vmem:[%s1 + $0x48] sm:$0xff]
        %v634 = vld [vmem:[%s1 + $0x50] sm:$0xff]
        %v635 = vld [vmem:[%s1 + $0x58] sm:$0xff]
        %v636 = vld [vmem:[%s1 + $0x60] sm:$0xff]
        %v637 = vld [vmem:[%s1 + $0x68] sm:$0xff]
        %v638 = vld [vmem:[%s1 + $0x70] sm:$0xff]
        %v639 = vld [vmem:[%s1 + $0x78] sm:$0xff]
        %641 = vset.pattern.permute.xlu0 0
        %642 = vperm.xlu0 %641, %v624
        %v643 = vpop.permute.xlu0 %642
        %646 = vset.pattern.permute.xlu0 0
        %647 = vperm.xlu0 %646, %v625
        %v648 = vpop.permute.xlu0 %647
        %651 = vset.pattern.permute.xlu0 0
        %652 = vperm.xlu0 %651, %v626
        %v653 = vpop.permute.xlu0 %652
        %656 = vset.pattern.permute.xlu0 0
        %657 = vperm.xlu0 %656, %v627
        %v658 = vpop.permute.xlu0 %657
        %661 = vset.pattern.permute.xlu0 0
        %662 = vperm.xlu0 %661, %v628
        %v663 = vpop.permute.xlu0 %662
        %666 = vset.pattern.permute.xlu0 0
        %667 = vperm.xlu0 %666, %v629
        %v668 = vpop.permute.xlu0 %667
        %671 = vset.pattern.permute.xlu0 0
        %672 = vperm.xlu0 %671, %v630
        %v673 = vpop.permute.xlu0 %672
        %676 = vset.pattern.permute.xlu0 0
        %677 = vperm.xlu0 %676, %v631
        %v678 = vpop.permute.xlu0 %677
        %681 = vset.pattern.permute.xlu0 0
        %682 = vperm.xlu0 %681, %v632
        %v683 = vpop.permute.xlu0 %682
        %686 = vset.pattern.permute.xlu0 0
        %687 = vperm.xlu0 %686, %v633
        %v688 = vpop.permute.xlu0 %687
        %691 = vset.pattern.permute.xlu0 0
        %692 = vperm.xlu0 %691, %v634
        %v693 = vpop.permute.xlu0 %692
        %696 = vset.pattern.permute.xlu0 0
        %697 = vperm.xlu0 %696, %v635
        %v698 = vpop.permute.xlu0 %697
        %701 = vset.pattern.permute.xlu0 0
        %702 = vperm.xlu0 %701, %v636
        %v703 = vpop.permute.xlu0 %702
        %706 = vset.pattern.permute.xlu0 0
        %707 = vperm.xlu0 %706, %v637
        %v708 = vpop.permute.xlu0 %707
        %711 = vset.pattern.permute.xlu0 0
        %712 = vperm.xlu0 %711, %v638
        %v713 = vpop.permute.xlu0 %712
        %716 = vset.pattern.permute.xlu0 0
        %717 = vperm.xlu0 %716, %v639
        %v718 = vpop.permute.xlu0 %717
        %v722 = vperm.slane %v622, 0
        %v723 = vperm.slane %v622, 4
        %v724 = vperm.slane %v623, 0
        %v725 = vperm.slane %v623, 4
        %v730 = vperm.slane %v722, 0
        %v731 = vperm.slane %v723, 0
        %v732 = vperm.slane %v724, 0
        %v733 = vperm.slane %v725, 0
        %v734 = vmul.f32 %v643, %v730
        %v735 = vmul.f32 %v643, %v731
        %v736 = vmul.f32 %v643, %v732
        %v737 = vmul.f32 %v643, %v733
        %v738 = vmul.f32 %v648, %v730
        %v739 = vmul.f32 %v648, %v731
        %v740 = vmul.f32 %v648, %v732
        %v741 = vmul.f32 %v648, %v733
        %v742 = vmul.f32 %v653, %v730
        %v743 = vmul.f32 %v653, %v731
        %v744 = vmul.f32 %v653, %v732
        %v745 = vmul.f32 %v653, %v733
        %v746 = vmul.f32 %v658, %v730
        %v747 = vmul.f32 %v658, %v731
        %v748 = vmul.f32 %v658, %v732
        %v749 = vmul.f32 %v658, %v733
        %v750 = vmul.f32 %v663, %v730
        %v751 = vmul.f32 %v663, %v731
        %v752 = vmul.f32 %v663, %v732
        %v753 = vmul.f32 %v663, %v733
        %v754 = vmul.f32 %v668, %v730
        %v755 = vmul.f32 %v668, %v731
        %v756 = vmul.f32 %v668, %v732
        %v757 = vmul.f32 %v668, %v733
        %v758 = vmul.f32 %v673, %v730
        %v759 = vmul.f32 %v673, %v731
        %v760 = vmul.f32 %v673, %v732
        %v761 = vmul.f32 %v673, %v733
        %v762 = vmul.f32 %v678, %v730
        %v763 = vmul.f32 %v678, %v731
        %v764 = vmul.f32 %v678, %v732
        %v765 = vmul.f32 %v678, %v733
        %v766 = vmul.f32 %v683, %v730
        %v767 = vmul.f32 %v683, %v731
        %v768 = vmul.f32 %v683, %v732
        %v769 = vmul.f32 %v683, %v733
        %v770 = vmul.f32 %v688, %v730
        %v771 = vmul.f32 %v688, %v731
        %v772 = vmul.f32 %v688, %v732
        %v773 = vmul.f32 %v688, %v733
        %v774 = vmul.f32 %v693, %v730
        %v775 = vmul.f32 %v693, %v731
        %v776 = vmul.f32 %v693, %v732
        %v777 = vmul.f32 %v693, %v733
        %v778 = vmul.f32 %v698, %v730
        %v779 = vmul.f32 %v698, %v731
        %v780 = vmul.f32 %v698, %v732
        %v781 = vmul.f32 %v698, %v733
        %v782 = vmul.f32 %v703, %v730
        %v783 = vmul.f32 %v703, %v731
        %v784 = vmul.f32 %v703, %v732
        %v785 = vmul.f32 %v703, %v733
        %v786 = vmul.f32 %v708, %v730
        %v787 = vmul.f32 %v708, %v731
        %v788 = vmul.f32 %v708, %v732
        %v789 = vmul.f32 %v708, %v733
        %v790 = vmul.f32 %v713, %v730
        %v791 = vmul.f32 %v713, %v731
        %v792 = vmul.f32 %v713, %v732
        %v793 = vmul.f32 %v713, %v733
        %v794 = vmul.f32 %v718, %v730
        %v795 = vmul.f32 %v718, %v731
        %v796 = vmul.f32 %v718, %v732
        %v797 = vmul.f32 %v718, %v733
        %798 = vset.pattern.permute.xlu0 1
        %799 = vperm.xlu0 %798, %v624
        %v800 = vpop.permute.xlu0 %799
        %802 = vset.pattern.permute.xlu0 1
        %803 = vperm.xlu0 %802, %v625
        %v804 = vpop.permute.xlu0 %803
        %806 = vset.pattern.permute.xlu0 1
        %807 = vperm.xlu0 %806, %v626
        %v808 = vpop.permute.xlu0 %807
        %810 = vset.pattern.permute.xlu0 1
        %811 = vperm.xlu0 %810, %v627
        %v812 = vpop.permute.xlu0 %811
        %814 = vset.pattern.permute.xlu0 1
        %815 = vperm.xlu0 %814, %v628
        %v816 = vpop.permute.xlu0 %815
        %818 = vset.pattern.permute.xlu0 1
        %819 = vperm.xlu0 %818, %v629
        %v820 = vpop.permute.xlu0 %819
        %822 = vset.pattern.permute.xlu0 1
        %823 = vperm.xlu0 %822, %v630
        %v824 = vpop.permute.xlu0 %823
        %826 = vset.pattern.permute.xlu0 1
        %827 = vperm.xlu0 %826, %v631
        %v828 = vpop.permute.xlu0 %827
        %830 = vset.pattern.permute.xlu0 1
        %831 = vperm.xlu0 %830, %v632
        %v832 = vpop.permute.xlu0 %831
        %834 = vset.pattern.permute.xlu0 1
        %835 = vperm.xlu0 %834, %v633
        %v836 = vpop.permute.xlu0 %835
        %838 = vset.pattern.permute.xlu0 1
        %839 = vperm.xlu0 %838, %v634
        %v840 = vpop.permute.xlu0 %839
        %842 = vset.pattern.permute.xlu0 1
        %843 = vperm.xlu0 %842, %v635
        %v844 = vpop.permute.xlu0 %843
        %846 = vset.pattern.permute.xlu0 1
        %847 = vperm.xlu0 %846, %v636
        %v848 = vpop.permute.xlu0 %847
        %850 = vset.pattern.permute.xlu0 1
        %851 = vperm.xlu0 %850, %v637
        %v852 = vpop.permute.xlu0 %851
        %854 = vset.pattern.permute.xlu0 1
        %855 = vperm.xlu0 %854, %v638
        %v856 = vpop.permute.xlu0 %855
        %858 = vset.pattern.permute.xlu0 1
        %859 = vperm.xlu0 %858, %v639
        %v860 = vpop.permute.xlu0 %859
        %v862 = vperm.slane %v622, 1
        %v863 = vperm.slane %v622, 5
        %v864 = vperm.slane %v623, 1
        %v865 = vperm.slane %v623, 5
        %v870 = vperm.slane %v862, 1
        %v871 = vperm.slane %v863, 1
        %v872 = vperm.slane %v864, 1
        %v873 = vperm.slane %v865, 1
        %v874 = vmul.f32 %v800, %v870
        %v875 = vmul.f32 %v800, %v871
        %v876 = vmul.f32 %v800, %v872
        %v877 = vmul.f32 %v800, %v873
        %v878 = vmul.f32 %v804, %v870
        %v879 = vmul.f32 %v804, %v871
        %v880 = vmul.f32 %v804, %v872
        %v881 = vmul.f32 %v804, %v873
        %v882 = vmul.f32 %v808, %v870
        %v883 = vmul.f32 %v808, %v871
        %v884 = vmul.f32 %v808, %v872
        %v885 = vmul.f32 %v808, %v873
        %v886 = vmul.f32 %v812, %v870
        %v887 = vmul.f32 %v812, %v871
        %v888 = vmul.f32 %v812, %v872
        %v889 = vmul.f32 %v812, %v873
        %v890 = vmul.f32 %v816, %v870
        %v891 = vmul.f32 %v816, %v871
        %v892 = vmul.f32 %v816, %v872
        %v893 = vmul.f32 %v816, %v873
        %v894 = vmul.f32 %v820, %v870
        %v895 = vmul.f32 %v820, %v871
        %v896 = vmul.f32 %v820, %v872
        %v897 = vmul.f32 %v820, %v873
        %v898 = vmul.f32 %v824, %v870
        %v899 = vmul.f32 %v824, %v871
        %v900 = vmul.f32 %v824, %v872
        %v901 = vmul.f32 %v824, %v873
        %v902 = vmul.f32 %v828, %v870
        %v903 = vmul.f32 %v828, %v871
        %v904 = vmul.f32 %v828, %v872
        %v905 = vmul.f32 %v828, %v873
        %v906 = vmul.f32 %v832, %v870
        %v907 = vmul.f32 %v832, %v871
        %v908 = vmul.f32 %v832, %v872
        %v909 = vmul.f32 %v832, %v873
        %v910 = vmul.f32 %v836, %v870
        %v911 = vmul.f32 %v836, %v871
        %v912 = vmul.f32 %v836, %v872
        %v913 = vmul.f32 %v836, %v873
        %v914 = vmul.f32 %v840, %v870
        %v915 = vmul.f32 %v840, %v871
        %v916 = vmul.f32 %v840, %v872
        %v917 = vmul.f32 %v840, %v873
        %v918 = vmul.f32 %v844, %v870
        %v919 = vmul.f32 %v844, %v871
        %v920 = vmul.f32 %v844, %v872
        %v921 = vmul.f32 %v844, %v873
        %v922 = vmul.f32 %v848, %v870
        %v923 = vmul.f32 %v848, %v871
        %v924 = vmul.f32 %v848, %v872
        %v925 = vmul.f32 %v848, %v873
        %v926 = vmul.f32 %v852, %v870
        %v927 = vmul.f32 %v852, %v871
        %v928 = vmul.f32 %v852, %v872
        %v929 = vmul.f32 %v852, %v873
        %v930 = vmul.f32 %v856, %v870
        %v931 = vmul.f32 %v856, %v871
        %v932 = vmul.f32 %v856, %v872
        %v933 = vmul.f32 %v856, %v873
        %v934 = vmul.f32 %v860, %v870
        %v935 = vmul.f32 %v860, %v871
        %v936 = vmul.f32 %v860, %v872
        %v937 = vmul.f32 %v860, %v873
        %v938 = vadd.f32 %v734, %v874
        %v939 = vadd.f32 %v735, %v875
        %v940 = vadd.f32 %v736, %v876
        %v941 = vadd.f32 %v737, %v877
        %v942 = vadd.f32 %v738, %v878
        %v943 = vadd.f32 %v739, %v879
        %v944 = vadd.f32 %v740, %v880
        %v945 = vadd.f32 %v741, %v881
        %v946 = vadd.f32 %v742, %v882
        %v947 = vadd.f32 %v743, %v883
        %v948 = vadd.f32 %v744, %v884
        %v949 = vadd.f32 %v745, %v885
        %v950 = vadd.f32 %v746, %v886
        %v951 = vadd.f32 %v747, %v887
        %v952 = vadd.f32 %v748, %v888
        %v953 = vadd.f32 %v749, %v889
        %v954 = vadd.f32 %v750, %v890
        %v955 = vadd.f32 %v751, %v891
        %v956 = vadd.f32 %v752, %v892
        %v957 = vadd.f32 %v753, %v893
        %v958 = vadd.f32 %v754, %v894
        %v959 = vadd.f32 %v755, %v895
        %v960 = vadd.f32 %v756, %v896
        %v961 = vadd.f32 %v757, %v897
        %v962 = vadd.f32 %v758, %v898
        %v963 = vadd.f32 %v759, %v899
        %v964 = vadd.f32 %v760, %v900
        %v965 = vadd.f32 %v761, %v901
        %v966 = vadd.f32 %v762, %v902
        %v967 = vadd.f32 %v763, %v903
        %v968 = vadd.f32 %v764, %v904
        %v969 = vadd.f32 %v765, %v905
        %v970 = vadd.f32 %v766, %v906
        %v971 = vadd.f32 %v767, %v907
        %v972 = vadd.f32 %v768, %v908
        %v973 = vadd.f32 %v769, %v909
        %v974 = vadd.f32 %v770, %v910
        %v975 = vadd.f32 %v771, %v911
        %v976 = vadd.f32 %v772, %v912
        %v977 = vadd.f32 %v773, %v913
        %v978 = vadd.f32 %v774, %v914
        %v979 = vadd.f32 %v775, %v915
        %v980 = vadd.f32 %v776, %v916
        %v981 = vadd.f32 %v777, %v917
        %v982 = vadd.f32 %v778, %v918
        %v983 = vadd.f32 %v779, %v919
        %v984 = vadd.f32 %v780, %v920
        %v985 = vadd.f32 %v781, %v921
        %v986 = vadd.f32 %v782, %v922
        %v987 = vadd.f32 %v783, %v923
        %v988 = vadd.f32 %v784, %v924
        %v989 = vadd.f32 %v785, %v925
        %v990 = vadd.f32 %v786, %v926
        %v991 = vadd.f32 %v787, %v927
        %v992 = vadd.f32 %v788, %v928
        %v993 = vadd.f32 %v789, %v929
        %v994 = vadd.f32 %v790, %v930
        %v995 = vadd.f32 %v791, %v931
        %v996 = vadd.f32 %v792, %v932
        %v997 = vadd.f32 %v793, %v933
        %v998 = vadd.f32 %v794, %v934
        %v999 = vadd.f32 %v795, %v935
        %v1000 = vadd.f32 %v796, %v936
        %v1001 = vadd.f32 %v797, %v937
        %1002 = vset.pattern.permute.xlu0 2
        %1003 = vperm.xlu0 %1002, %v624
        %v1004 = vpop.permute.xlu0 %1003
        %1006 = vset.pattern.permute.xlu0 2
        %1007 = vperm.xlu0 %1006, %v625
        %v1008 = vpop.permute.xlu0 %1007
        %1010 = vset.pattern.permute.xlu0 2
        %1011 = vperm.xlu0 %1010, %v626
        %v1012 = vpop.permute.xlu0 %1011
        %1014 = vset.pattern.permute.xlu0 2
        %1015 = vperm.xlu0 %1014, %v627
        %v1016 = vpop.permute.xlu0 %1015
        %1018 = vset.pattern.permute.xlu0 2
        %1019 = vperm.xlu0 %1018, %v628
        %v1020 = vpop.permute.xlu0 %1019
        %1022 = vset.pattern.permute.xlu0 2
        %1023 = vperm.xlu0 %1022, %v629
        %v1024 = vpop.permute.xlu0 %1023
        %1026 = vset.pattern.permute.xlu0 2
        %1027 = vperm.xlu0 %1026, %v630
        %v1028 = vpop.permute.xlu0 %1027
        %1030 = vset.pattern.permute.xlu0 2
        %1031 = vperm.xlu0 %1030, %v631
        %v1032 = vpop.permute.xlu0 %1031
        %1034 = vset.pattern.permute.xlu0 2
        %1035 = vperm.xlu0 %1034, %v632
        %v1036 = vpop.permute.xlu0 %1035
        %1038 = vset.pattern.permute.xlu0 2
        %1039 = vperm.xlu0 %1038, %v633
        %v1040 = vpop.permute.xlu0 %1039
        %1042 = vset.pattern.permute.xlu0 2
        %1043 = vperm.xlu0 %1042, %v634
        %v1044 = vpop.permute.xlu0 %1043
        %1046 = vset.pattern.permute.xlu0 2
        %1047 = vperm.xlu0 %1046, %v635
        %v1048 = vpop.permute.xlu0 %1047
        %1050 = vset.pattern.permute.xlu0 2
        %1051 = vperm.xlu0 %1050, %v636
        %v1052 = vpop.permute.xlu0 %1051
        %1054 = vset.pattern.permute.xlu0 2
        %1055 = vperm.xlu0 %1054, %v637
        %v1056 = vpop.permute.xlu0 %1055
        %1058 = vset.pattern.permute.xlu0 2
        %1059 = vperm.xlu0 %1058, %v638
        %v1060 = vpop.permute.xlu0 %1059
        %1062 = vset.pattern.permute.xlu0 2
        %1063 = vperm.xlu0 %1062, %v639
        %v1064 = vpop.permute.xlu0 %1063
        %v1066 = vperm.slane %v622, 2
        %v1067 = vperm.slane %v622, 6
        %v1068 = vperm.slane %v623, 2
        %v1069 = vperm.slane %v623, 6
        %v1074 = vperm.slane %v1066, 2
        %v1075 = vperm.slane %v1067, 2
        %v1076 = vperm.slane %v1068, 2
        %v1077 = vperm.slane %v1069, 2
        %v1078 = vmul.f32 %v1004, %v1074
        %v1079 = vmul.f32 %v1004, %v1075
        %v1080 = vmul.f32 %v1004, %v1076
        %v1081 = vmul.f32 %v1004, %v1077
        %v1082 = vmul.f32 %v1008, %v1074
        %v1083 = vmul.f32 %v1008, %v1075
        %v1084 = vmul.f32 %v1008, %v1076
        %v1085 = vmul.f32 %v1008, %v1077
        %v1086 = vmul.f32 %v1012, %v1074
        %v1087 = vmul.f32 %v1012, %v1075
        %v1088 = vmul.f32 %v1012, %v1076
        %v1089 = vmul.f32 %v1012, %v1077
        %v1090 = vmul.f32 %v1016, %v1074
        %v1091 = vmul.f32 %v1016, %v1075
        %v1092 = vmul.f32 %v1016, %v1076
        %v1093 = vmul.f32 %v1016, %v1077
        %v1094 = vmul.f32 %v1020, %v1074
        %v1095 = vmul.f32 %v1020, %v1075
        %v1096 = vmul.f32 %v1020, %v1076
        %v1097 = vmul.f32 %v1020, %v1077
        %v1098 = vmul.f32 %v1024, %v1074
        %v1099 = vmul.f32 %v1024, %v1075
        %v1100 = vmul.f32 %v1024, %v1076
        %v1101 = vmul.f32 %v1024, %v1077
        %v1102 = vmul.f32 %v1028, %v1074
        %v1103 = vmul.f32 %v1028, %v1075
        %v1104 = vmul.f32 %v1028, %v1076
        %v1105 = vmul.f32 %v1028, %v1077
        %v1106 = vmul.f32 %v1032, %v1074
        %v1107 = vmul.f32 %v1032, %v1075
        %v1108 = vmul.f32 %v1032, %v1076
        %v1109 = vmul.f32 %v1032, %v1077
        %v1110 = vmul.f32 %v1036, %v1074
        %v1111 = vmul.f32 %v1036, %v1075
        %v1112 = vmul.f32 %v1036, %v1076
        %v1113 = vmul.f32 %v1036, %v1077
        %v1114 = vmul.f32 %v1040, %v1074
        %v1115 = vmul.f32 %v1040, %v1075
        %v1116 = vmul.f32 %v1040, %v1076
        %v1117 = vmul.f32 %v1040, %v1077
        %v1118 = vmul.f32 %v1044, %v1074
        %v1119 = vmul.f32 %v1044, %v1075
        %v1120 = vmul.f32 %v1044, %v1076
        %v1121 = vmul.f32 %v1044, %v1077
        %v1122 = vmul.f32 %v1048, %v1074
        %v1123 = vmul.f32 %v1048, %v1075
        %v1124 = vmul.f32 %v1048, %v1076
        %v1125 = vmul.f32 %v1048, %v1077
        %v1126 = vmul.f32 %v1052, %v1074
        %v1127 = vmul.f32 %v1052, %v1075
        %v1128 = vmul.f32 %v1052, %v1076
        %v1129 = vmul.f32 %v1052, %v1077
        %v1130 = vmul.f32 %v1056, %v1074
        %v1131 = vmul.f32 %v1056, %v1075
        %v1132 = vmul.f32 %v1056, %v1076
        %v1133 = vmul.f32 %v1056, %v1077
        %v1134 = vmul.f32 %v1060, %v1074
        %v1135 = vmul.f32 %v1060, %v1075
        %v1136 = vmul.f32 %v1060, %v1076
        %v1137 = vmul.f32 %v1060, %v1077
        %v1138 = vmul.f32 %v1064, %v1074
        %v1139 = vmul.f32 %v1064, %v1075
        %v1140 = vmul.f32 %v1064, %v1076
        %v1141 = vmul.f32 %v1064, %v1077
        %v1142 = vadd.f32 %v938, %v1078
        %v1143 = vadd.f32 %v939, %v1079
        %v1144 = vadd.f32 %v940, %v1080
        %v1145 = vadd.f32 %v941, %v1081
        %v1146 = vadd.f32 %v942, %v1082
        %v1147 = vadd.f32 %v943, %v1083
        %v1148 = vadd.f32 %v944, %v1084
        %v1149 = vadd.f32 %v945, %v1085
        %v1150 = vadd.f32 %v946, %v1086
        %v1151 = vadd.f32 %v947, %v1087
        %v1152 = vadd.f32 %v948, %v1088
        %v1153 = vadd.f32 %v949, %v1089
        %v1154 = vadd.f32 %v950, %v1090
        %v1155 = vadd.f32 %v951, %v1091
        %v1156 = vadd.f32 %v952, %v1092
        %v1157 = vadd.f32 %v953, %v1093
        %v1158 = vadd.f32 %v954, %v1094
        %v1159 = vadd.f32 %v955, %v1095
        %v1160 = vadd.f32 %v956, %v1096
        %v1161 = vadd.f32 %v957, %v1097
        %v1162 = vadd.f32 %v958, %v1098
        %v1163 = vadd.f32 %v959, %v1099
        %v1164 = vadd.f32 %v960, %v1100
        %v1165 = vadd.f32 %v961, %v1101
        %v1166 = vadd.f32 %v962, %v1102
        %v1167 = vadd.f32 %v963, %v1103
        %v1168 = vadd.f32 %v964, %v1104
        %v1169 = vadd.f32 %v965, %v1105
        %v1170 = vadd.f32 %v966, %v1106
        %v1171 = vadd.f32 %v967, %v1107
        %v1172 = vadd.f32 %v968, %v1108
        %v1173 = vadd.f32 %v969, %v1109
        %v1174 = vadd.f32 %v970, %v1110
        %v1175 = vadd.f32 %v971, %v1111
        %v1176 = vadd.f32 %v972, %v1112
        %v1177 = vadd.f32 %v973, %v1113
        %v1178 = vadd.f32 %v974, %v1114
        %v1179 = vadd.f32 %v975, %v1115
        %v1180 = vadd.f32 %v976, %v1116
        %v1181 = vadd.f32 %v977, %v1117
        %v1182 = vadd.f32 %v978, %v1118
        %v1183 = vadd.f32 %v979, %v1119
        %v1184 = vadd.f32 %v980, %v1120
        %v1185 = vadd.f32 %v981, %v1121
        %v1186 = vadd.f32 %v982, %v1122
        %v1187 = vadd.f32 %v983, %v1123
        %v1188 = vadd.f32 %v984, %v1124
        %v1189 = vadd.f32 %v985, %v1125
        %v1190 = vadd.f32 %v986, %v1126
        %v1191 = vadd.f32 %v987, %v1127
        %v1192 = vadd.f32 %v988, %v1128
        %v1193 = vadd.f32 %v989, %v1129
        %v1194 = vadd.f32 %v990, %v1130
        %v1195 = vadd.f32 %v991, %v1131
        %v1196 = vadd.f32 %v992, %v1132
        %v1197 = vadd.f32 %v993, %v1133
        %v1198 = vadd.f32 %v994, %v1134
        %v1199 = vadd.f32 %v995, %v1135
        %v1200 = vadd.f32 %v996, %v1136
        %v1201 = vadd.f32 %v997, %v1137
        %v1202 = vadd.f32 %v998, %v1138
        %v1203 = vadd.f32 %v999, %v1139
        %v1204 = vadd.f32 %v1000, %v1140
        %v1205 = vadd.f32 %v1001, %v1141
        %v1206 = vld [vmem:[%s2] sm:$0xff]
        %v1207 = vld [vmem:[%s2 + $0x8] sm:$0xff]
        %v1208 = vld [vmem:[%s2 + $0x10] sm:$0xff]
        %v1209 = vld [vmem:[%s2 + $0x18] sm:$0xff]
        %v1210 = vld [vmem:[%s2 + $0x20] sm:$0xff]
        %v1211 = vld [vmem:[%s2 + $0x28] sm:$0xff]
        %v1212 = vld [vmem:[%s2 + $0x30] sm:$0xff]
        %v1213 = vld [vmem:[%s2 + $0x38] sm:$0xff]
        %v1214 = vld [vmem:[%s2 + $0x40] sm:$0xff]
        %v1215 = vld [vmem:[%s2 + $0x48] sm:$0xff]
        %v1216 = vld [vmem:[%s2 + $0x50] sm:$0xff]
        %v1217 = vld [vmem:[%s2 + $0x58] sm:$0xff]
        %v1218 = vld [vmem:[%s2 + $0x60] sm:$0xff]
        %v1219 = vld [vmem:[%s2 + $0x68] sm:$0xff]
        %v1220 = vld [vmem:[%s2 + $0x70] sm:$0xff]
        %v1221 = vld [vmem:[%s2 + $0x78] sm:$0xff]
        %1223 = vset.pattern.permute.xlu0 0
        %1224 = vperm.xlu0 %1223, %v1206
        %v1225 = vpop.permute.xlu0 %1224
        %1228 = vset.pattern.permute.xlu0 0
        %1229 = vperm.xlu0 %1228, %v1207
        %v1230 = vpop.permute.xlu0 %1229
        %1233 = vset.pattern.permute.xlu0 0
        %1234 = vperm.xlu0 %1233, %v1208
        %v1235 = vpop.permute.xlu0 %1234
        %1238 = vset.pattern.permute.xlu0 0
        %1239 = vperm.xlu0 %1238, %v1209
        %v1240 = vpop.permute.xlu0 %1239
        %1243 = vset.pattern.permute.xlu0 0
        %1244 = vperm.xlu0 %1243, %v1210
        %v1245 = vpop.permute.xlu0 %1244
        %1248 = vset.pattern.permute.xlu0 0
        %1249 = vperm.xlu0 %1248, %v1211
        %v1250 = vpop.permute.xlu0 %1249
        %1253 = vset.pattern.permute.xlu0 0
        %1254 = vperm.xlu0 %1253, %v1212
        %v1255 = vpop.permute.xlu0 %1254
        %1258 = vset.pattern.permute.xlu0 0
        %1259 = vperm.xlu0 %1258, %v1213
        %v1260 = vpop.permute.xlu0 %1259
        %1263 = vset.pattern.permute.xlu0 0
        %1264 = vperm.xlu0 %1263, %v1214
        %v1265 = vpop.permute.xlu0 %1264
        %1268 = vset.pattern.permute.xlu0 0
        %1269 = vperm.xlu0 %1268, %v1215
        %v1270 = vpop.permute.xlu0 %1269
        %1273 = vset.pattern.permute.xlu0 0
        %1274 = vperm.xlu0 %1273, %v1216
        %v1275 = vpop.permute.xlu0 %1274
        %1278 = vset.pattern.permute.xlu0 0
        %1279 = vperm.xlu0 %1278, %v1217
        %v1280 = vpop.permute.xlu0 %1279
        %1283 = vset.pattern.permute.xlu0 0
        %1284 = vperm.xlu0 %1283, %v1218
        %v1285 = vpop.permute.xlu0 %1284
        %1288 = vset.pattern.permute.xlu0 0
        %1289 = vperm.xlu0 %1288, %v1219
        %v1290 = vpop.permute.xlu0 %1289
        %1293 = vset.pattern.permute.xlu0 0
        %1294 = vperm.xlu0 %1293, %v1220
        %v1295 = vpop.permute.xlu0 %1294
        %1298 = vset.pattern.permute.xlu0 0
        %1299 = vperm.xlu0 %1298, %v1221
        %v1300 = vpop.permute.xlu0 %1299
        %v1302 = vadd.f32 %v1142, %v1225
        %v1303 = vadd.f32 %v1143, %v1225
        %v1304 = vadd.f32 %v1144, %v1225
        %v1305 = vadd.f32 %v1145, %v1225
        %v1306 = vadd.f32 %v1146, %v1230
        %v1307 = vadd.f32 %v1147, %v1230
        %v1308 = vadd.f32 %v1148, %v1230
        %v1309 = vadd.f32 %v1149, %v1230
        %v1310 = vadd.f32 %v1150, %v1235
        %v1311 = vadd.f32 %v1151, %v1235
        %v1312 = vadd.f32 %v1152, %v1235
        %v1313 = vadd.f32 %v1153, %v1235
        %v1314 = vadd.f32 %v1154, %v1240
        %v1315 = vadd.f32 %v1155, %v1240
        %v1316 = vadd.f32 %v1156, %v1240
        %v1317 = vadd.f32 %v1157, %v1240
        %v1318 = vadd.f32 %v1158, %v1245
        %v1319 = vadd.f32 %v1159, %v1245
        %v1320 = vadd.f32 %v1160, %v1245
        %v1321 = vadd.f32 %v1161, %v1245
        %v1322 = vadd.f32 %v1162, %v1250
        %v1323 = vadd.f32 %v1163, %v1250
        %v1324 = vadd.f32 %v1164, %v1250
        %v1325 = vadd.f32 %v1165, %v1250
        %v1326 = vadd.f32 %v1166, %v1255
        %v1327 = vadd.f32 %v1167, %v1255
        %v1328 = vadd.f32 %v1168, %v1255
        %v1329 = vadd.f32 %v1169, %v1255
        %v1330 = vadd.f32 %v1170, %v1260
        %v1331 = vadd.f32 %v1171, %v1260
        %v1332 = vadd.f32 %v1172, %v1260
        %v1333 = vadd.f32 %v1173, %v1260
        %v1334 = vadd.f32 %v1174, %v1265
        %v1335 = vadd.f32 %v1175, %v1265
        %v1336 = vadd.f32 %v1176, %v1265
        %v1337 = vadd.f32 %v1177, %v1265
        %v1338 = vadd.f32 %v1178, %v1270
        %v1339 = vadd.f32 %v1179, %v1270
        %v1340 = vadd.f32 %v1180, %v1270
        %v1341 = vadd.f32 %v1181, %v1270
        %v1342 = vadd.f32 %v1182, %v1275
        %v1343 = vadd.f32 %v1183, %v1275
        %v1344 = vadd.f32 %v1184, %v1275
        %v1345 = vadd.f32 %v1185, %v1275
        %v1346 = vadd.f32 %v1186, %v1280
        %v1347 = vadd.f32 %v1187, %v1280
        %v1348 = vadd.f32 %v1188, %v1280
        %v1349 = vadd.f32 %v1189, %v1280
        %v1350 = vadd.f32 %v1190, %v1285
        %v1351 = vadd.f32 %v1191, %v1285
        %v1352 = vadd.f32 %v1192, %v1285
        %v1353 = vadd.f32 %v1193, %v1285
        %v1354 = vadd.f32 %v1194, %v1290
        %v1355 = vadd.f32 %v1195, %v1290
        %v1356 = vadd.f32 %v1196, %v1290
        %v1357 = vadd.f32 %v1197, %v1290
        %v1358 = vadd.f32 %v1198, %v1295
        %v1359 = vadd.f32 %v1199, %v1295
        %v1360 = vadd.f32 %v1200, %v1295
        %v1361 = vadd.f32 %v1201, %v1295
        %v1362 = vadd.f32 %v1202, %v1300
        %v1363 = vadd.f32 %v1203, %v1300
        %v1364 = vadd.f32 %v1204, %v1300
        %v1365 = vadd.f32 %v1205, %v1300
        %v1366 = vmax.f32 %v1302, 0.0
        %v1367 = vmax.f32 %v1303, 0.0
        %v1368 = vmax.f32 %v1304, 0.0
        %v1369 = vmax.f32 %v1305, 0.0
        %v1370 = vmax.f32 %v1306, 0.0
        %v1371 = vmax.f32 %v1307, 0.0
        %v1372 = vmax.f32 %v1308, 0.0
        %v1373 = vmax.f32 %v1309, 0.0
        %v1374 = vmax.f32 %v1310, 0.0
        %v1375 = vmax.f32 %v1311, 0.0
        %v1376 = vmax.f32 %v1312, 0.0
        %v1377 = vmax.f32 %v1313, 0.0
        %v1378 = vmax.f32 %v1314, 0.0
        %v1379 = vmax.f32 %v1315, 0.0
        %v1380 = vmax.f32 %v1316, 0.0
        %v1381 = vmax.f32 %v1317, 0.0
        %v1382 = vmax.f32 %v1318, 0.0
        %v1383 = vmax.f32 %v1319, 0.0
        %v1384 = vmax.f32 %v1320, 0.0
        %v1385 = vmax.f32 %v1321, 0.0
        %v1386 = vmax.f32 %v1322, 0.0
        %v1387 = vmax.f32 %v1323, 0.0
        %v1388 = vmax.f32 %v1324, 0.0
        %v1389 = vmax.f32 %v1325, 0.0
        %v1390 = vmax.f32 %v1326, 0.0
        %v1391 = vmax.f32 %v1327, 0.0
        %v1392 = vmax.f32 %v1328, 0.0
        %v1393 = vmax.f32 %v1329, 0.0
        %v1394 = vmax.f32 %v1330, 0.0
        %v1395 = vmax.f32 %v1331, 0.0
        %v1396 = vmax.f32 %v1332, 0.0
        %v1397 = vmax.f32 %v1333, 0.0
        %v1398 = vmax.f32 %v1334, 0.0
        %v1399 = vmax.f32 %v1335, 0.0
        %v1400 = vmax.f32 %v1336, 0.0
        %v1401 = vmax.f32 %v1337, 0.0
        %v1402 = vmax.f32 %v1338, 0.0
        %v1403 = vmax.f32 %v1339, 0.0
        %v1404 = vmax.f32 %v1340, 0.0
        %v1405 = vmax.f32 %v1341, 0.0
        %v1406 = vmax.f32 %v1342, 0.0
        %v1407 = vmax.f32 %v1343, 0.0
        %v1408 = vmax.f32 %v1344, 0.0
        %v1409 = vmax.f32 %v1345, 0.0
        %v1410 = vmax.f32 %v1346, 0.0
        %v1411 = vmax.f32 %v1347, 0.0
        %v1412 = vmax.f32 %v1348, 0.0
        %v1413 = vmax.f32 %v1349, 0.0
        %v1414 = vmax.f32 %v1350, 0.0
        %v1415 = vmax.f32 %v1351, 0.0
        %v1416 = vmax.f32 %v1352, 0.0
        %v1417 = vmax.f32 %v1353, 0.0
        %v1418 = vmax.f32 %v1354, 0.0
        %v1419 = vmax.f32 %v1355, 0.0
        %v1420 = vmax.f32 %v1356, 0.0
        %v1421 = vmax.f32 %v1357, 0.0
        %v1422 = vmax.f32 %v1358, 0.0
        %v1423 = vmax.f32 %v1359, 0.0
        %v1424 = vmax.f32 %v1360, 0.0
        %v1425 = vmax.f32 %v1361, 0.0
        %v1426 = vmax.f32 %v1362, 0.0
        %v1427 = vmax.f32 %v1363, 0.0
        %v1428 = vmax.f32 %v1364, 0.0
        %v1429 = vmax.f32 %v1365, 0.0
        %v1430 = vld [vmem:[#allocation3] sm:$0xf]
        %v1431 = vld [vmem:[#allocation3 + $0x4] sm:$0xf]
        %v1432 = vld [vmem:[#allocation3 + $0x8] sm:$0xf]
        %v1433 = vld [vmem:[#allocation3 + $0xc] sm:$0xf]
        %v1434 = vld [vmem:[#allocation3 + $0x10] sm:$0xf]
        %v1435 = vld [vmem:[#allocation3 + $0x14] sm:$0xf]
        %v1436 = vld [vmem:[#allocation3 + $0x18] sm:$0xf]
        %v1437 = vld [vmem:[#allocation3 + $0x1c] sm:$0xf]
        %v1438 = vld [vmem:[#allocation3 + $0x20] sm:$0xf]
        %v1439 = vld [vmem:[#allocation3 + $0x24] sm:$0xf]
        %v1440 = vld [vmem:[#allocation3 + $0x28] sm:$0xf]
        %v1441 = vld [vmem:[#allocation3 + $0x2c] sm:$0xf]
        %v1442 = vld [vmem:[#allocation3 + $0x30] sm:$0xf]
        %v1443 = vld [vmem:[#allocation3 + $0x34] sm:$0xf]
        %v1444 = vld [vmem:[#allocation3 + $0x38] sm:$0xf]
        %v1445 = vld [vmem:[#allocation3 + $0x3c] sm:$0xf]
        %v1446 = vpack.c.bf16 %v1370, %v1366
        %v1447 = vpack.c.bf16 %v1371, %v1367
        %v1448 = vpack.c.bf16 %v1372, %v1368
        %v1449 = vpack.c.bf16 %v1373, %v1369
        %v1450 = vpack.c.bf16 %v1378, %v1374
        %v1451 = vpack.c.bf16 %v1379, %v1375
        %v1452 = vpack.c.bf16 %v1380, %v1376
        %v1453 = vpack.c.bf16 %v1381, %v1377
        %v1454 = vpack.c.bf16 %v1386, %v1382
        %v1455 = vpack.c.bf16 %v1387, %v1383
        %v1456 = vpack.c.bf16 %v1388, %v1384
        %v1457 = vpack.c.bf16 %v1389, %v1385
        %v1458 = vpack.c.bf16 %v1394, %v1390
        %v1459 = vpack.c.bf16 %v1395, %v1391
        %v1460 = vpack.c.bf16 %v1396, %v1392
        %v1461 = vpack.c.bf16 %v1397, %v1393
        %v1462 = vpack.c.bf16 %v1402, %v1398
        %v1463 = vpack.c.bf16 %v1403, %v1399
        %v1464 = vpack.c.bf16 %v1404, %v1400
        %v1465 = vpack.c.bf16 %v1405, %v1401
        %v1466 = vpack.c.bf16 %v1410, %v1406
        %v1467 = vpack.c.bf16 %v1411, %v1407
        %v1468 = vpack.c.bf16 %v1412, %v1408
        %v1469 = vpack.c.bf16 %v1413, %v1409
        %v1470 = vpack.c.bf16 %v1418, %v1414
        %v1471 = vpack.c.bf16 %v1419, %v1415
        %v1472 = vpack.c.bf16 %v1420, %v1416
        %v1473 = vpack.c.bf16 %v1421, %v1417
        %v1474 = vpack.c.bf16 %v1426, %v1422
        %v1475 = vpack.c.bf16 %v1427, %v1423
        %v1476 = vpack.c.bf16 %v1428, %v1424
        %v1477 = vpack.c.bf16 %v1429, %v1425
        %v1478 = vld [vmem:[%s4] sm:$0xff]
        %v1479 = vld [vmem:[%s4 + $0x8] sm:$0xff]
        %v1480 = vld [vmem:[%s4 + $0x10] sm:$0xff]
        %v1481 = vld [vmem:[%s4 + $0x18] sm:$0xff]
        %v1482 = vld [vmem:[%s4 + $0x20] sm:$0xff]
        %v1483 = vld [vmem:[%s4 + $0x28] sm:$0xff]
        %v1484 = vld [vmem:[%s4 + $0x30] sm:$0xff]
        %v1485 = vld [vmem:[%s4 + $0x38] sm:$0xff]
        %v1486 = vld [vmem:[%s4 + $0x40] sm:$0xff]
        %v1487 = vld [vmem:[%s4 + $0x48] sm:$0xff]
        %v1488 = vld [vmem:[%s4 + $0x50] sm:$0xff]
        %v1489 = vld [vmem:[%s4 + $0x58] sm:$0xff]
        %v1490 = vld [vmem:[%s4 + $0x60] sm:$0xff]
        %v1491 = vld [vmem:[%s4 + $0x68] sm:$0xff]
        %v1492 = vld [vmem:[%s4 + $0x70] sm:$0xff]
        %v1493 = vld [vmem:[%s4 + $0x78] sm:$0xff]
        %1495 = vset.pattern.permute.xlu0 0
        %1496 = vperm.xlu0 %1495, %v1478
        %v1497 = vpop.permute.xlu0 %1496
        %1500 = vset.pattern.permute.xlu0 0
        %1501 = vperm.xlu0 %1500, %v1479
        %v1502 = vpop.permute.xlu0 %1501
        %1505 = vset.pattern.permute.xlu0 0
        %1506 = vperm.xlu0 %1505, %v1480
        %v1507 = vpop.permute.xlu0 %1506
        %1510 = vset.pattern.permute.xlu0 0
        %1511 = vperm.xlu0 %1510, %v1481
        %v1512 = vpop.permute.xlu0 %1511
        %1515 = vset.pattern.permute.xlu0 0
        %1516 = vperm.xlu0 %1515, %v1482
        %v1517 = vpop.permute.xlu0 %1516
        %1520 = vset.pattern.permute.xlu0 0
        %1521 = vperm.xlu0 %1520, %v1483
        %v1522 = vpop.permute.xlu0 %1521
        %1525 = vset.pattern.permute.xlu0 0
        %1526 = vperm.xlu0 %1525, %v1484
        %v1527 = vpop.permute.xlu0 %1526
        %1530 = vset.pattern.permute.xlu0 0
        %1531 = vperm.xlu0 %1530, %v1485
        %v1532 = vpop.permute.xlu0 %1531
        %1535 = vset.pattern.permute.xlu0 0
        %1536 = vperm.xlu0 %1535, %v1486
        %v1537 = vpop.permute.xlu0 %1536
        %1540 = vset.pattern.permute.xlu0 0
        %1541 = vperm.xlu0 %1540, %v1487
        %v1542 = vpop.permute.xlu0 %1541
        %1545 = vset.pattern.permute.xlu0 0
        %1546 = vperm.xlu0 %1545, %v1488
        %v1547 = vpop.permute.xlu0 %1546
        %1550 = vset.pattern.permute.xlu0 0
        %1551 = vperm.xlu0 %1550, %v1489
        %v1552 = vpop.permute.xlu0 %1551
        %1555 = vset.pattern.permute.xlu0 0
        %1556 = vperm.xlu0 %1555, %v1490
        %v1557 = vpop.permute.xlu0 %1556
        %1560 = vset.pattern.permute.xlu0 0
        %1561 = vperm.xlu0 %1560, %v1491
        %v1562 = vpop.permute.xlu0 %1561
        %1565 = vset.pattern.permute.xlu0 0
        %1566 = vperm.xlu0 %1565, %v1492
        %v1567 = vpop.permute.xlu0 %1566
        %1570 = vset.pattern.permute.xlu0 0
        %1571 = vperm.xlu0 %1570, %v1493
        %v1572 = vpop.permute.xlu0 %1571
        %v1590 = vunpack.c.l.b16 %v1430
        %v1591 = vunpack.c.l.b16 %v1431
        %v1592 = vunpack.c.l.b16 %v1432
        %v1593 = vunpack.c.l.b16 %v1433
        %v1594 = vunpack.c.l.b16 %v1434
        %v1595 = vunpack.c.l.b16 %v1435
        %v1596 = vunpack.c.l.b16 %v1436
        %v1597 = vunpack.c.l.b16 %v1437
        %v1598 = vunpack.c.l.b16 %v1438
        %v1599 = vunpack.c.l.b16 %v1439
        %v1600 = vunpack.c.l.b16 %v1440
        %v1601 = vunpack.c.l.b16 %v1441
        %v1602 = vunpack.c.l.b16 %v1442
        %v1603 = vunpack.c.l.b16 %v1443
        %v1604 = vunpack.c.l.b16 %v1444
        %v1605 = vunpack.c.l.b16 %v1445
        %v1606 = vpack.c.b16 %v1591, %v1590
        %v1607 = vpack.c.b16 %v1593, %v1592
        %v1608 = vpack.c.b16 %v1595, %v1594
        %v1609 = vpack.c.b16 %v1597, %v1596
        %v1610 = vpack.c.b16 %v1599, %v1598
        %v1611 = vpack.c.b16 %v1601, %v1600
        %v1612 = vpack.c.b16 %v1603, %v1602
        %v1613 = vpack.c.b16 %v1605, %v1604
        %1622 = vmatpush.bf16.msra.mxu0 %v1474
        %1623 = vmatpush.bf16.msra.mxu0 %v1470
        %1624 = vmatpush.bf16.msra.mxu0 %v1466
        %1625 = vmatpush.bf16.msra.mxu0 %v1462
        %1626 = vmatpush.bf16.msra.mxu0 %v1458
        %1627 = vmatpush.bf16.msra.mxu0 %v1454
        %1628 = vmatpush.bf16.msra.mxu0 %v1450
        %1629 = vmatpush.bf16.msra.mxu0 %v1446
        %1630 = vmatmul.bf16.gmra.mxu0 %v1606
        %v1631 = vpop.f32.mrf.mxu0
        %v1632 = vadd.f32 %v1497, %v1631
        %v1633 = vpop.f32.mrf.mxu0
        %v1634 = vadd.f32 %v1502, %v1633
        %1635 = vmatmul.bf16.gmra.mxu0 %v1607
        %v1636 = vpop.f32.mrf.mxu0
        %v1637 = vadd.f32 %v1507, %v1636
        %v1638 = vpop.f32.mrf.mxu0
        %v1639 = vadd.f32 %v1512, %v1638
        %1640 = vmatmul.bf16.gmra.mxu0 %v1608
        %v1641 = vpop.f32.mrf.mxu0
        %v1642 = vadd.f32 %v1517, %v1641
        %v1643 = vpop.f32.mrf.mxu0
        %v1644 = vadd.f32 %v1522, %v1643
        %1645 = vmatmul.bf16.gmra.mxu0 %v1609
        %v1646 = vpop.f32.mrf.mxu0
        %v1647 = vadd.f32 %v1527, %v1646
        %v1648 = vpop.f32.mrf.mxu0
        %v1649 = vadd.f32 %v1532, %v1648
        %1650 = vmatmul.bf16.gmra.mxu0 %v1610
        %v1651 = vpop.f32.mrf.mxu0
        %v1652 = vadd.f32 %v1537, %v1651
        %v1653 = vpop.f32.mrf.mxu0
        %v1654 = vadd.f32 %v1542, %v1653
        %1655 = vmatmul.bf16.gmra.mxu0 %v1611
        %v1656 = vpop.f32.mrf.mxu0
        %v1657 = vadd.f32 %v1547, %v1656
        %v1658 = vpop.f32.mrf.mxu0
        %v1659 = vadd.f32 %v1552, %v1658
        %1660 = vmatmul.bf16.gmra.mxu0 %v1612
        %v1661 = vpop.f32.mrf.mxu0
        %v1662 = vadd.f32 %v1557, %v1661
        %v1663 = vpop.f32.mrf.mxu0
        %v1664 = vadd.f32 %v1562, %v1663
        %1665 = vmatmul.bf16.gmra.mxu0 %v1613
        %v1666 = vpop.f32.mrf.mxu0
        %v1667 = vadd.f32 %v1567, %v1666
        %v1668 = vpop.f32.mrf.mxu0
        %v1669 = vadd.f32 %v1572, %v1668
        %1670 = vdwg.mxu0
        %1671 = vmatpush.bf16.msra.mxu0 %v1475
        %1672 = vmatpush.bf16.msra.mxu0 %v1471
        %1673 = vmatpush.bf16.msra.mxu0 %v1467
        %1674 = vmatpush.bf16.msra.mxu0 %v1463
        %1675 = vmatpush.bf16.msra.mxu0 %v1459
        %1676 = vmatpush.bf16.msra.mxu0 %v1455
        %1677 = vmatpush.bf16.msra.mxu0 %v1451
        %1678 = vmatpush.bf16.msra.mxu0 %v1447
        %1679 = vmatmul.bf16.gmra.mxu0 %v1606
        %v1680 = vpop.f32.mrf.mxu0
        %v1681 = vadd.f32 %v1497, %v1680
        %v1682 = vpop.f32.mrf.mxu0
        %v1683 = vadd.f32 %v1502, %v1682
        %1684 = vmatmul.bf16.gmra.mxu0 %v1607
        %v1685 = vpop.f32.mrf.mxu0
        %v1686 = vadd.f32 %v1507, %v1685
        %v1687 = vpop.f32.mrf.mxu0
        %v1688 = vadd.f32 %v1512, %v1687
        %1689 = vmatmul.bf16.gmra.mxu0 %v1608
        %v1690 = vpop.f32.mrf.mxu0
        %v1691 = vadd.f32 %v1517, %v1690
        %v1692 = vpop.f32.mrf.mxu0
        %v1693 = vadd.f32 %v1522, %v1692
        %1694 = vmatmul.bf16.gmra.mxu0 %v1609
        %v1695 = vpop.f32.mrf.mxu0
        %v1696 = vadd.f32 %v1527, %v1695
        %v1697 = vpop.f32.mrf.mxu0
        %v1698 = vadd.f32 %v1532, %v1697
        %1699 = vmatmul.bf16.gmra.mxu0 %v1610
        %v1700 = vpop.f32.mrf.mxu0
        %v1701 = vadd.f32 %v1537, %v1700
        %v1702 = vpop.f32.mrf.mxu0
        %v1703 = vadd.f32 %v1542, %v1702
        %1704 = vmatmul.bf16.gmra.mxu0 %v1611
        %v1705 = vpop.f32.mrf.mxu0
        %v1706 = vadd.f32 %v1547, %v1705
        %v1707 = vpop.f32.mrf.mxu0
        %v1708 = vadd.f32 %v1552, %v1707
        %1709 = vmatmul.bf16.gmra.mxu0 %v1612
        %v1710 = vpop.f32.mrf.mxu0
        %v1711 = vadd.f32 %v1557, %v1710
        %v1712 = vpop.f32.mrf.mxu0
        %v1713 = vadd.f32 %v1562, %v1712
        %1714 = vmatmul.bf16.gmra.mxu0 %v1613
        %v1715 = vpop.f32.mrf.mxu0
        %v1716 = vadd.f32 %v1567, %v1715
        %v1717 = vpop.f32.mrf.mxu0
        %v1718 = vadd.f32 %v1572, %v1717
        %1719 = vdwg.mxu0
        %1720 = vmatpush.bf16.msra.mxu0 %v1476
        %1721 = vmatpush.bf16.msra.mxu0 %v1472
        %1722 = vmatpush.bf16.msra.mxu0 %v1468
        %1723 = vmatpush.bf16.msra.mxu0 %v1464
        %1724 = vmatpush.bf16.msra.mxu0 %v1460
        %1725 = vmatpush.bf16.msra.mxu0 %v1456
        %1726 = vmatpush.bf16.msra.mxu0 %v1452
        %1727 = vmatpush.bf16.msra.mxu0 %v1448
        %1728 = vmatmul.bf16.gmra.mxu0 %v1606
        %v1729 = vpop.f32.mrf.mxu0
        %v1730 = vadd.f32 %v1497, %v1729
        %v1731 = vpop.f32.mrf.mxu0
        %v1732 = vadd.f32 %v1502, %v1731
        %1733 = vmatmul.bf16.gmra.mxu0 %v1607
        %v1734 = vpop.f32.mrf.mxu0
        %v1735 = vadd.f32 %v1507, %v1734
        %v1736 = vpop.f32.mrf.mxu0
        %v1737 = vadd.f32 %v1512, %v1736
        %1738 = vmatmul.bf16.gmra.mxu0 %v1608
        %v1739 = vpop.f32.mrf.mxu0
        %v1740 = vadd.f32 %v1517, %v1739
        %v1741 = vpop.f32.mrf.mxu0
        %v1742 = vadd.f32 %v1522, %v1741
        %1743 = vmatmul.bf16.gmra.mxu0 %v1609
        %v1744 = vpop.f32.mrf.mxu0
        %v1745 = vadd.f32 %v1527, %v1744
        %v1746 = vpop.f32.mrf.mxu0
        %v1747 = vadd.f32 %v1532, %v1746
        %1748 = vmatmul.bf16.gmra.mxu0 %v1610
        %v1749 = vpop.f32.mrf.mxu0
        %v1750 = vadd.f32 %v1537, %v1749
        %v1751 = vpop.f32.mrf.mxu0
        %v1752 = vadd.f32 %v1542, %v1751
        %1753 = vmatmul.bf16.gmra.mxu0 %v1611
        %v1754 = vpop.f32.mrf.mxu0
        %v1755 = vadd.f32 %v1547, %v1754
        %v1756 = vpop.f32.mrf.mxu0
        %v1757 = vadd.f32 %v1552, %v1756
        %1758 = vmatmul.bf16.gmra.mxu0 %v1612
        %v1759 = vpop.f32.mrf.mxu0
        %v1760 = vadd.f32 %v1557, %v1759
        %v1761 = vpop.f32.mrf.mxu0
        %v1762 = vadd.f32 %v1562, %v1761
        %1763 = vmatmul.bf16.gmra.mxu0 %v1613
        %v1764 = vpop.f32.mrf.mxu0
        %v1765 = vadd.f32 %v1567, %v1764
        %v1766 = vpop.f32.mrf.mxu0
        %v1767 = vadd.f32 %v1572, %v1766
        %1768 = vdwg.mxu0
        %1769 = vmatpush.bf16.msra.mxu0 %v1477
        %1770 = vmatpush.bf16.msra.mxu0 %v1473
        %1771 = vmatpush.bf16.msra.mxu0 %v1469
        %1772 = vmatpush.bf16.msra.mxu0 %v1465
        %1773 = vmatpush.bf16.msra.mxu0 %v1461
        %1774 = vmatpush.bf16.msra.mxu0 %v1457
        %1775 = vmatpush.bf16.msra.mxu0 %v1453
        %1776 = vmatpush.bf16.msra.mxu0 %v1449
        %1777 = vmatmul.bf16.gmra.mxu0 %v1606
        %v1778 = vpop.f32.mrf.mxu0
        %v1779 = vadd.f32 %v1497, %v1778
        %v1780 = vpop.f32.mrf.mxu0
        %v1781 = vadd.f32 %v1502, %v1780
        %1782 = vmatmul.bf16.gmra.mxu0 %v1607
        %v1783 = vpop.f32.mrf.mxu0
        %v1784 = vadd.f32 %v1507, %v1783
        %v1785 = vpop.f32.mrf.mxu0
        %v1786 = vadd.f32 %v1512, %v1785
        %1787 = vmatmul.bf16.gmra.mxu0 %v1608
        %v1788 = vpop.f32.mrf.mxu0
        %v1789 = vadd.f32 %v1517, %v1788
        %v1790 = vpop.f32.mrf.mxu0
        %v1791 = vadd.f32 %v1522, %v1790
        %1792 = vmatmul.bf16.gmra.mxu0 %v1609
        %v1793 = vpop.f32.mrf.mxu0
        %v1794 = vadd.f32 %v1527, %v1793
        %v1795 = vpop.f32.mrf.mxu0
        %v1796 = vadd.f32 %v1532, %v1795
        %1797 = vmatmul.bf16.gmra.mxu0 %v1610
        %v1798 = vpop.f32.mrf.mxu0
        %v1799 = vadd.f32 %v1537, %v1798
        %v1800 = vpop.f32.mrf.mxu0
        %v1801 = vadd.f32 %v1542, %v1800
        %1802 = vmatmul.bf16.gmra.mxu0 %v1611
        %v1803 = vpop.f32.mrf.mxu0
        %v1804 = vadd.f32 %v1547, %v1803
        %v1805 = vpop.f32.mrf.mxu0
        %v1806 = vadd.f32 %v1552, %v1805
        %1807 = vmatmul.bf16.gmra.mxu0 %v1612
        %v1808 = vpop.f32.mrf.mxu0
        %v1809 = vadd.f32 %v1557, %v1808
        %v1810 = vpop.f32.mrf.mxu0
        %v1811 = vadd.f32 %v1562, %v1810
        %1812 = vmatmul.bf16.gmra.mxu0 %v1613
        %v1813 = vpop.f32.mrf.mxu0
        %v1814 = vadd.f32 %v1567, %v1813
        %v1815 = vpop.f32.mrf.mxu0
        %v1816 = vadd.f32 %v1572, %v1815
        %1817 = vdwg.mxu0
        %v1818 = vmax.f32 %v1632, 0.0
        %v1819 = vmax.f32 %v1681, 0.0
        %v1820 = vmax.f32 %v1730, 0.0
        %v1821 = vmax.f32 %v1779, 0.0
        %v1822 = vmax.f32 %v1634, 0.0
        %v1823 = vmax.f32 %v1683, 0.0
        %v1824 = vmax.f32 %v1732, 0.0
        %v1825 = vmax.f32 %v1781, 0.0
        %v1826 = vmax.f32 %v1637, 0.0
        %v1827 = vmax.f32 %v1686, 0.0
        %v1828 = vmax.f32 %v1735, 0.0
        %v1829 = vmax.f32 %v1784, 0.0
        %v1830 = vmax.f32 %v1639, 0.0
        %v1831 = vmax.f32 %v1688, 0.0
        %v1832 = vmax.f32 %v1737, 0.0
        %v1833 = vmax.f32 %v1786, 0.0
        %v1834 = vmax.f32 %v1642, 0.0
        %v1835 = vmax.f32 %v1691, 0.0
        %v1836 = vmax.f32 %v1740, 0.0
        %v1837 = vmax.f32 %v1789, 0.0
        %v1838 = vmax.f32 %v1644, 0.0
        %v1839 = vmax.f32 %v1693, 0.0
        %v1840 = vmax.f32 %v1742, 0.0
        %v1841 = vmax.f32 %v1791, 0.0
        %v1842 = vmax.f32 %v1647, 0.0
        %v1843 = vmax.f32 %v1696, 0.0
        %v1844 = vmax.f32 %v1745, 0.0
        %v1845 = vmax.f32 %v1794, 0.0
        %v1846 = vmax.f32 %v1649, 0.0
        %v1847 = vmax.f32 %v1698, 0.0
        %v1848 = vmax.f32 %v1747, 0.0
        %v1849 = vmax.f32 %v1796, 0.0
        %v1850 = vmax.f32 %v1652, 0.0
        %v1851 = vmax.f32 %v1701, 0.0
        %v1852 = vmax.f32 %v1750, 0.0
        %v1853 = vmax.f32 %v1799, 0.0
        %v1854 = vmax.f32 %v1654, 0.0
        %v1855 = vmax.f32 %v1703, 0.0
        %v1856 = vmax.f32 %v1752, 0.0
        %v1857 = vmax.f32 %v1801, 0.0
        %v1858 = vmax.f32 %v1657, 0.0
        %v1859 = vmax.f32 %v1706, 0.0
        %v1860 = vmax.f32 %v1755, 0.0
        %v1861 = vmax.f32 %v1804, 0.0
        %v1862 = vmax.f32 %v1659, 0.0
        %v1863 = vmax.f32 %v1708, 0.0
        %v1864 = vmax.f32 %v1757, 0.0
        %v1865 = vmax.f32 %v1806, 0.0
        %v1866 = vmax.f32 %v1662, 0.0
        %v1867 = vmax.f32 %v1711, 0.0
        %v1868 = vmax.f32 %v1760, 0.0
        %v1869 = vmax.f32 %v1809, 0.0
        %v1870 = vmax.f32 %v1664, 0.0
        %v1871 = vmax.f32 %v1713, 0.0
        %v1872 = vmax.f32 %v1762, 0.0
        %v1873 = vmax.f32 %v1811, 0.0
        %v1874 = vmax.f32 %v1667, 0.0
        %v1875 = vmax.f32 %v1716, 0.0
        %v1876 = vmax.f32 %v1765, 0.0
        %v1877 = vmax.f32 %v1814, 0.0
        %v1878 = vmax.f32 %v1669, 0.0
        %v1879 = vmax.f32 %v1718, 0.0
        %v1880 = vmax.f32 %v1767, 0.0
        %v1881 = vmax.f32 %v1816, 0.0
        %v1882 = vld [vmem:[%s5] sm:$0xf]
        %v1883 = vld [vmem:[%s5 + $0x4] sm:$0xf]
        %v1884 = vld [vmem:[%s5 + $0x8] sm:$0xf]
        %v1885 = vld [vmem:[%s5 + $0xc] sm:$0xf]
        %v1886 = vld [vmem:[%s5 + $0x10] sm:$0xf]
        %v1887 = vld [vmem:[%s5 + $0x14] sm:$0xf]
        %v1888 = vld [vmem:[%s5 + $0x18] sm:$0xf]
        %v1889 = vld [vmem:[%s5 + $0x1c] sm:$0xf]
        %v1890 = vld [vmem:[%s5 + $0x20] sm:$0xf]
        %v1891 = vld [vmem:[%s5 + $0x24] sm:$0xf]
        %v1892 = vld [vmem:[%s5 + $0x28] sm:$0xf]
        %v1893 = vld [vmem:[%s5 + $0x2c] sm:$0xf]
        %v1894 = vld [vmem:[%s5 + $0x30] sm:$0xf]
        %v1895 = vld [vmem:[%s5 + $0x34] sm:$0xf]
        %v1896 = vld [vmem:[%s5 + $0x38] sm:$0xf]
        %v1897 = vld [vmem:[%s5 + $0x3c] sm:$0xf]
        %v1898 = vld [vmem:[%s5 + $0x40] sm:$0xf]
        %v1899 = vld [vmem:[%s5 + $0x44] sm:$0xf]
        %v1900 = vld [vmem:[%s5 + $0x48] sm:$0xf]
        %v1901 = vld [vmem:[%s5 + $0x4c] sm:$0xf]
        %v1902 = vld [vmem:[%s5 + $0x50] sm:$0xf]
        %v1903 = vld [vmem:[%s5 + $0x54] sm:$0xf]
        %v1904 = vld [vmem:[%s5 + $0x58] sm:$0xf]
        %v1905 = vld [vmem:[%s5 + $0x5c] sm:$0xf]
        %v1906 = vld [vmem:[%s5 + $0x60] sm:$0xf]
        %v1907 = vld [vmem:[%s5 + $0x64] sm:$0xf]
        %v1908 = vld [vmem:[%s5 + $0x68] sm:$0xf]
        %v1909 = vld [vmem:[%s5 + $0x6c] sm:$0xf]
        %v1910 = vld [vmem:[%s5 + $0x70] sm:$0xf]
        %v1911 = vld [vmem:[%s5 + $0x74] sm:$0xf]
        %v1912 = vld [vmem:[%s5 + $0x78] sm:$0xf]
        %v1913 = vld [vmem:[%s5 + $0x7c] sm:$0xf]
        %v1914 = vpack.c.bf16 %v1822, %v1818
        %v1915 = vpack.c.bf16 %v1823, %v1819
        %v1916 = vpack.c.bf16 %v1824, %v1820
        %v1917 = vpack.c.bf16 %v1825, %v1821
        %v1918 = vpack.c.bf16 %v1830, %v1826
        %v1919 = vpack.c.bf16 %v1831, %v1827
        %v1920 = vpack.c.bf16 %v1832, %v1828
        %v1921 = vpack.c.bf16 %v1833, %v1829
        %v1922 = vpack.c.bf16 %v1838, %v1834
        %v1923 = vpack.c.bf16 %v1839, %v1835
        %v1924 = vpack.c.bf16 %v1840, %v1836
        %v1925 = vpack.c.bf16 %v1841, %v1837
        %v1926 = vpack.c.bf16 %v1846, %v1842
        %v1927 = vpack.c.bf16 %v1847, %v1843
        %v1928 = vpack.c.bf16 %v1848, %v1844
        %v1929 = vpack.c.bf16 %v1849, %v1845
        %v1930 = vpack.c.bf16 %v1854, %v1850
        %v1931 = vpack.c.bf16 %v1855, %v1851
        %v1932 = vpack.c.bf16 %v1856, %v1852
        %v1933 = vpack.c.bf16 %v1857, %v1853
        %v1934 = vpack.c.bf16 %v1862, %v1858
        %v1935 = vpack.c.bf16 %v1863, %v1859
        %v1936 = vpack.c.bf16 %v1864, %v1860
        %v1937 = vpack.c.bf16 %v1865, %v1861
        %v1938 = vpack.c.bf16 %v1870, %v1866
        %v1939 = vpack.c.bf16 %v1871, %v1867
        %v1940 = vpack.c.bf16 %v1872, %v1868
        %v1941 = vpack.c.bf16 %v1873, %v1869
        %v1942 = vpack.c.bf16 %v1878, %v1874
        %v1943 = vpack.c.bf16 %v1879, %v1875
        %v1944 = vpack.c.bf16 %v1880, %v1876
        %v1945 = vpack.c.bf16 %v1881, %v1877
        %v1946 = vld [vmem:[%s6] sm:$0xff]
        %v1947 = vld [vmem:[%s6 + $0x8] sm:$0xff]
        %v1948 = vld [vmem:[%s6 + $0x10] sm:$0xff]
        %v1949 = vld [vmem:[%s6 + $0x18] sm:$0xff]
        %v1950 = vld [vmem:[%s6 + $0x20] sm:$0xff]
        %v1951 = vld [vmem:[%s6 + $0x28] sm:$0xff]
        %v1952 = vld [vmem:[%s6 + $0x30] sm:$0xff]
        %v1953 = vld [vmem:[%s6 + $0x38] sm:$0xff]
        %v1954 = vld [vmem:[%s6 + $0x40] sm:$0xff]
        %v1955 = vld [vmem:[%s6 + $0x48] sm:$0xff]
        %v1956 = vld [vmem:[%s6 + $0x50] sm:$0xff]
        %v1957 = vld [vmem:[%s6 + $0x58] sm:$0xff]
        %v1958 = vld [vmem:[%s6 + $0x60] sm:$0xff]
        %v1959 = vld [vmem:[%s6 + $0x68] sm:$0xff]
        %v1960 = vld [vmem:[%s6 + $0x70] sm:$0xff]
        %v1961 = vld [vmem:[%s6 + $0x78] sm:$0xff]
        %v1962 = vld [vmem:[%s6 + $0x80] sm:$0xff]
        %v1963 = vld [vmem:[%s6 + $0x88] sm:$0xff]
        %v1964 = vld [vmem:[%s6 + $0x90] sm:$0xff]
        %v1965 = vld [vmem:[%s6 + $0x98] sm:$0xff]
        %v1966 = vld [vmem:[%s6 + $0xa0] sm:$0xff]
        %v1967 = vld [vmem:[%s6 + $0xa8] sm:$0xff]
        %v1968 = vld [vmem:[%s6 + $0xb0] sm:$0xff]
        %v1969 = vld [vmem:[%s6 + $0xb8] sm:$0xff]
        %v1970 = vld [vmem:[%s6 + $0xc0] sm:$0xff]
        %v1971 = vld [vmem:[%s6 + $0xc8] sm:$0xff]
        %v1972 = vld [vmem:[%s6 + $0xd0] sm:$0xff]
        %v1973 = vld [vmem:[%s6 + $0xd8] sm:$0xff]
        %v1974 = vld [vmem:[%s6 + $0xe0] sm:$0xff]
        %v1975 = vld [vmem:[%s6 + $0xe8] sm:$0xff]
        %v1976 = vld [vmem:[%s6 + $0xf0] sm:$0xff]
        %v1977 = vld [vmem:[%s6 + $0xf8] sm:$0xff]
        %1979 = vset.pattern.permute.xlu0 0
        %1980 = vperm.xlu0 %1979, %v1946
        %v1981 = vpop.permute.xlu0 %1980
        %1984 = vset.pattern.permute.xlu0 0
        %1985 = vperm.xlu0 %1984, %v1947
        %v1986 = vpop.permute.xlu0 %1985
        %1989 = vset.pattern.permute.xlu0 0
        %1990 = vperm.xlu0 %1989, %v1948
        %v1991 = vpop.permute.xlu0 %1990
        %1994 = vset.pattern.permute.xlu0 0
        %1995 = vperm.xlu0 %1994, %v1949
        %v1996 = vpop.permute.xlu0 %1995
        %1999 = vset.pattern.permute.xlu0 0
        %2000 = vperm.xlu0 %1999, %v1950
        %v2001 = vpop.permute.xlu0 %2000
        %2004 = vset.pattern.permute.xlu0 0
        %2005 = vperm.xlu0 %2004, %v1951
        %v2006 = vpop.permute.xlu0 %2005
        %2009 = vset.pattern.permute.xlu0 0
        %2010 = vperm.xlu0 %2009, %v1952
        %v2011 = vpop.permute.xlu0 %2010
        %2014 = vset.pattern.permute.xlu0 0
        %2015 = vperm.xlu0 %2014, %v1953
        %v2016 = vpop.permute.xlu0 %2015
        %2019 = vset.pattern.permute.xlu0 0
        %2020 = vperm.xlu0 %2019, %v1954
        %v2021 = vpop.permute.xlu0 %2020
        %2024 = vset.pattern.permute.xlu0 0
        %2025 = vperm.xlu0 %2024, %v1955
        %v2026 = vpop.permute.xlu0 %2025
        %2029 = vset.pattern.permute.xlu0 0
        %2030 = vperm.xlu0 %2029, %v1956
        %v2031 = vpop.permute.xlu0 %2030
        %2034 = vset.pattern.permute.xlu0 0
        %2035 = vperm.xlu0 %2034, %v1957
        %v2036 = vpop.permute.xlu0 %2035
        %2039 = vset.pattern.permute.xlu0 0
        %2040 = vperm.xlu0 %2039, %v1958
        %v2041 = vpop.permute.xlu0 %2040
        %2044 = vset.pattern.permute.xlu0 0
        %2045 = vperm.xlu0 %2044, %v1959
        %v2046 = vpop.permute.xlu0 %2045
        %2049 = vset.pattern.permute.xlu0 0
        %2050 = vperm.xlu0 %2049, %v1960
        %v2051 = vpop.permute.xlu0 %2050
        %2054 = vset.pattern.permute.xlu0 0
        %2055 = vperm.xlu0 %2054, %v1961
        %v2056 = vpop.permute.xlu0 %2055
        %2059 = vset.pattern.permute.xlu0 0
        %2060 = vperm.xlu0 %2059, %v1962
        %v2061 = vpop.permute.xlu0 %2060
        %2064 = vset.pattern.permute.xlu0 0
        %2065 = vperm.xlu0 %2064, %v1963
        %v2066 = vpop.permute.xlu0 %2065
        %2069 = vset.pattern.permute.xlu0 0
        %2070 = vperm.xlu0 %2069, %v1964
        %v2071 = vpop.permute.xlu0 %2070
        %2074 = vset.pattern.permute.xlu0 0
        %2075 = vperm.xlu0 %2074, %v1965
        %v2076 = vpop.permute.xlu0 %2075
        %2079 = vset.pattern.permute.xlu0 0
        %2080 = vperm.xlu0 %2079, %v1966
        %v2081 = vpop.permute.xlu0 %2080
        %2084 = vset.pattern.permute.xlu0 0
        %2085 = vperm.xlu0 %2084, %v1967
        %v2086 = vpop.permute.xlu0 %2085
        %2089 = vset.pattern.permute.xlu0 0
        %2090 = vperm.xlu0 %2089, %v1968
        %v2091 = vpop.permute.xlu0 %2090
        %2094 = vset.pattern.permute.xlu0 0
        %2095 = vperm.xlu0 %2094, %v1969
        %v2096 = vpop.permute.xlu0 %2095
        %2099 = vset.pattern.permute.xlu0 0
        %2100 = vperm.xlu0 %2099, %v1970
        %v2101 = vpop.permute.xlu0 %2100
        %2104 = vset.pattern.permute.xlu0 0
        %2105 = vperm.xlu0 %2104, %v1971
        %v2106 = vpop.permute.xlu0 %2105
        %2109 = vset.pattern.permute.xlu0 0
        %2110 = vperm.xlu0 %2109, %v1972
        %v2111 = vpop.permute.xlu0 %2110
        %2114 = vset.pattern.permute.xlu0 0
        %2115 = vperm.xlu0 %2114, %v1973
        %v2116 = vpop.permute.xlu0 %2115
        %2119 = vset.pattern.permute.xlu0 0
        %2120 = vperm.xlu0 %2119, %v1974
        %v2121 = vpop.permute.xlu0 %2120
        %2124 = vset.pattern.permute.xlu0 0
        %2125 = vperm.xlu0 %2124, %v1975
        %v2126 = vpop.permute.xlu0 %2125
        %2129 = vset.pattern.permute.xlu0 0
        %2130 = vperm.xlu0 %2129, %v1976
        %v2131 = vpop.permute.xlu0 %2130
        %2134 = vset.pattern.permute.xlu0 0
        %2135 = vperm.xlu0 %2134, %v1977
        %v2136 = vpop.permute.xlu0 %2135
        %v2170 = vunpack.c.l.b16 %v1882
        %v2171 = vunpack.c.l.b16 %v1883
        %v2172 = vunpack.c.l.b16 %v1884
        %v2173 = vunpack.c.l.b16 %v1885
        %v2174 = vunpack.c.l.b16 %v1886
        %v2175 = vunpack.c.l.b16 %v1887
        %v2176 = vunpack.c.l.b16 %v1888
        %v2177 = vunpack.c.l.b16 %v1889
        %v2178 = vunpack.c.l.b16 %v1890
        %v2179 = vunpack.c.l.b16 %v1891
        %v2180 = vunpack.c.l.b16 %v1892
        %v2181 = vunpack.c.l.b16 %v1893
        %v2182 = vunpack.c.l.b16 %v1894
        %v2183 = vunpack.c.l.b16 %v1895
        %v2184 = vunpack.c.l.b16 %v1896
        %v2185 = vunpack.c.l.b16 %v1897
        %v2186 = vunpack.c.l.b16 %v1898
        %v2187 = vunpack.c.l.b16 %v1899
        %v2188 = vunpack.c.l.b16 %v1900
        %v2189 = vunpack.c.l.b16 %v1901
        %v2190 = vunpack.c.l.b16 %v1902
        %v2191 = vunpack.c.l.b16 %v1903
        %v2192 = vunpack.c.l.b16 %v1904
        %v2193 = vunpack.c.l.b16 %v1905
        %v2194 = vunpack.c.l.b16 %v1906
        %v2195 = vunpack.c.l.b16 %v1907
        %v2196 = vunpack.c.l.b16 %v1908
        %v2197 = vunpack.c.l.b16 %v1909
        %v2198 = vunpack.c.l.b16 %v1910
        %v2199 = vunpack.c.l.b16 %v1911
        %v2200 = vunpack.c.l.b16 %v1912
        %v2201 = vunpack.c.l.b16 %v1913
        %v2202 = vpack.c.b16 %v2171, %v2170
        %v2203 = vpack.c.b16 %v2173, %v2172
        %v2204 = vpack.c.b16 %v2175, %v2174
        %v2205 = vpack.c.b16 %v2177, %v2176
        %v2206 = vpack.c.b16 %v2179, %v2178
        %v2207 = vpack.c.b16 %v2181, %v2180
        %v2208 = vpack.c.b16 %v2183, %v2182
        %v2209 = vpack.c.b16 %v2185, %v2184
        %v2210 = vpack.c.b16 %v2187, %v2186
        %v2211 = vpack.c.b16 %v2189, %v2188
        %v2212 = vpack.c.b16 %v2191, %v2190
        %v2213 = vpack.c.b16 %v2193, %v2192
        %v2214 = vpack.c.b16 %v2195, %v2194
        %v2215 = vpack.c.b16 %v2197, %v2196
        %v2216 = vpack.c.b16 %v2199, %v2198
        %v2217 = vpack.c.b16 %v2201, %v2200
        %2234 = vmatpush.bf16.msra.mxu0 %v1942
        %2235 = vmatpush.bf16.msra.mxu0 %v1938
        %2236 = vmatpush.bf16.msra.mxu0 %v1934
        %2237 = vmatpush.bf16.msra.mxu0 %v1930
        %2238 = vmatpush.bf16.msra.mxu0 %v1926
        %2239 = vmatpush.bf16.msra.mxu0 %v1922
        %2240 = vmatpush.bf16.msra.mxu0 %v1918
        %2241 = vmatpush.bf16.msra.mxu0 %v1914
        %2242 = vmatmul.bf16.gmra.mxu0 %v2202
        %v2243 = vpop.f32.mrf.mxu0
        %v2244 = vadd.f32 %v1981, %v2243
        %v2245 = vpop.f32.mrf.mxu0
        %v2246 = vadd.f32 %v1986, %v2245
        %2247 = vmatmul.bf16.gmra.mxu0 %v2203
        %v2248 = vpop.f32.mrf.mxu0
        %v2249 = vadd.f32 %v1991, %v2248
        %v2250 = vpop.f32.mrf.mxu0
        %v2251 = vadd.f32 %v1996, %v2250
        %2252 = vmatmul.bf16.gmra.mxu0 %v2204
        %v2253 = vpop.f32.mrf.mxu0
        %v2254 = vadd.f32 %v2001, %v2253
        %v2255 = vpop.f32.mrf.mxu0
        %v2256 = vadd.f32 %v2006, %v2255
        %2257 = vmatmul.bf16.gmra.mxu0 %v2205
        %v2258 = vpop.f32.mrf.mxu0
        %v2259 = vadd.f32 %v2011, %v2258
        %v2260 = vpop.f32.mrf.mxu0
        %v2261 = vadd.f32 %v2016, %v2260
        %2262 = vmatmul.bf16.gmra.mxu0 %v2206
        %v2263 = vpop.f32.mrf.mxu0
        %v2264 = vadd.f32 %v2021, %v2263
        %v2265 = vpop.f32.mrf.mxu0
        %v2266 = vadd.f32 %v2026, %v2265
        %2267 = vmatmul.bf16.gmra.mxu0 %v2207
        %v2268 = vpop.f32.mrf.mxu0
        %v2269 = vadd.f32 %v2031, %v2268
        %v2270 = vpop.f32.mrf.mxu0
        %v2271 = vadd.f32 %v2036, %v2270
        %2272 = vmatmul.bf16.gmra.mxu0 %v2208
        %v2273 = vpop.f32.mrf.mxu0
        %v2274 = vadd.f32 %v2041, %v2273
        %v2275 = vpop.f32.mrf.mxu0
        %v2276 = vadd.f32 %v2046, %v2275
        %2277 = vmatmul.bf16.gmra.mxu0 %v2209
        %v2278 = vpop.f32.mrf.mxu0
        %v2279 = vadd.f32 %v2051, %v2278
        %v2280 = vpop.f32.mrf.mxu0
        %v2281 = vadd.f32 %v2056, %v2280
        %2282 = vmatmul.bf16.gmra.mxu0 %v2210
        %v2283 = vpop.f32.mrf.mxu0
        %v2284 = vadd.f32 %v2061, %v2283
        %v2285 = vpop.f32.mrf.mxu0
        %v2286 = vadd.f32 %v2066, %v2285
        %2287 = vmatmul.bf16.gmra.mxu0 %v2211
        %v2288 = vpop.f32.mrf.mxu0
        %v2289 = vadd.f32 %v2071, %v2288
        %v2290 = vpop.f32.mrf.mxu0
        %v2291 = vadd.f32 %v2076, %v2290
        %2292 = vmatmul.bf16.gmra.mxu0 %v2212
        %v2293 = vpop.f32.mrf.mxu0
        %v2294 = vadd.f32 %v2081, %v2293
        %v2295 = vpop.f32.mrf.mxu0
        %v2296 = vadd.f32 %v2086, %v2295
        %2297 = vmatmul.bf16.gmra.mxu0 %v2213
        %v2298 = vpop.f32.mrf.mxu0
        %v2299 = vadd.f32 %v2091, %v2298
        %v2300 = vpop.f32.mrf.mxu0
        %v2301 = vadd.f32 %v2096, %v2300
        %2302 = vmatmul.bf16.gmra.mxu0 %v2214
        %v2303 = vpop.f32.mrf.mxu0
        %v2304 = vadd.f32 %v2101, %v2303
        %v2305 = vpop.f32.mrf.mxu0
        %v2306 = vadd.f32 %v2106, %v2305
        %2307 = vmatmul.bf16.gmra.mxu0 %v2215
        %v2308 = vpop.f32.mrf.mxu0
        %v2309 = vadd.f32 %v2111, %v2308
        %v2310 = vpop.f32.mrf.mxu0
        %v2311 = vadd.f32 %v2116, %v2310
        %2312 = vmatmul.bf16.gmra.mxu0 %v2216
        %v2313 = vpop.f32.mrf.mxu0
        %v2314 = vadd.f32 %v2121, %v2313
        %v2315 = vpop.f32.mrf.mxu0
        %v2316 = vadd.f32 %v2126, %v2315
        %2317 = vmatmul.bf16.gmra.mxu0 %v2217
        %v2318 = vpop.f32.mrf.mxu0
        %v2319 = vadd.f32 %v2131, %v2318
        %v2320 = vpop.f32.mrf.mxu0
        %v2321 = vadd.f32 %v2136, %v2320
        %2322 = vdwg.mxu0
        %2323 = vmatpush.bf16.msra.mxu0 %v1943
        %2324 = vmatpush.bf16.msra.mxu0 %v1939
        %2325 = vmatpush.bf16.msra.mxu0 %v1935
        %2326 = vmatpush.bf16.msra.mxu0 %v1931
        %2327 = vmatpush.bf16.msra.mxu0 %v1927
        %2328 = vmatpush.bf16.msra.mxu0 %v1923
        %2329 = vmatpush.bf16.msra.mxu0 %v1919
        %2330 = vmatpush.bf16.msra.mxu0 %v1915
        %2331 = vmatmul.bf16.gmra.mxu0 %v2202
        %v2332 = vpop.f32.mrf.mxu0
        %v2333 = vadd.f32 %v1981, %v2332
        %v2334 = vpop.f32.mrf.mxu0
        %v2335 = vadd.f32 %v1986, %v2334
        %2336 = vmatmul.bf16.gmra.mxu0 %v2203
        %v2337 = vpop.f32.mrf.mxu0
        %v2338 = vadd.f32 %v1991, %v2337
        %v2339 = vpop.f32.mrf.mxu0
        %v2340 = vadd.f32 %v1996, %v2339
        %2341 = vmatmul.bf16.gmra.mxu0 %v2204
        %v2342 = vpop.f32.mrf.mxu0
        %v2343 = vadd.f32 %v2001, %v2342
        %v2344 = vpop.f32.mrf.mxu0
        %v2345 = vadd.f32 %v2006, %v2344
        %2346 = vmatmul.bf16.gmra.mxu0 %v2205
        %v2347 = vpop.f32.mrf.mxu0
        %v2348 = vadd.f32 %v2011, %v2347
        %v2349 = vpop.f32.mrf.mxu0
        %v2350 = vadd.f32 %v2016, %v2349
        %2351 = vmatmul.bf16.gmra.mxu0 %v2206
        %v2352 = vpop.f32.mrf.mxu0
        %v2353 = vadd.f32 %v2021, %v2352
        %v2354 = vpop.f32.mrf.mxu0
        %v2355 = vadd.f32 %v2026, %v2354
        %2356 = vmatmul.bf16.gmra.mxu0 %v2207
        %v2357 = vpop.f32.mrf.mxu0
        %v2358 = vadd.f32 %v2031, %v2357
        %v2359 = vpop.f32.mrf.mxu0
        %v2360 = vadd.f32 %v2036, %v2359
        %2361 = vmatmul.bf16.gmra.mxu0 %v2208
        %v2362 = vpop.f32.mrf.mxu0
        %v2363 = vadd.f32 %v2041, %v2362
        %v2364 = vpop.f32.mrf.mxu0
        %v2365 = vadd.f32 %v2046, %v2364
        %2366 = vmatmul.bf16.gmra.mxu0 %v2209
        %v2367 = vpop.f32.mrf.mxu0
        %v2368 = vadd.f32 %v2051, %v2367
        %v2369 = vpop.f32.mrf.mxu0
        %v2370 = vadd.f32 %v2056, %v2369
        %2371 = vmatmul.bf16.gmra.mxu0 %v2210
        %v2372 = vpop.f32.mrf.mxu0
        %v2373 = vadd.f32 %v2061, %v2372
        %v2374 = vpop.f32.mrf.mxu0
        %v2375 = vadd.f32 %v2066, %v2374
        %2376 = vmatmul.bf16.gmra.mxu0 %v2211
        %v2377 = vpop.f32.mrf.mxu0
        %v2378 = vadd.f32 %v2071, %v2377
        %v2379 = vpop.f32.mrf.mxu0
        %v2380 = vadd.f32 %v2076, %v2379
        %2381 = vmatmul.bf16.gmra.mxu0 %v2212
        %v2382 = vpop.f32.mrf.mxu0
        %v2383 = vadd.f32 %v2081, %v2382
        %v2384 = vpop.f32.mrf.mxu0
        %v2385 = vadd.f32 %v2086, %v2384
        %2386 = vmatmul.bf16.gmra.mxu0 %v2213
        %v2387 = vpop.f32.mrf.mxu0
        %v2388 = vadd.f32 %v2091, %v2387
        %v2389 = vpop.f32.mrf.mxu0
        %v2390 = vadd.f32 %v2096, %v2389
        %2391 = vmatmul.bf16.gmra.mxu0 %v2214
        %v2392 = vpop.f32.mrf.mxu0
        %v2393 = vadd.f32 %v2101, %v2392
        %v2394 = vpop.f32.mrf.mxu0
        %v2395 = vadd.f32 %v2106, %v2394
        %2396 = vmatmul.bf16.gmra.mxu0 %v2215
        %v2397 = vpop.f32.mrf.mxu0
        %v2398 = vadd.f32 %v2111, %v2397
        %v2399 = vpop.f32.mrf.mxu0
        %v2400 = vadd.f32 %v2116, %v2399
        %2401 = vmatmul.bf16.gmra.mxu0 %v2216
        %v2402 = vpop.f32.mrf.mxu0
        %v2403 = vadd.f32 %v2121, %v2402
        %v2404 = vpop.f32.mrf.mxu0
        %v2405 = vadd.f32 %v2126, %v2404
        %2406 = vmatmul.bf16.gmra.mxu0 %v2217
        %v2407 = vpop.f32.mrf.mxu0
        %v2408 = vadd.f32 %v2131, %v2407
        %v2409 = vpop.f32.mrf.mxu0
        %v2410 = vadd.f32 %v2136, %v2409
        %2411 = vdwg.mxu0
        %2412 = vmatpush.bf16.msra.mxu0 %v1944
        %2413 = vmatpush.bf16.msra.mxu0 %v1940
        %2414 = vmatpush.bf16.msra.mxu0 %v1936
        %2415 = vmatpush.bf16.msra.mxu0 %v1932
        %2416 = vmatpush.bf16.msra.mxu0 %v1928
        %2417 = vmatpush.bf16.msra.mxu0 %v1924
        %2418 = vmatpush.bf16.msra.mxu0 %v1920
        %2419 = vmatpush.bf16.msra.mxu0 %v1916
        %2420 = vmatmul.bf16.gmra.mxu0 %v2202
        %v2421 = vpop.f32.mrf.mxu0
        %v2422 = vadd.f32 %v1981, %v2421
        %v2423 = vpop.f32.mrf.mxu0
        %v2424 = vadd.f32 %v1986, %v2423
        %2425 = vmatmul.bf16.gmra.mxu0 %v2203
        %v2426 = vpop.f32.mrf.mxu0
        %v2427 = vadd.f32 %v1991, %v2426
        %v2428 = vpop.f32.mrf.mxu0
        %v2429 = vadd.f32 %v1996, %v2428
        %2430 = vmatmul.bf16.gmra.mxu0 %v2204
        %v2431 = vpop.f32.mrf.mxu0
        %v2432 = vadd.f32 %v2001, %v2431
        %v2433 = vpop.f32.mrf.mxu0
        %v2434 = vadd.f32 %v2006, %v2433
        %2435 = vmatmul.bf16.gmra.mxu0 %v2205
        %v2436 = vpop.f32.mrf.mxu0
        %v2437 = vadd.f32 %v2011, %v2436
        %v2438 = vpop.f32.mrf.mxu0
        %v2439 = vadd.f32 %v2016, %v2438
        %2440 = vmatmul.bf16.gmra.mxu0 %v2206
        %v2441 = vpop.f32.mrf.mxu0
        %v2442 = vadd.f32 %v2021, %v2441
        %v2443 = vpop.f32.mrf.mxu0
        %v2444 = vadd.f32 %v2026, %v2443
        %2445 = vmatmul.bf16.gmra.mxu0 %v2207
        %v2446 = vpop.f32.mrf.mxu0
        %v2447 = vadd.f32 %v2031, %v2446
        %v2448 = vpop.f32.mrf.mxu0
        %v2449 = vadd.f32 %v2036, %v2448
        %2450 = vmatmul.bf16.gmra.mxu0 %v2208
        %v2451 = vpop.f32.mrf.mxu0
        %v2452 = vadd.f32 %v2041, %v2451
        %v2453 = vpop.f32.mrf.mxu0
        %v2454 = vadd.f32 %v2046, %v2453
        %2455 = vmatmul.bf16.gmra.mxu0 %v2209
        %v2456 = vpop.f32.mrf.mxu0
        %v2457 = vadd.f32 %v2051, %v2456
        %v2458 = vpop.f32.mrf.mxu0
        %v2459 = vadd.f32 %v2056, %v2458
        %2460 = vmatmul.bf16.gmra.mxu0 %v2210
        %v2461 = vpop.f32.mrf.mxu0
        %v2462 = vadd.f32 %v2061, %v2461
        %v2463 = vpop.f32.mrf.mxu0
        %v2464 = vadd.f32 %v2066, %v2463
        %2465 = vmatmul.bf16.gmra.mxu0 %v2211
        %v2466 = vpop.f32.mrf.mxu0
        %v2467 = vadd.f32 %v2071, %v2466
        %v2468 = vpop.f32.mrf.mxu0
        %v2469 = vadd.f32 %v2076, %v2468
        %2470 = vmatmul.bf16.gmra.mxu0 %v2212
        %v2471 = vpop.f32.mrf.mxu0
        %v2472 = vadd.f32 %v2081, %v2471
        %v2473 = vpop.f32.mrf.mxu0
        %v2474 = vadd.f32 %v2086, %v2473
        %2475 = vmatmul.bf16.gmra.mxu0 %v2213
        %v2476 = vpop.f32.mrf.mxu0
        %v2477 = vadd.f32 %v2091, %v2476
        %v2478 = vpop.f32.mrf.mxu0
        %v2479 = vadd.f32 %v2096, %v2478
        %2480 = vmatmul.bf16.gmra.mxu0 %v2214
        %v2481 = vpop.f32.mrf.mxu0
        %v2482 = vadd.f32 %v2101, %v2481
        %v2483 = vpop.f32.mrf.mxu0
        %v2484 = vadd.f32 %v2106, %v2483
        %2485 = vmatmul.bf16.gmra.mxu0 %v2215
        %v2486 = vpop.f32.mrf.mxu0
        %v2487 = vadd.f32 %v2111, %v2486
        %v2488 = vpop.f32.mrf.mxu0
        %v2489 = vadd.f32 %v2116, %v2488
        %2490 = vmatmul.bf16.gmra.mxu0 %v2216
        %v2491 = vpop.f32.mrf.mxu0
        %v2492 = vadd.f32 %v2121, %v2491
        %v2493 = vpop.f32.mrf.mxu0
        %v2494 = vadd.f32 %v2126, %v2493
        %2495 = vmatmul.bf16.gmra.mxu0 %v2217
        %v2496 = vpop.f32.mrf.mxu0
        %v2497 = vadd.f32 %v2131, %v2496
        %v2498 = vpop.f32.mrf.mxu0
        %v2499 = vadd.f32 %v2136, %v2498
        %2500 = vdwg.mxu0
        %2501 = vmatpush.bf16.msra.mxu0 %v1945
        %2502 = vmatpush.bf16.msra.mxu0 %v1941
        %2503 = vmatpush.bf16.msra.mxu0 %v1937
        %2504 = vmatpush.bf16.msra.mxu0 %v1933
        %2505 = vmatpush.bf16.msra.mxu0 %v1929
        %2506 = vmatpush.bf16.msra.mxu0 %v1925
        %2507 = vmatpush.bf16.msra.mxu0 %v1921
        %2508 = vmatpush.bf16.msra.mxu0 %v1917
        %2509 = vmatmul.bf16.gmra.mxu0 %v2202
        %v2510 = vpop.f32.mrf.mxu0
        %v2511 = vadd.f32 %v1981, %v2510
        %v2512 = vpop.f32.mrf.mxu0
        %v2513 = vadd.f32 %v1986, %v2512
        %2514 = vmatmul.bf16.gmra.mxu0 %v2203
        %v2515 = vpop.f32.mrf.mxu0
        %v2516 = vadd.f32 %v1991, %v2515
        %v2517 = vpop.f32.mrf.mxu0
        %v2518 = vadd.f32 %v1996, %v2517
        %2519 = vmatmul.bf16.gmra.mxu0 %v2204
        %v2520 = vpop.f32.mrf.mxu0
        %v2521 = vadd.f32 %v2001, %v2520
        %v2522 = vpop.f32.mrf.mxu0
        %v2523 = vadd.f32 %v2006, %v2522
        %2524 = vmatmul.bf16.gmra.mxu0 %v2205
        %v2525 = vpop.f32.mrf.mxu0
        %v2526 = vadd.f32 %v2011, %v2525
        %v2527 = vpop.f32.mrf.mxu0
        %v2528 = vadd.f32 %v2016, %v2527
        %2529 = vmatmul.bf16.gmra.mxu0 %v2206
        %v2530 = vpop.f32.mrf.mxu0
        %v2531 = vadd.f32 %v2021, %v2530
        %v2532 = vpop.f32.mrf.mxu0
        %v2533 = vadd.f32 %v2026, %v2532
        %2534 = vmatmul.bf16.gmra.mxu0 %v2207
        %v2535 = vpop.f32.mrf.mxu0
        %v2536 = vadd.f32 %v2031, %v2535
        %v2537 = vpop.f32.mrf.mxu0
        %v2538 = vadd.f32 %v2036, %v2537
        %2539 = vmatmul.bf16.gmra.mxu0 %v2208
        %v2540 = vpop.f32.mrf.mxu0
        %v2541 = vadd.f32 %v2041, %v2540
        %v2542 = vpop.f32.mrf.mxu0
        %v2543 = vadd.f32 %v2046, %v2542
        %2544 = vmatmul.bf16.gmra.mxu0 %v2209
        %v2545 = vpop.f32.mrf.mxu0
        %v2546 = vadd.f32 %v2051, %v2545
        %v2547 = vpop.f32.mrf.mxu0
        %v2548 = vadd.f32 %v2056, %v2547
        %2549 = vmatmul.bf16.gmra.mxu0 %v2210
        %v2550 = vpop.f32.mrf.mxu0
        %v2551 = vadd.f32 %v2061, %v2550
        %v2552 = vpop.f32.mrf.mxu0
        %v2553 = vadd.f32 %v2066, %v2552
        %2554 = vmatmul.bf16.gmra.mxu0 %v2211
        %v2555 = vpop.f32.mrf.mxu0
        %v2556 = vadd.f32 %v2071, %v2555
        %v2557 = vpop.f32.mrf.mxu0
        %v2558 = vadd.f32 %v2076, %v2557
        %2559 = vmatmul.bf16.gmra.mxu0 %v2212
        %v2560 = vpop.f32.mrf.mxu0
        %v2561 = vadd.f32 %v2081, %v2560
        %v2562 = vpop.f32.mrf.mxu0
        %v2563 = vadd.f32 %v2086, %v2562
        %2564 = vmatmul.bf16.gmra.mxu0 %v2213
        %v2565 = vpop.f32.mrf.mxu0
        %v2566 = vadd.f32 %v2091, %v2565
        %v2567 = vpop.f32.mrf.mxu0
        %v2568 = vadd.f32 %v2096, %v2567
        %2569 = vmatmul.bf16.gmra.mxu0 %v2214
        %v2570 = vpop.f32.mrf.mxu0
        %v2571 = vadd.f32 %v2101, %v2570
        %v2572 = vpop.f32.mrf.mxu0
        %v2573 = vadd.f32 %v2106, %v2572
        %2574 = vmatmul.bf16.gmra.mxu0 %v2215
        %v2575 = vpop.f32.mrf.mxu0
        %v2576 = vadd.f32 %v2111, %v2575
        %v2577 = vpop.f32.mrf.mxu0
        %v2578 = vadd.f32 %v2116, %v2577
        %2579 = vmatmul.bf16.gmra.mxu0 %v2216
        %v2580 = vpop.f32.mrf.mxu0
        %v2581 = vadd.f32 %v2121, %v2580
        %v2582 = vpop.f32.mrf.mxu0
        %v2583 = vadd.f32 %v2126, %v2582
        %2584 = vmatmul.bf16.gmra.mxu0 %v2217
        %v2585 = vpop.f32.mrf.mxu0
        %v2586 = vadd.f32 %v2131, %v2585
        %v2587 = vpop.f32.mrf.mxu0
        %v2588 = vadd.f32 %v2136, %v2587
        %2589 = vdwg.mxu0
        %v2590 = vmax.f32 %v2244, 0.0
        %v2591 = vmax.f32 %v2333, 0.0
        %v2592 = vmax.f32 %v2422, 0.0
        %v2593 = vmax.f32 %v2511, 0.0
        %v2594 = vmax.f32 %v2246, 0.0
        %v2595 = vmax.f32 %v2335, 0.0
        %v2596 = vmax.f32 %v2424, 0.0
        %v2597 = vmax.f32 %v2513, 0.0
        %v2598 = vmax.f32 %v2249, 0.0
        %v2599 = vmax.f32 %v2338, 0.0
        %v2600 = vmax.f32 %v2427, 0.0
        %v2601 = vmax.f32 %v2516, 0.0
        %v2602 = vmax.f32 %v2251, 0.0
        %v2603 = vmax.f32 %v2340, 0.0
        %v2604 = vmax.f32 %v2429, 0.0
        %v2605 = vmax.f32 %v2518, 0.0
        %v2606 = vmax.f32 %v2254, 0.0
        %v2607 = vmax.f32 %v2343, 0.0
        %v2608 = vmax.f32 %v2432, 0.0
        %v2609 = vmax.f32 %v2521, 0.0
        %v2610 = vmax.f32 %v2256, 0.0
        %v2611 = vmax.f32 %v2345, 0.0
        %v2612 = vmax.f32 %v2434, 0.0
        %v2613 = vmax.f32 %v2523, 0.0
        %v2614 = vmax.f32 %v2259, 0.0
        %v2615 = vmax.f32 %v2348, 0.0
        %v2616 = vmax.f32 %v2437, 0.0
        %v2617 = vmax.f32 %v2526, 0.0
        %v2618 = vmax.f32 %v2261, 0.0
        %v2619 = vmax.f32 %v2350, 0.0
        %v2620 = vmax.f32 %v2439, 0.0
        %v2621 = vmax.f32 %v2528, 0.0
        %v2622 = vmax.f32 %v2264, 0.0
        %v2623 = vmax.f32 %v2353, 0.0
        %v2624 = vmax.f32 %v2442, 0.0
        %v2625 = vmax.f32 %v2531, 0.0
        %v2626 = vmax.f32 %v2266, 0.0
        %v2627 = vmax.f32 %v2355, 0.0
        %v2628 = vmax.f32 %v2444, 0.0
        %v2629 = vmax.f32 %v2533, 0.0
        %v2630 = vmax.f32 %v2269, 0.0
        %v2631 = vmax.f32 %v2358, 0.0
        %v2632 = vmax.f32 %v2447, 0.0
        %v2633 = vmax.f32 %v2536, 0.0
        %v2634 = vmax.f32 %v2271, 0.0
        %v2635 = vmax.f32 %v2360, 0.0
        %v2636 = vmax.f32 %v2449, 0.0
        %v2637 = vmax.f32 %v2538, 0.0
        %v2638 = vmax.f32 %v2274, 0.0
        %v2639 = vmax.f32 %v2363, 0.0
        %v2640 = vmax.f32 %v2452, 0.0
        %v2641 = vmax.f32 %v2541, 0.0
        %v2642 = vmax.f32 %v2276, 0.0
        %v2643 = vmax.f32 %v2365, 0.0
        %v2644 = vmax.f32 %v2454, 0.0
        %v2645 = vmax.f32 %v2543, 0.0
        %v2646 = vmax.f32 %v2279, 0.0
        %v2647 = vmax.f32 %v2368, 0.0
        %v2648 = vmax.f32 %v2457, 0.0
        %v2649 = vmax.f32 %v2546, 0.0
        %v2650 = vmax.f32 %v2281, 0.0
        %v2651 = vmax.f32 %v2370, 0.0
        %v2652 = vmax.f32 %v2459, 0.0
        %v2653 = vmax.f32 %v2548, 0.0
        %v2654 = vmax.f32 %v2284, 0.0
        %v2655 = vmax.f32 %v2373, 0.0
        %v2656 = vmax.f32 %v2462, 0.0
        %v2657 = vmax.f32 %v2551, 0.0
        %v2658 = vmax.f32 %v2286, 0.0
        %v2659 = vmax.f32 %v2375, 0.0
        %v2660 = vmax.f32 %v2464, 0.0
        %v2661 = vmax.f32 %v2553, 0.0
        %v2662 = vmax.f32 %v2289, 0.0
        %v2663 = vmax.f32 %v2378, 0.0
        %v2664 = vmax.f32 %v2467, 0.0
        %v2665 = vmax.f32 %v2556, 0.0
        %v2666 = vmax.f32 %v2291, 0.0
        %v2667 = vmax.f32 %v2380, 0.0
        %v2668 = vmax.f32 %v2469, 0.0
        %v2669 = vmax.f32 %v2558, 0.0
        %v2670 = vmax.f32 %v2294, 0.0
        %v2671 = vmax.f32 %v2383, 0.0
        %v2672 = vmax.f32 %v2472, 0.0
        %v2673 = vmax.f32 %v2561, 0.0
        %v2674 = vmax.f32 %v2296, 0.0
        %v2675 = vmax.f32 %v2385, 0.0
        %v2676 = vmax.f32 %v2474, 0.0
        %v2677 = vmax.f32 %v2563, 0.0
        %v2678 = vmax.f32 %v2299, 0.0
        %v2679 = vmax.f32 %v2388, 0.0
        %v2680 = vmax.f32 %v2477, 0.0
        %v2681 = vmax.f32 %v2566, 0.0
        %v2682 = vmax.f32 %v2301, 0.0
        %v2683 = vmax.f32 %v2390, 0.0
        %v2684 = vmax.f32 %v2479, 0.0
        %v2685 = vmax.f32 %v2568, 0.0
        %v2686 = vmax.f32 %v2304, 0.0
        %v2687 = vmax.f32 %v2393, 0.0
        %v2688 = vmax.f32 %v2482, 0.0
        %v2689 = vmax.f32 %v2571, 0.0
        %v2690 = vmax.f32 %v2306, 0.0
        %v2691 = vmax.f32 %v2395, 0.0
        %v2692 = vmax.f32 %v2484, 0.0
        %v2693 = vmax.f32 %v2573, 0.0
        %v2694 = vmax.f32 %v2309, 0.0
        %v2695 = vmax.f32 %v2398, 0.0
        %v2696 = vmax.f32 %v2487, 0.0
        %v2697 = vmax.f32 %v2576, 0.0
        %v2698 = vmax.f32 %v2311, 0.0
        %v2699 = vmax.f32 %v2400, 0.0
        %v2700 = vmax.f32 %v2489, 0.0
        %v2701 = vmax.f32 %v2578, 0.0
        %v2702 = vmax.f32 %v2314, 0.0
        %v2703 = vmax.f32 %v2403, 0.0
        %v2704 = vmax.f32 %v2492, 0.0
        %v2705 = vmax.f32 %v2581, 0.0
        %v2706 = vmax.f32 %v2316, 0.0
        %v2707 = vmax.f32 %v2405, 0.0
        %v2708 = vmax.f32 %v2494, 0.0
        %v2709 = vmax.f32 %v2583, 0.0
        %v2710 = vmax.f32 %v2319, 0.0
        %v2711 = vmax.f32 %v2408, 0.0
        %v2712 = vmax.f32 %v2497, 0.0
        %v2713 = vmax.f32 %v2586, 0.0
        %v2714 = vmax.f32 %v2321, 0.0
        %v2715 = vmax.f32 %v2410, 0.0
        %v2716 = vmax.f32 %v2499, 0.0
        %v2717 = vmax.f32 %v2588, 0.0
        %v2718 = vld [vmem:[%s7] sm:$0xff]
        %v2719 = vld [vmem:[%s7 + $0x8] sm:$0xff]
        %v2720 = vld [vmem:[%s7 + $0x10] sm:$0xff]
        %v2721 = vld [vmem:[%s7 + $0x18] sm:$0xff]
        %v2722 = vld [vmem:[%s7 + $0x20] sm:$0xff]
        %v2723 = vld [vmem:[%s7 + $0x28] sm:$0xff]
        %v2724 = vld [vmem:[%s7 + $0x30] sm:$0xff]
        %v2725 = vld [vmem:[%s7 + $0x38] sm:$0xff]
        %v2726 = vld [vmem:[%s7 + $0x40] sm:$0xff]
        %v2727 = vld [vmem:[%s7 + $0x48] sm:$0xff]
        %v2728 = vld [vmem:[%s7 + $0x50] sm:$0xff]
        %v2729 = vld [vmem:[%s7 + $0x58] sm:$0xff]
        %v2730 = vld [vmem:[%s7 + $0x60] sm:$0xff]
        %v2731 = vld [vmem:[%s7 + $0x68] sm:$0xff]
        %v2732 = vld [vmem:[%s7 + $0x70] sm:$0xff]
        %v2733 = vld [vmem:[%s7 + $0x78] sm:$0xff]
        %v2734 = vld [vmem:[%s7 + $0x80] sm:$0xff]
        %v2735 = vld [vmem:[%s7 + $0x88] sm:$0xff]
        %v2736 = vld [vmem:[%s7 + $0x90] sm:$0xff]
        %v2737 = vld [vmem:[%s7 + $0x98] sm:$0xff]
        %v2738 = vld [vmem:[%s7 + $0xa0] sm:$0xff]
        %v2739 = vld [vmem:[%s7 + $0xa8] sm:$0xff]
        %v2740 = vld [vmem:[%s7 + $0xb0] sm:$0xff]
        %v2741 = vld [vmem:[%s7 + $0xb8] sm:$0xff]
        %v2742 = vld [vmem:[%s7 + $0xc0] sm:$0xff]
        %v2743 = vld [vmem:[%s7 + $0xc8] sm:$0xff]
        %v2744 = vld [vmem:[%s7 + $0xd0] sm:$0xff]
        %v2745 = vld [vmem:[%s7 + $0xd8] sm:$0xff]
        %v2746 = vld [vmem:[%s7 + $0xe0] sm:$0xff]
        %v2747 = vld [vmem:[%s7 + $0xe8] sm:$0xff]
        %v2748 = vld [vmem:[%s7 + $0xf0] sm:$0xff]
        %v2749 = vld [vmem:[%s7 + $0xf8] sm:$0xff]
        %v2750 = vld [vmem:[%s7 + $0x100] sm:$0xff]
        %v2751 = vld [vmem:[%s7 + $0x108] sm:$0xff]
        %v2752 = vld [vmem:[%s7 + $0x110] sm:$0xff]
        %v2753 = vld [vmem:[%s7 + $0x118] sm:$0xff]
        %v2754 = vld [vmem:[%s7 + $0x120] sm:$0xff]
        %v2755 = vld [vmem:[%s7 + $0x128] sm:$0xff]
        %v2756 = vld [vmem:[%s7 + $0x130] sm:$0xff]
        %v2757 = vld [vmem:[%s7 + $0x138] sm:$0xff]
        %v2758 = vld [vmem:[%s7 + $0x140] sm:$0xff]
        %v2759 = vld [vmem:[%s7 + $0x148] sm:$0xff]
        %v2760 = vld [vmem:[%s7 + $0x150] sm:$0xff]
        %v2761 = vld [vmem:[%s7 + $0x158] sm:$0xff]
        %v2762 = vld [vmem:[%s7 + $0x160] sm:$0xff]
        %v2763 = vld [vmem:[%s7 + $0x168] sm:$0xff]
        %v2764 = vld [vmem:[%s7 + $0x170] sm:$0xff]
        %v2765 = vld [vmem:[%s7 + $0x178] sm:$0xff]
        %v2766 = vld [vmem:[%s7 + $0x180] sm:$0xff]
        %v2767 = vld [vmem:[%s7 + $0x188] sm:$0xff]
        %v2768 = vld [vmem:[%s7 + $0x190] sm:$0xff]
        %v2769 = vld [vmem:[%s7 + $0x198] sm:$0xff]
        %v2770 = vld [vmem:[%s7 + $0x1a0] sm:$0xff]
        %v2771 = vld [vmem:[%s7 + $0x1a8] sm:$0xff]
        %v2772 = vld [vmem:[%s7 + $0x1b0] sm:$0xff]
        %v2773 = vld [vmem:[%s7 + $0x1b8] sm:$0xff]
        %v2774 = vld [vmem:[%s7 + $0x1c0] sm:$0xff]
        %v2775 = vld [vmem:[%s7 + $0x1c8] sm:$0xff]
        %v2776 = vld [vmem:[%s7 + $0x1d0] sm:$0xff]
        %v2777 = vld [vmem:[%s7 + $0x1d8] sm:$0xff]
        %v2778 = vld [vmem:[%s7 + $0x1e0] sm:$0xff]
        %v2779 = vld [vmem:[%s7 + $0x1e8] sm:$0xff]
        %v2780 = vld [vmem:[%s7 + $0x1f0] sm:$0xff]
        %v2781 = vld [vmem:[%s7 + $0x1f8] sm:$0xff]
        %v2782 = vpack.c.bf16 %v2594, %v2590
        %v2783 = vpack.c.bf16 %v2595, %v2591
        %v2784 = vpack.c.bf16 %v2596, %v2592
        %v2785 = vpack.c.bf16 %v2597, %v2593
        %v2786 = vpack.c.bf16 %v2602, %v2598
        %v2787 = vpack.c.bf16 %v2603, %v2599
        %v2788 = vpack.c.bf16 %v2604, %v2600
        %v2789 = vpack.c.bf16 %v2605, %v2601
        %v2790 = vpack.c.bf16 %v2610, %v2606
        %v2791 = vpack.c.bf16 %v2611, %v2607
        %v2792 = vpack.c.bf16 %v2612, %v2608
        %v2793 = vpack.c.bf16 %v2613, %v2609
        %v2794 = vpack.c.bf16 %v2618, %v2614
        %v2795 = vpack.c.bf16 %v2619, %v2615
        %v2796 = vpack.c.bf16 %v2620, %v2616
        %v2797 = vpack.c.bf16 %v2621, %v2617
        %v2798 = vpack.c.bf16 %v2626, %v2622
        %v2799 = vpack.c.bf16 %v2627, %v2623
        %v2800 = vpack.c.bf16 %v2628, %v2624
        %v2801 = vpack.c.bf16 %v2629, %v2625
        %v2802 = vpack.c.bf16 %v2634, %v2630
        %v2803 = vpack.c.bf16 %v2635, %v2631
        %v2804 = vpack.c.bf16 %v2636, %v2632
        %v2805 = vpack.c.bf16 %v2637, %v2633
        %v2806 = vpack.c.bf16 %v2642, %v2638
        %v2807 = vpack.c.bf16 %v2643, %v2639
        %v2808 = vpack.c.bf16 %v2644, %v2640
        %v2809 = vpack.c.bf16 %v2645, %v2641
        %v2810 = vpack.c.bf16 %v2650, %v2646
        %v2811 = vpack.c.bf16 %v2651, %v2647
        %v2812 = vpack.c.bf16 %v2652, %v2648
        %v2813 = vpack.c.bf16 %v2653, %v2649
        %v2814 = vpack.c.bf16 %v2658, %v2654
        %v2815 = vpack.c.bf16 %v2659, %v2655
        %v2816 = vpack.c.bf16 %v2660, %v2656
        %v2817 = vpack.c.bf16 %v2661, %v2657
        %v2818 = vpack.c.bf16 %v2666, %v2662
        %v2819 = vpack.c.bf16 %v2667, %v2663
        %v2820 = vpack.c.bf16 %v2668, %v2664
        %v2821 = vpack.c.bf16 %v2669, %v2665
        %v2822 = vpack.c.bf16 %v2674, %v2670
        %v2823 = vpack.c.bf16 %v2675, %v2671
        %v2824 = vpack.c.bf16 %v2676, %v2672
        %v2825 = vpack.c.bf16 %v2677, %v2673
        %v2826 = vpack.c.bf16 %v2682, %v2678
        %v2827 = vpack.c.bf16 %v2683, %v2679
        %v2828 = vpack.c.bf16 %v2684, %v2680
        %v2829 = vpack.c.bf16 %v2685, %v2681
        %v2830 = vpack.c.bf16 %v2690, %v2686
        %v2831 = vpack.c.bf16 %v2691, %v2687
        %v2832 = vpack.c.bf16 %v2692, %v2688
        %v2833 = vpack.c.bf16 %v2693, %v2689
        %v2834 = vpack.c.bf16 %v2698, %v2694
        %v2835 = vpack.c.bf16 %v2699, %v2695
        %v2836 = vpack.c.bf16 %v2700, %v2696
        %v2837 = vpack.c.bf16 %v2701, %v2697
        %v2838 = vpack.c.bf16 %v2706, %v2702
        %v2839 = vpack.c.bf16 %v2707, %v2703
        %v2840 = vpack.c.bf16 %v2708, %v2704
        %v2841 = vpack.c.bf16 %v2709, %v2705
        %v2842 = vpack.c.bf16 %v2714, %v2710
        %v2843 = vpack.c.bf16 %v2715, %v2711
        %v2844 = vpack.c.bf16 %v2716, %v2712
        %v2845 = vpack.c.bf16 %v2717, %v2713
        %v2846 = vld [vmem:[%s8] sm:$0xff]
        %v2847 = vld [vmem:[%s8 + $0x8] sm:$0xff]
        %v2848 = vld [vmem:[%s8 + $0x10] sm:$0xff]
        %v2849 = vld [vmem:[%s8 + $0x18] sm:$0xff]
        %v2850 = vld [vmem:[%s8 + $0x20] sm:$0xff]
        %v2851 = vld [vmem:[%s8 + $0x28] sm:$0xff]
        %v2852 = vld [vmem:[%s8 + $0x30] sm:$0xff]
        %v2853 = vld [vmem:[%s8 + $0x38] sm:$0xff]
        %v2854 = vld [vmem:[%s8 + $0x40] sm:$0xff]
        %v2855 = vld [vmem:[%s8 + $0x48] sm:$0xff]
        %v2856 = vld [vmem:[%s8 + $0x50] sm:$0xff]
        %v2857 = vld [vmem:[%s8 + $0x58] sm:$0xff]
        %v2858 = vld [vmem:[%s8 + $0x60] sm:$0xff]
        %v2859 = vld [vmem:[%s8 + $0x68] sm:$0xff]
        %v2860 = vld [vmem:[%s8 + $0x70] sm:$0xff]
        %v2861 = vld [vmem:[%s8 + $0x78] sm:$0xff]
        %v2862 = vld [vmem:[%s8 + $0x80] sm:$0xff]
        %v2863 = vld [vmem:[%s8 + $0x88] sm:$0xff]
        %v2864 = vld [vmem:[%s8 + $0x90] sm:$0xff]
        %v2865 = vld [vmem:[%s8 + $0x98] sm:$0xff]
        %v2866 = vld [vmem:[%s8 + $0xa0] sm:$0xff]
        %v2867 = vld [vmem:[%s8 + $0xa8] sm:$0xff]
        %v2868 = vld [vmem:[%s8 + $0xb0] sm:$0xff]
        %v2869 = vld [vmem:[%s8 + $0xb8] sm:$0xff]
        %v2870 = vld [vmem:[%s8 + $0xc0] sm:$0xff]
        %v2871 = vld [vmem:[%s8 + $0xc8] sm:$0xff]
        %v2872 = vld [vmem:[%s8 + $0xd0] sm:$0xff]
        %v2873 = vld [vmem:[%s8 + $0xd8] sm:$0xff]
        %v2874 = vld [vmem:[%s8 + $0xe0] sm:$0xff]
        %v2875 = vld [vmem:[%s8 + $0xe8] sm:$0xff]
        %v2876 = vld [vmem:[%s8 + $0xf0] sm:$0xff]
        %v2877 = vld [vmem:[%s8 + $0xf8] sm:$0xff]
        %v2878 = vld [vmem:[%s8 + $0x100] sm:$0xff]
        %v2879 = vld [vmem:[%s8 + $0x108] sm:$0xff]
        %v2880 = vld [vmem:[%s8 + $0x110] sm:$0xff]
        %v2881 = vld [vmem:[%s8 + $0x118] sm:$0xff]
        %v2882 = vld [vmem:[%s8 + $0x120] sm:$0xff]
        %v2883 = vld [vmem:[%s8 + $0x128] sm:$0xff]
        %v2884 = vld [vmem:[%s8 + $0x130] sm:$0xff]
        %v2885 = vld [vmem:[%s8 + $0x138] sm:$0xff]
        %v2886 = vld [vmem:[%s8 + $0x140] sm:$0xff]
        %v2887 = vld [vmem:[%s8 + $0x148] sm:$0xff]
        %v2888 = vld [vmem:[%s8 + $0x150] sm:$0xff]
        %v2889 = vld [vmem:[%s8 + $0x158] sm:$0xff]
        %v2890 = vld [vmem:[%s8 + $0x160] sm:$0xff]
        %v2891 = vld [vmem:[%s8 + $0x168] sm:$0xff]
        %v2892 = vld [vmem:[%s8 + $0x170] sm:$0xff]
        %v2893 = vld [vmem:[%s8 + $0x178] sm:$0xff]
        %v2894 = vld [vmem:[%s8 + $0x180] sm:$0xff]
        %v2895 = vld [vmem:[%s8 + $0x188] sm:$0xff]
        %v2896 = vld [vmem:[%s8 + $0x190] sm:$0xff]
        %v2897 = vld [vmem:[%s8 + $0x198] sm:$0xff]
        %v2898 = vld [vmem:[%s8 + $0x1a0] sm:$0xff]
        %v2899 = vld [vmem:[%s8 + $0x1a8] sm:$0xff]
        %v2900 = vld [vmem:[%s8 + $0x1b0] sm:$0xff]
        %v2901 = vld [vmem:[%s8 + $0x1b8] sm:$0xff]
        %v2902 = vld [vmem:[%s8 + $0x1c0] sm:$0xff]
        %v2903 = vld [vmem:[%s8 + $0x1c8] sm:$0xff]
        %v2904 = vld [vmem:[%s8 + $0x1d0] sm:$0xff]
        %v2905 = vld [vmem:[%s8 + $0x1d8] sm:$0xff]
        %v2906 = vld [vmem:[%s8 + $0x1e0] sm:$0xff]
        %v2907 = vld [vmem:[%s8 + $0x1e8] sm:$0xff]
        %v2908 = vld [vmem:[%s8 + $0x1f0] sm:$0xff]
        %v2909 = vld [vmem:[%s8 + $0x1f8] sm:$0xff]
        %2911 = vset.pattern.permute.xlu0 0
        %2912 = vperm.xlu0 %2911, %v2846
        %v2913 = vpop.permute.xlu0 %2912
        %2916 = vset.pattern.permute.xlu0 0
        %2917 = vperm.xlu0 %2916, %v2847
        %v2918 = vpop.permute.xlu0 %2917
        %2921 = vset.pattern.permute.xlu0 0
        %2922 = vperm.xlu0 %2921, %v2848
        %v2923 = vpop.permute.xlu0 %2922
        %2926 = vset.pattern.permute.xlu0 0
        %2927 = vperm.xlu0 %2926, %v2849
        %v2928 = vpop.permute.xlu0 %2927
        %2931 = vset.pattern.permute.xlu0 0
        %2932 = vperm.xlu0 %2931, %v2850
        %v2933 = vpop.permute.xlu0 %2932
        %2936 = vset.pattern.permute.xlu0 0
        %2937 = vperm.xlu0 %2936, %v2851
        %v2938 = vpop.permute.xlu0 %2937
        %2941 = vset.pattern.permute.xlu0 0
        %2942 = vperm.xlu0 %2941, %v2852
        %v2943 = vpop.permute.xlu0 %2942
        %2946 = vset.pattern.permute.xlu0 0
        %2947 = vperm.xlu0 %2946, %v2853
        %v2948 = vpop.permute.xlu0 %2947
        %2951 = vset.pattern.permute.xlu0 0
        %2952 = vperm.xlu0 %2951, %v2854
        %v2953 = vpop.permute.xlu0 %2952
        %2956 = vset.pattern.permute.xlu0 0
        %2957 = vperm.xlu0 %2956, %v2855
        %v2958 = vpop.permute.xlu0 %2957
        %2961 = vset.pattern.permute.xlu0 0
        %2962 = vperm.xlu0 %2961, %v2856
        %v2963 = vpop.permute.xlu0 %2962
        %2966 = vset.pattern.permute.xlu0 0
        %2967 = vperm.xlu0 %2966, %v2857
        %v2968 = vpop.permute.xlu0 %2967
        %2971 = vset.pattern.permute.xlu0 0
        %2972 = vperm.xlu0 %2971, %v2858
        %v2973 = vpop.permute.xlu0 %2972
        %2976 = vset.pattern.permute.xlu0 0
        %2977 = vperm.xlu0 %2976, %v2859
        %v2978 = vpop.permute.xlu0 %2977
        %2981 = vset.pattern.permute.xlu0 0
        %2982 = vperm.xlu0 %2981, %v2860
        %v2983 = vpop.permute.xlu0 %2982
        %2986 = vset.pattern.permute.xlu0 0
        %2987 = vperm.xlu0 %2986, %v2861
        %v2988 = vpop.permute.xlu0 %2987
        %2991 = vset.pattern.permute.xlu0 0
        %2992 = vperm.xlu0 %2991, %v2862
        %v2993 = vpop.permute.xlu0 %2992
        %2996 = vset.pattern.permute.xlu0 0
        %2997 = vperm.xlu0 %2996, %v2863
        %v2998 = vpop.permute.xlu0 %2997
        %3001 = vset.pattern.permute.xlu0 0
        %3002 = vperm.xlu0 %3001, %v2864
        %v3003 = vpop.permute.xlu0 %3002
        %3006 = vset.pattern.permute.xlu0 0
        %3007 = vperm.xlu0 %3006, %v2865
        %v3008 = vpop.permute.xlu0 %3007
        %3011 = vset.pattern.permute.xlu0 0
        %3012 = vperm.xlu0 %3011, %v2866
        %v3013 = vpop.permute.xlu0 %3012
        %3016 = vset.pattern.permute.xlu0 0
        %3017 = vperm.xlu0 %3016, %v2867
        %v3018 = vpop.permute.xlu0 %3017
        %3021 = vset.pattern.permute.xlu0 0
        %3022 = vperm.xlu0 %3021, %v2868
        %v3023 = vpop.permute.xlu0 %3022
        %3026 = vset.pattern.permute.xlu0 0
        %3027 = vperm.xlu0 %3026, %v2869
        %v3028 = vpop.permute.xlu0 %3027
        %3031 = vset.pattern.permute.xlu0 0
        %3032 = vperm.xlu0 %3031, %v2870
        %v3033 = vpop.permute.xlu0 %3032
        %3036 = vset.pattern.permute.xlu0 0
        %3037 = vperm.xlu0 %3036, %v2871
        %v3038 = vpop.permute.xlu0 %3037
        %3041 = vset.pattern.permute.xlu0 0
        %3042 = vperm.xlu0 %3041, %v2872
        %v3043 = vpop.permute.xlu0 %3042
        %3046 = vset.pattern.permute.xlu0 0
        %3047 = vperm.xlu0 %3046, %v2873
        %v3048 = vpop.permute.xlu0 %3047
        %3051 = vset.pattern.permute.xlu0 0
        %3052 = vperm.xlu0 %3051, %v2874
        %v3053 = vpop.permute.xlu0 %3052
        %3056 = vset.pattern.permute.xlu0 0
        %3057 = vperm.xlu0 %3056, %v2875
        %v3058 = vpop.permute.xlu0 %3057
        %3061 = vset.pattern.permute.xlu0 0
        %3062 = vperm.xlu0 %3061, %v2876
        %v3063 = vpop.permute.xlu0 %3062
        %3066 = vset.pattern.permute.xlu0 0
        %3067 = vperm.xlu0 %3066, %v2877
        %v3068 = vpop.permute.xlu0 %3067
        %3071 = vset.pattern.permute.xlu0 0
        %3072 = vperm.xlu0 %3071, %v2878
        %v3073 = vpop.permute.xlu0 %3072
        %3076 = vset.pattern.permute.xlu0 0
        %3077 = vperm.xlu0 %3076, %v2879
        %v3078 = vpop.permute.xlu0 %3077
        %3081 = vset.pattern.permute.xlu0 0
        %3082 = vperm.xlu0 %3081, %v2880
        %v3083 = vpop.permute.xlu0 %3082
        %3086 = vset.pattern.permute.xlu0 0
        %3087 = vperm.xlu0 %3086, %v2881
        %v3088 = vpop.permute.xlu0 %3087
        %3091 = vset.pattern.permute.xlu0 0
        %3092 = vperm.xlu0 %3091, %v2882
        %v3093 = vpop.permute.xlu0 %3092
        %3096 = vset.pattern.permute.xlu0 0
        %3097 = vperm.xlu0 %3096, %v2883
        %v3098 = vpop.permute.xlu0 %3097
        %3101 = vset.pattern.permute.xlu0 0
        %3102 = vperm.xlu0 %3101, %v2884
        %v3103 = vpop.permute.xlu0 %3102
        %3106 = vset.pattern.permute.xlu0 0
        %3107 = vperm.xlu0 %3106, %v2885
        %v3108 = vpop.permute.xlu0 %3107
        %3111 = vset.pattern.permute.xlu0 0
        %3112 = vperm.xlu0 %3111, %v2886
        %v3113 = vpop.permute.xlu0 %3112
        %3116 = vset.pattern.permute.xlu0 0
        %3117 = vperm.xlu0 %3116, %v2887
        %v3118 = vpop.permute.xlu0 %3117
        %3121 = vset.pattern.permute.xlu0 0
        %3122 = vperm.xlu0 %3121, %v2888
        %v3123 = vpop.permute.xlu0 %3122
        %3126 = vset.pattern.permute.xlu0 0
        %3127 = vperm.xlu0 %3126, %v2889
        %v3128 = vpop.permute.xlu0 %3127
        %3131 = vset.pattern.permute.xlu0 0
        %3132 = vperm.xlu0 %3131, %v2890
        %v3133 = vpop.permute.xlu0 %3132
        %3136 = vset.pattern.permute.xlu0 0
        %3137 = vperm.xlu0 %3136, %v2891
        %v3138 = vpop.permute.xlu0 %3137
        %3141 = vset.pattern.permute.xlu0 0
        %3142 = vperm.xlu0 %3141, %v2892
        %v3143 = vpop.permute.xlu0 %3142
        %3146 = vset.pattern.permute.xlu0 0
        %3147 = vperm.xlu0 %3146, %v2893
        %v3148 = vpop.permute.xlu0 %3147
        %3151 = vset.pattern.permute.xlu0 0
        %3152 = vperm.xlu0 %3151, %v2894
        %v3153 = vpop.permute.xlu0 %3152
        %3156 = vset.pattern.permute.xlu0 0
        %3157 = vperm.xlu0 %3156, %v2895
        %v3158 = vpop.permute.xlu0 %3157
        %3161 = vset.pattern.permute.xlu0 0
        %3162 = vperm.xlu0 %3161, %v2896
        %v3163 = vpop.permute.xlu0 %3162
        %3166 = vset.pattern.permute.xlu0 0
        %3167 = vperm.xlu0 %3166, %v2897
        %v3168 = vpop.permute.xlu0 %3167
        %3171 = vset.pattern.permute.xlu0 0
        %3172 = vperm.xlu0 %3171, %v2898
        %v3173 = vpop.permute.xlu0 %3172
        %3176 = vset.pattern.permute.xlu0 0
        %3177 = vperm.xlu0 %3176, %v2899
        %v3178 = vpop.permute.xlu0 %3177
        %3181 = vset.pattern.permute.xlu0 0
        %3182 = vperm.xlu0 %3181, %v2900
        %v3183 = vpop.permute.xlu0 %3182
        %3186 = vset.pattern.permute.xlu0 0
        %3187 = vperm.xlu0 %3186, %v2901
        %v3188 = vpop.permute.xlu0 %3187
        %3191 = vset.pattern.permute.xlu0 0
        %3192 = vperm.xlu0 %3191, %v2902
        %v3193 = vpop.permute.xlu0 %3192
        %3196 = vset.pattern.permute.xlu0 0
        %3197 = vperm.xlu0 %3196, %v2903
        %v3198 = vpop.permute.xlu0 %3197
        %3201 = vset.pattern.permute.xlu0 0
        %3202 = vperm.xlu0 %3201, %v2904
        %v3203 = vpop.permute.xlu0 %3202
        %3206 = vset.pattern.permute.xlu0 0
        %3207 = vperm.xlu0 %3206, %v2905
        %v3208 = vpop.permute.xlu0 %3207
        %3211 = vset.pattern.permute.xlu0 0
        %3212 = vperm.xlu0 %3211, %v2906
        %v3213 = vpop.permute.xlu0 %3212
        %3216 = vset.pattern.permute.xlu0 0
        %3217 = vperm.xlu0 %3216, %v2907
        %v3218 = vpop.permute.xlu0 %3217
        %3221 = vset.pattern.permute.xlu0 0
        %3222 = vperm.xlu0 %3221, %v2908
        %v3223 = vpop.permute.xlu0 %3222
        %3226 = vset.pattern.permute.xlu0 0
        %3227 = vperm.xlu0 %3226, %v2909
        %v3228 = vpop.permute.xlu0 %3227
        %v3294 = vunpack.c.l.b16 %v2718
        %v3295 = vunpack.c.h.b16 %v2718
        %v3296 = vunpack.c.l.b16 %v2719
        %v3297 = vunpack.c.h.b16 %v2719
        %v3298 = vunpack.c.l.b16 %v2720
        %v3299 = vunpack.c.h.b16 %v2720
        %v3300 = vunpack.c.l.b16 %v2721
        %v3301 = vunpack.c.h.b16 %v2721
        %v3302 = vunpack.c.l.b16 %v2722
        %v3303 = vunpack.c.h.b16 %v2722
        %v3304 = vunpack.c.l.b16 %v2723
        %v3305 = vunpack.c.h.b16 %v2723
        %v3306 = vunpack.c.l.b16 %v2724
        %v3307 = vunpack.c.h.b16 %v2724
        %v3308 = vunpack.c.l.b16 %v2725
        %v3309 = vunpack.c.h.b16 %v2725
        %v3310 = vunpack.c.l.b16 %v2726
        %v3311 = vunpack.c.h.b16 %v2726
        %v3312 = vunpack.c.l.b16 %v2727
        %v3313 = vunpack.c.h.b16 %v2727
        %v3314 = vunpack.c.l.b16 %v2728
        %v3315 = vunpack.c.h.b16 %v2728
        %v3316 = vunpack.c.l.b16 %v2729
        %v3317 = vunpack.c.h.b16 %v2729
        %v3318 = vunpack.c.l.b16 %v2730
        %v3319 = vunpack.c.h.b16 %v2730
        %v3320 = vunpack.c.l.b16 %v2731
        %v3321 = vunpack.c.h.b16 %v2731
        %v3322 = vunpack.c.l.b16 %v2732
        %v3323 = vunpack.c.h.b16 %v2732
        %v3324 = vunpack.c.l.b16 %v2733
        %v3325 = vunpack.c.h.b16 %v2733
        %v3326 = vunpack.c.l.b16 %v2734
        %v3327 = vunpack.c.h.b16 %v2734
        %v3328 = vunpack.c.l.b16 %v2735
        %v3329 = vunpack.c.h.b16 %v2735
        %v3330 = vunpack.c.l.b16 %v2736
        %v3331 = vunpack.c.h.b16 %v2736
        %v3332 = vunpack.c.l.b16 %v2737
        %v3333 = vunpack.c.h.b16 %v2737
        %v3334 = vunpack.c.l.b16 %v2738
        %v3335 = vunpack.c.h.b16 %v2738
        %v3336 = vunpack.c.l.b16 %v2739
        %v3337 = vunpack.c.h.b16 %v2739
        %v3338 = vunpack.c.l.b16 %v2740
        %v3339 = vunpack.c.h.b16 %v2740
        %v3340 = vunpack.c.l.b16 %v2741
        %v3341 = vunpack.c.h.b16 %v2741
        %v3342 = vunpack.c.l.b16 %v2742
        %v3343 = vunpack.c.h.b16 %v2742
        %v3344 = vunpack.c.l.b16 %v2743
        %v3345 = vunpack.c.h.b16 %v2743
        %v3346 = vunpack.c.l.b16 %v2744
        %v3347 = vunpack.c.h.b16 %v2744
        %v3348 = vunpack.c.l.b16 %v2745
        %v3349 = vunpack.c.h.b16 %v2745
        %v3350 = vunpack.c.l.b16 %v2746
        %v3351 = vunpack.c.h.b16 %v2746
        %v3352 = vunpack.c.l.b16 %v2747
        %v3353 = vunpack.c.h.b16 %v2747
        %v3354 = vunpack.c.l.b16 %v2748
        %v3355 = vunpack.c.h.b16 %v2748
        %v3356 = vunpack.c.l.b16 %v2749
        %v3357 = vunpack.c.h.b16 %v2749
        %v3358 = vunpack.c.l.b16 %v2750
        %v3359 = vunpack.c.h.b16 %v2750
        %v3360 = vunpack.c.l.b16 %v2751
        %v3361 = vunpack.c.h.b16 %v2751
        %v3362 = vunpack.c.l.b16 %v2752
        %v3363 = vunpack.c.h.b16 %v2752
        %v3364 = vunpack.c.l.b16 %v2753
        %v3365 = vunpack.c.h.b16 %v2753
        %v3366 = vunpack.c.l.b16 %v2754
        %v3367 = vunpack.c.h.b16 %v2754
        %v3368 = vunpack.c.l.b16 %v2755
        %v3369 = vunpack.c.h.b16 %v2755
        %v3370 = vunpack.c.l.b16 %v2756
        %v3371 = vunpack.c.h.b16 %v2756
        %v3372 = vunpack.c.l.b16 %v2757
        %v3373 = vunpack.c.h.b16 %v2757
        %v3374 = vunpack.c.l.b16 %v2758
        %v3375 = vunpack.c.h.b16 %v2758
        %v3376 = vunpack.c.l.b16 %v2759
        %v3377 = vunpack.c.h.b16 %v2759
        %v3378 = vunpack.c.l.b16 %v2760
        %v3379 = vunpack.c.h.b16 %v2760
        %v3380 = vunpack.c.l.b16 %v2761
        %v3381 = vunpack.c.h.b16 %v2761
        %v3382 = vunpack.c.l.b16 %v2762
        %v3383 = vunpack.c.h.b16 %v2762
        %v3384 = vunpack.c.l.b16 %v2763
        %v3385 = vunpack.c.h.b16 %v2763
        %v3386 = vunpack.c.l.b16 %v2764
        %v3387 = vunpack.c.h.b16 %v2764
        %v3388 = vunpack.c.l.b16 %v2765
        %v3389 = vunpack.c.h.b16 %v2765
        %v3390 = vunpack.c.l.b16 %v2766
        %v3391 = vunpack.c.h.b16 %v2766
        %v3392 = vunpack.c.l.b16 %v2767
        %v3393 = vunpack.c.h.b16 %v2767
        %v3394 = vunpack.c.l.b16 %v2768
        %v3395 = vunpack.c.h.b16 %v2768
        %v3396 = vunpack.c.l.b16 %v2769
        %v3397 = vunpack.c.h.b16 %v2769
        %v3398 = vunpack.c.l.b16 %v2770
        %v3399 = vunpack.c.h.b16 %v2770
        %v3400 = vunpack.c.l.b16 %v2771
        %v3401 = vunpack.c.h.b16 %v2771
        %v3402 = vunpack.c.l.b16 %v2772
        %v3403 = vunpack.c.h.b16 %v2772
        %v3404 = vunpack.c.l.b16 %v2773
        %v3405 = vunpack.c.h.b16 %v2773
        %v3406 = vunpack.c.l.b16 %v2774
        %v3407 = vunpack.c.h.b16 %v2774
        %v3408 = vunpack.c.l.b16 %v2775
        %v3409 = vunpack.c.h.b16 %v2775
        %v3410 = vunpack.c.l.b16 %v2776
        %v3411 = vunpack.c.h.b16 %v2776
        %v3412 = vunpack.c.l.b16 %v2777
        %v3413 = vunpack.c.h.b16 %v2777
        %v3414 = vunpack.c.l.b16 %v2778
        %v3415 = vunpack.c.h.b16 %v2778
        %v3416 = vunpack.c.l.b16 %v2779
        %v3417 = vunpack.c.h.b16 %v2779
        %v3418 = vunpack.c.l.b16 %v2780
        %v3419 = vunpack.c.h.b16 %v2780
        %v3420 = vunpack.c.l.b16 %v2781
        %v3421 = vunpack.c.h.b16 %v2781
        %v3422 = vpack.c.b16 %v3296, %v3294
        %v3423 = vpack.c.b16 %v3297, %v3295
        %v3424 = vpack.c.b16 %v3300, %v3298
        %v3425 = vpack.c.b16 %v3301, %v3299
        %v3426 = vpack.c.b16 %v3304, %v3302
        %v3427 = vpack.c.b16 %v3305, %v3303
        %v3428 = vpack.c.b16 %v3308, %v3306
        %v3429 = vpack.c.b16 %v3309, %v3307
        %v3430 = vpack.c.b16 %v3312, %v3310
        %v3431 = vpack.c.b16 %v3313, %v3311
        %v3432 = vpack.c.b16 %v3316, %v3314
        %v3433 = vpack.c.b16 %v3317, %v3315
        %v3434 = vpack.c.b16 %v3320, %v3318
        %v3435 = vpack.c.b16 %v3321, %v3319
        %v3436 = vpack.c.b16 %v3324, %v3322
        %v3437 = vpack.c.b16 %v3325, %v3323
        %v3438 = vpack.c.b16 %v3328, %v3326
        %v3439 = vpack.c.b16 %v3329, %v3327
        %v3440 = vpack.c.b16 %v3332, %v3330
        %v3441 = vpack.c.b16 %v3333, %v3331
        %v3442 = vpack.c.b16 %v3336, %v3334
        %v3443 = vpack.c.b16 %v3337, %v3335
        %v3444 = vpack.c.b16 %v3340, %v3338
        %v3445 = vpack.c.b16 %v3341, %v3339
        %v3446 = vpack.c.b16 %v3344, %v3342
        %v3447 = vpack.c.b16 %v3345, %v3343
        %v3448 = vpack.c.b16 %v3348, %v3346
        %v3449 = vpack.c.b16 %v3349, %v3347
        %v3450 = vpack.c.b16 %v3352, %v3350
        %v3451 = vpack.c.b16 %v3353, %v3351
        %v3452 = vpack.c.b16 %v3356, %v3354
        %v3453 = vpack.c.b16 %v3357, %v3355
        %v3454 = vpack.c.b16 %v3360, %v3358
        %v3455 = vpack.c.b16 %v3361, %v3359
        %v3456 = vpack.c.b16 %v3364, %v3362
        %v3457 = vpack.c.b16 %v3365, %v3363
        %v3458 = vpack.c.b16 %v3368, %v3366
        %v3459 = vpack.c.b16 %v3369, %v3367
        %v3460 = vpack.c.b16 %v3372, %v3370
        %v3461 = vpack.c.b16 %v3373, %v3371
        %v3462 = vpack.c.b16 %v3376, %v3374
        %v3463 = vpack.c.b16 %v3377, %v3375
        %v3464 = vpack.c.b16 %v3380, %v3378
        %v3465 = vpack.c.b16 %v3381, %v3379
        %v3466 = vpack.c.b16 %v3384, %v3382
        %v3467 = vpack.c.b16 %v3385, %v3383
        %v3468 = vpack.c.b16 %v3388, %v3386
        %v3469 = vpack.c.b16 %v3389, %v3387
        %v3470 = vpack.c.b16 %v3392, %v3390
        %v3471 = vpack.c.b16 %v3393, %v3391
        %v3472 = vpack.c.b16 %v3396, %v3394
        %v3473 = vpack.c.b16 %v3397, %v3395
        %v3474 = vpack.c.b16 %v3400, %v3398
        %v3475 = vpack.c.b16 %v3401, %v3399
        %v3476 = vpack.c.b16 %v3404, %v3402
        %v3477 = vpack.c.b16 %v3405, %v3403
        %v3478 = vpack.c.b16 %v3408, %v3406
        %v3479 = vpack.c.b16 %v3409, %v3407
        %v3480 = vpack.c.b16 %v3412, %v3410
        %v3481 = vpack.c.b16 %v3413, %v3411
        %v3482 = vpack.c.b16 %v3416, %v3414
        %v3483 = vpack.c.b16 %v3417, %v3415
        %v3484 = vpack.c.b16 %v3420, %v3418
        %v3485 = vpack.c.b16 %v3421, %v3419
        %3550 = vmatpush.bf16.msra.mxu0 %v2810
        %3551 = vmatpush.bf16.msra.mxu0 %v2806
        %3552 = vmatpush.bf16.msra.mxu0 %v2802
        %3553 = vmatpush.bf16.msra.mxu0 %v2798
        %3554 = vmatpush.bf16.msra.mxu0 %v2794
        %3555 = vmatpush.bf16.msra.mxu0 %v2790
        %3556 = vmatpush.bf16.msra.mxu0 %v2786
        %3557 = vmatpush.bf16.msra.mxu0 %v2782
        %3558 = vmatmul.bf16.gmra.mxu0 %v3422
        %v3559 = vpop.f32.mrf.mxu0
        %v3560 = vadd.f32 %v2913, %v3559
        %v3561 = vpop.f32.mrf.mxu0
        %v3562 = vadd.f32 %v2918, %v3561
        %3563 = vmatmul.bf16.gmra.mxu0 %v3424
        %v3564 = vpop.f32.mrf.mxu0
        %v3565 = vadd.f32 %v2923, %v3564
        %v3566 = vpop.f32.mrf.mxu0
        %v3567 = vadd.f32 %v2928, %v3566
        %3568 = vmatmul.bf16.gmra.mxu0 %v3426
        %v3569 = vpop.f32.mrf.mxu0
        %v3570 = vadd.f32 %v2933, %v3569
        %v3571 = vpop.f32.mrf.mxu0
        %v3572 = vadd.f32 %v2938, %v3571
        %3573 = vmatmul.bf16.gmra.mxu0 %v3428
        %v3574 = vpop.f32.mrf.mxu0
        %v3575 = vadd.f32 %v2943, %v3574
        %v3576 = vpop.f32.mrf.mxu0
        %v3577 = vadd.f32 %v2948, %v3576
        %3578 = vmatmul.bf16.gmra.mxu0 %v3430
        %v3579 = vpop.f32.mrf.mxu0
        %v3580 = vadd.f32 %v2953, %v3579
        %v3581 = vpop.f32.mrf.mxu0
        %v3582 = vadd.f32 %v2958, %v3581
        %3583 = vmatmul.bf16.gmra.mxu0 %v3432
        %v3584 = vpop.f32.mrf.mxu0
        %v3585 = vadd.f32 %v2963, %v3584
        %v3586 = vpop.f32.mrf.mxu0
        %v3587 = vadd.f32 %v2968, %v3586
        %3588 = vmatmul.bf16.gmra.mxu0 %v3434
        %v3589 = vpop.f32.mrf.mxu0
        %v3590 = vadd.f32 %v2973, %v3589
        %v3591 = vpop.f32.mrf.mxu0
        %v3592 = vadd.f32 %v2978, %v3591
        %3593 = vmatmul.bf16.gmra.mxu0 %v3436
        %v3594 = vpop.f32.mrf.mxu0
        %v3595 = vadd.f32 %v2983, %v3594
        %v3596 = vpop.f32.mrf.mxu0
        %v3597 = vadd.f32 %v2988, %v3596
        %3598 = vmatmul.bf16.gmra.mxu0 %v3438
        %v3599 = vpop.f32.mrf.mxu0
        %v3600 = vadd.f32 %v2993, %v3599
        %v3601 = vpop.f32.mrf.mxu0
        %v3602 = vadd.f32 %v2998, %v3601
        %3603 = vmatmul.bf16.gmra.mxu0 %v3440
        %v3604 = vpop.f32.mrf.mxu0
        %v3605 = vadd.f32 %v3003, %v3604
        %v3606 = vpop.f32.mrf.mxu0
        %v3607 = vadd.f32 %v3008, %v3606
        %3608 = vmatmul.bf16.gmra.mxu0 %v3442
        %v3609 = vpop.f32.mrf.mxu0
        %v3610 = vadd.f32 %v3013, %v3609
        %v3611 = vpop.f32.mrf.mxu0
        %v3612 = vadd.f32 %v3018, %v3611
        %3613 = vmatmul.bf16.gmra.mxu0 %v3444
        %v3614 = vpop.f32.mrf.mxu0
        %v3615 = vadd.f32 %v3023, %v3614
        %v3616 = vpop.f32.mrf.mxu0
        %v3617 = vadd.f32 %v3028, %v3616
        %3618 = vmatmul.bf16.gmra.mxu0 %v3446
        %v3619 = vpop.f32.mrf.mxu0
        %v3620 = vadd.f32 %v3033, %v3619
        %v3621 = vpop.f32.mrf.mxu0
        %v3622 = vadd.f32 %v3038, %v3621
        %3623 = vmatmul.bf16.gmra.mxu0 %v3448
        %v3624 = vpop.f32.mrf.mxu0
        %v3625 = vadd.f32 %v3043, %v3624
        %v3626 = vpop.f32.mrf.mxu0
        %v3627 = vadd.f32 %v3048, %v3626
        %3628 = vmatmul.bf16.gmra.mxu0 %v3450
        %v3629 = vpop.f32.mrf.mxu0
        %v3630 = vadd.f32 %v3053, %v3629
        %v3631 = vpop.f32.mrf.mxu0
        %v3632 = vadd.f32 %v3058, %v3631
        %3633 = vmatmul.bf16.gmra.mxu0 %v3452
        %v3634 = vpop.f32.mrf.mxu0
        %v3635 = vadd.f32 %v3063, %v3634
        %v3636 = vpop.f32.mrf.mxu0
        %v3637 = vadd.f32 %v3068, %v3636
        %3638 = vmatmul.bf16.gmra.mxu0 %v3454
        %v3639 = vpop.f32.mrf.mxu0
        %v3640 = vadd.f32 %v3073, %v3639
        %v3641 = vpop.f32.mrf.mxu0
        %v3642 = vadd.f32 %v3078, %v3641
        %3643 = vmatmul.bf16.gmra.mxu0 %v3456
        %v3644 = vpop.f32.mrf.mxu0
        %v3645 = vadd.f32 %v3083, %v3644
        %v3646 = vpop.f32.mrf.mxu0
        %v3647 = vadd.f32 %v3088, %v3646
        %3648 = vmatmul.bf16.gmra.mxu0 %v3458
        %v3649 = vpop.f32.mrf.mxu0
        %v3650 = vadd.f32 %v3093, %v3649
        %v3651 = vpop.f32.mrf.mxu0
        %v3652 = vadd.f32 %v3098, %v3651
        %3653 = vmatmul.bf16.gmra.mxu0 %v3460
        %v3654 = vpop.f32.mrf.mxu0
        %v3655 = vadd.f32 %v3103, %v3654
        %v3656 = vpop.f32.mrf.mxu0
        %v3657 = vadd.f32 %v3108, %v3656
        %3658 = vmatmul.bf16.gmra.mxu0 %v3462
        %v3659 = vpop.f32.mrf.mxu0
        %v3660 = vadd.f32 %v3113, %v3659
        %v3661 = vpop.f32.mrf.mxu0
        %v3662 = vadd.f32 %v3118, %v3661
        %3663 = vmatmul.bf16.gmra.mxu0 %v3464
        %v3664 = vpop.f32.mrf.mxu0
        %v3665 = vadd.f32 %v3123, %v3664
        %v3666 = vpop.f32.mrf.mxu0
        %v3667 = vadd.f32 %v3128, %v3666
        %3668 = vmatmul.bf16.gmra.mxu0 %v3466
        %v3669 = vpop.f32.mrf.mxu0
        %v3670 = vadd.f32 %v3133, %v3669
        %v3671 = vpop.f32.mrf.mxu0
        %v3672 = vadd.f32 %v3138, %v3671
        %3673 = vmatmul.bf16.gmra.mxu0 %v3468
        %v3674 = vpop.f32.mrf.mxu0
        %v3675 = vadd.f32 %v3143, %v3674
        %v3676 = vpop.f32.mrf.mxu0
        %v3677 = vadd.f32 %v3148, %v3676
        %3678 = vmatmul.bf16.gmra.mxu0 %v3470
        %v3679 = vpop.f32.mrf.mxu0
        %v3680 = vadd.f32 %v3153, %v3679
        %v3681 = vpop.f32.mrf.mxu0
        %v3682 = vadd.f32 %v3158, %v3681
        %3683 = vmatmul.bf16.gmra.mxu0 %v3472
        %v3684 = vpop.f32.mrf.mxu0
        %v3685 = vadd.f32 %v3163, %v3684
        %v3686 = vpop.f32.mrf.mxu0
        %v3687 = vadd.f32 %v3168, %v3686
        %3688 = vmatmul.bf16.gmra.mxu0 %v3474
        %v3689 = vpop.f32.mrf.mxu0
        %v3690 = vadd.f32 %v3173, %v3689
        %v3691 = vpop.f32.mrf.mxu0
        %v3692 = vadd.f32 %v3178, %v3691
        %3693 = vmatmul.bf16.gmra.mxu0 %v3476
        %v3694 = vpop.f32.mrf.mxu0
        %v3695 = vadd.f32 %v3183, %v3694
        %v3696 = vpop.f32.mrf.mxu0
        %v3697 = vadd.f32 %v3188, %v3696
        %3698 = vmatmul.bf16.gmra.mxu0 %v3478
        %v3699 = vpop.f32.mrf.mxu0
        %v3700 = vadd.f32 %v3193, %v3699
        %v3701 = vpop.f32.mrf.mxu0
        %v3702 = vadd.f32 %v3198, %v3701
        %3703 = vmatmul.bf16.gmra.mxu0 %v3480
        %v3704 = vpop.f32.mrf.mxu0
        %v3705 = vadd.f32 %v3203, %v3704
        %v3706 = vpop.f32.mrf.mxu0
        %v3707 = vadd.f32 %v3208, %v3706
        %3708 = vmatmul.bf16.gmra.mxu0 %v3482
        %v3709 = vpop.f32.mrf.mxu0
        %v3710 = vadd.f32 %v3213, %v3709
        %v3711 = vpop.f32.mrf.mxu0
        %v3712 = vadd.f32 %v3218, %v3711
        %3713 = vmatmul.bf16.gmra.mxu0 %v3484
        %v3714 = vpop.f32.mrf.mxu0
        %v3715 = vadd.f32 %v3223, %v3714
        %v3716 = vpop.f32.mrf.mxu0
        %v3717 = vadd.f32 %v3228, %v3716
        %3718 = vdwg.mxu0
        %3719 = vmatpush.bf16.msra.mxu0 %v2842
        %3720 = vmatpush.bf16.msra.mxu0 %v2838
        %3721 = vmatpush.bf16.msra.mxu0 %v2834
        %3722 = vmatpush.bf16.msra.mxu0 %v2830
        %3723 = vmatpush.bf16.msra.mxu0 %v2826
        %3724 = vmatpush.bf16.msra.mxu0 %v2822
        %3725 = vmatpush.bf16.msra.mxu0 %v2818
        %3726 = vmatpush.bf16.msra.mxu0 %v2814
        %3727 = vmatmul.bf16.gmra.mxu0 %v3423
        %v3728 = vpop.f32.mrf.mxu0
        %v3729 = vadd.f32 %v3560, %v3728
        %v3730 = vpop.f32.mrf.mxu0
        %v3731 = vadd.f32 %v3562, %v3730
        %3732 = vmatmul.bf16.gmra.mxu0 %v3425
        %v3733 = vpop.f32.mrf.mxu0
        %v3734 = vadd.f32 %v3565, %v3733
        %v3735 = vpop.f32.mrf.mxu0
        %v3736 = vadd.f32 %v3567, %v3735
        %3737 = vmatmul.bf16.gmra.mxu0 %v3427
        %v3738 = vpop.f32.mrf.mxu0
        %v3739 = vadd.f32 %v3570, %v3738
        %v3740 = vpop.f32.mrf.mxu0
        %v3741 = vadd.f32 %v3572, %v3740
        %3742 = vmatmul.bf16.gmra.mxu0 %v3429
        %v3743 = vpop.f32.mrf.mxu0
        %v3744 = vadd.f32 %v3575, %v3743
        %v3745 = vpop.f32.mrf.mxu0
        %v3746 = vadd.f32 %v3577, %v3745
        %3747 = vmatmul.bf16.gmra.mxu0 %v3431
        %v3748 = vpop.f32.mrf.mxu0
        %v3749 = vadd.f32 %v3580, %v3748
        %v3750 = vpop.f32.mrf.mxu0
        %v3751 = vadd.f32 %v3582, %v3750
        %3752 = vmatmul.bf16.gmra.mxu0 %v3433
        %v3753 = vpop.f32.mrf.mxu0
        %v3754 = vadd.f32 %v3585, %v3753
        %v3755 = vpop.f32.mrf.mxu0
        %v3756 = vadd.f32 %v3587, %v3755
        %3757 = vmatmul.bf16.gmra.mxu0 %v3435
        %v3758 = vpop.f32.mrf.mxu0
        %v3759 = vadd.f32 %v3590, %v3758
        %v3760 = vpop.f32.mrf.mxu0
        %v3761 = vadd.f32 %v3592, %v3760
        %3762 = vmatmul.bf16.gmra.mxu0 %v3437
        %v3763 = vpop.f32.mrf.mxu0
        %v3764 = vadd.f32 %v3595, %v3763
        %v3765 = vpop.f32.mrf.mxu0
        %v3766 = vadd.f32 %v3597, %v3765
        %3767 = vmatmul.bf16.gmra.mxu0 %v3439
        %v3768 = vpop.f32.mrf.mxu0
        %v3769 = vadd.f32 %v3600, %v3768
        %v3770 = vpop.f32.mrf.mxu0
        %v3771 = vadd.f32 %v3602, %v3770
        %3772 = vmatmul.bf16.gmra.mxu0 %v3441
        %v3773 = vpop.f32.mrf.mxu0
        %v3774 = vadd.f32 %v3605, %v3773
        %v3775 = vpop.f32.mrf.mxu0
        %v3776 = vadd.f32 %v3607, %v3775
        %3777 = vmatmul.bf16.gmra.mxu0 %v3443
        %v3778 = vpop.f32.mrf.mxu0
        %v3779 = vadd.f32 %v3610, %v3778
        %v3780 = vpop.f32.mrf.mxu0
        %v3781 = vadd.f32 %v3612, %v3780
        %3782 = vmatmul.bf16.gmra.mxu0 %v3445
        %v3783 = vpop.f32.mrf.mxu0
        %v3784 = vadd.f32 %v3615, %v3783
        %v3785 = vpop.f32.mrf.mxu0
        %v3786 = vadd.f32 %v3617, %v3785
        %3787 = vmatmul.bf16.gmra.mxu0 %v3447
        %v3788 = vpop.f32.mrf.mxu0
        %v3789 = vadd.f32 %v3620, %v3788
        %v3790 = vpop.f32.mrf.mxu0
        %v3791 = vadd.f32 %v3622, %v3790
        %3792 = vmatmul.bf16.gmra.mxu0 %v3449
        %v3793 = vpop.f32.mrf.mxu0
        %v3794 = vadd.f32 %v3625, %v3793
        %v3795 = vpop.f32.mrf.mxu0
        %v3796 = vadd.f32 %v3627, %v3795
        %3797 = vmatmul.bf16.gmra.mxu0 %v3451
        %v3798 = vpop.f32.mrf.mxu0
        %v3799 = vadd.f32 %v3630, %v3798
        %v3800 = vpop.f32.mrf.mxu0
        %v3801 = vadd.f32 %v3632, %v3800
        %3802 = vmatmul.bf16.gmra.mxu0 %v3453
        %v3803 = vpop.f32.mrf.mxu0
        %v3804 = vadd.f32 %v3635, %v3803
        %v3805 = vpop.f32.mrf.mxu0
        %v3806 = vadd.f32 %v3637, %v3805
        %3807 = vmatmul.bf16.gmra.mxu0 %v3455
        %v3808 = vpop.f32.mrf.mxu0
        %v3809 = vadd.f32 %v3640, %v3808
        %v3810 = vpop.f32.mrf.mxu0
        %v3811 = vadd.f32 %v3642, %v3810
        %3812 = vmatmul.bf16.gmra.mxu0 %v3457
        %v3813 = vpop.f32.mrf.mxu0
        %v3814 = vadd.f32 %v3645, %v3813
        %v3815 = vpop.f32.mrf.mxu0
        %v3816 = vadd.f32 %v3647, %v3815
        %3817 = vmatmul.bf16.gmra.mxu0 %v3459
        %v3818 = vpop.f32.mrf.mxu0
        %v3819 = vadd.f32 %v3650, %v3818
        %v3820 = vpop.f32.mrf.mxu0
        %v3821 = vadd.f32 %v3652, %v3820
        %3822 = vmatmul.bf16.gmra.mxu0 %v3461
        %v3823 = vpop.f32.mrf.mxu0
        %v3824 = vadd.f32 %v3655, %v3823
        %v3825 = vpop.f32.mrf.mxu0
        %v3826 = vadd.f32 %v3657, %v3825
        %3827 = vmatmul.bf16.gmra.mxu0 %v3463
        %v3828 = vpop.f32.mrf.mxu0
        %v3829 = vadd.f32 %v3660, %v3828
        %v3830 = vpop.f32.mrf.mxu0
        %v3831 = vadd.f32 %v3662, %v3830
        %3832 = vmatmul.bf16.gmra.mxu0 %v3465
        %v3833 = vpop.f32.mrf.mxu0
        %v3834 = vadd.f32 %v3665, %v3833
        %v3835 = vpop.f32.mrf.mxu0
        %v3836 = vadd.f32 %v3667, %v3835
        %3837 = vmatmul.bf16.gmra.mxu0 %v3467
        %v3838 = vpop.f32.mrf.mxu0
        %v3839 = vadd.f32 %v3670, %v3838
        %v3840 = vpop.f32.mrf.mxu0
        %v3841 = vadd.f32 %v3672, %v3840
        %3842 = vmatmul.bf16.gmra.mxu0 %v3469
        %v3843 = vpop.f32.mrf.mxu0
        %v3844 = vadd.f32 %v3675, %v3843
        %v3845 = vpop.f32.mrf.mxu0
        %v3846 = vadd.f32 %v3677, %v3845
        %3847 = vmatmul.bf16.gmra.mxu0 %v3471
        %v3848 = vpop.f32.mrf.mxu0
        %v3849 = vadd.f32 %v3680, %v3848
        %v3850 = vpop.f32.mrf.mxu0
        %v3851 = vadd.f32 %v3682, %v3850
        %3852 = vmatmul.bf16.gmra.mxu0 %v3473
        %v3853 = vpop.f32.mrf.mxu0
        %v3854 = vadd.f32 %v3685, %v3853
        %v3855 = vpop.f32.mrf.mxu0
        %v3856 = vadd.f32 %v3687, %v3855
        %3857 = vmatmul.bf16.gmra.mxu0 %v3475
        %v3858 = vpop.f32.mrf.mxu0
        %v3859 = vadd.f32 %v3690, %v3858
        %v3860 = vpop.f32.mrf.mxu0
        %v3861 = vadd.f32 %v3692, %v3860
        %3862 = vmatmul.bf16.gmra.mxu0 %v3477
        %v3863 = vpop.f32.mrf.mxu0
        %v3864 = vadd.f32 %v3695, %v3863
        %v3865 = vpop.f32.mrf.mxu0
        %v3866 = vadd.f32 %v3697, %v3865
        %3867 = vmatmul.bf16.gmra.mxu0 %v3479
        %v3868 = vpop.f32.mrf.mxu0
        %v3869 = vadd.f32 %v3700, %v3868
        %v3870 = vpop.f32.mrf.mxu0
        %v3871 = vadd.f32 %v3702, %v3870
        %3872 = vmatmul.bf16.gmra.mxu0 %v3481
        %v3873 = vpop.f32.mrf.mxu0
        %v3874 = vadd.f32 %v3705, %v3873
        %v3875 = vpop.f32.mrf.mxu0
        %v3876 = vadd.f32 %v3707, %v3875
        %3877 = vmatmul.bf16.gmra.mxu0 %v3483
        %v3878 = vpop.f32.mrf.mxu0
        %v3879 = vadd.f32 %v3710, %v3878
        %v3880 = vpop.f32.mrf.mxu0
        %v3881 = vadd.f32 %v3712, %v3880
        %3882 = vmatmul.bf16.gmra.mxu0 %v3485
        %v3883 = vpop.f32.mrf.mxu0
        %v3884 = vadd.f32 %v3715, %v3883
        %v3885 = vpop.f32.mrf.mxu0
        %v3886 = vadd.f32 %v3717, %v3885
        %3887 = vdwg.mxu0
        %3888 = vmatpush.bf16.msra.mxu0 %v2811
        %3889 = vmatpush.bf16.msra.mxu0 %v2807
        %3890 = vmatpush.bf16.msra.mxu0 %v2803
        %3891 = vmatpush.bf16.msra.mxu0 %v2799
        %3892 = vmatpush.bf16.msra.mxu0 %v2795
        %3893 = vmatpush.bf16.msra.mxu0 %v2791
        %3894 = vmatpush.bf16.msra.mxu0 %v2787
        %3895 = vmatpush.bf16.msra.mxu0 %v2783
        %3896 = vmatmul.bf16.gmra.mxu0 %v3422
        %v3897 = vpop.f32.mrf.mxu0
        %v3898 = vadd.f32 %v2913, %v3897
        %v3899 = vpop.f32.mrf.mxu0
        %v3900 = vadd.f32 %v2918, %v3899
        %3901 = vmatmul.bf16.gmra.mxu0 %v3424
        %v3902 = vpop.f32.mrf.mxu0
        %v3903 = vadd.f32 %v2923, %v3902
        %v3904 = vpop.f32.mrf.mxu0
        %v3905 = vadd.f32 %v2928, %v3904
        %3906 = vmatmul.bf16.gmra.mxu0 %v3426
        %v3907 = vpop.f32.mrf.mxu0
        %v3908 = vadd.f32 %v2933, %v3907
        %v3909 = vpop.f32.mrf.mxu0
        %v3910 = vadd.f32 %v2938, %v3909
        %3911 = vmatmul.bf16.gmra.mxu0 %v3428
        %v3912 = vpop.f32.mrf.mxu0
        %v3913 = vadd.f32 %v2943, %v3912
        %v3914 = vpop.f32.mrf.mxu0
        %v3915 = vadd.f32 %v2948, %v3914
        %3916 = vmatmul.bf16.gmra.mxu0 %v3430
        %v3917 = vpop.f32.mrf.mxu0
        %v3918 = vadd.f32 %v2953, %v3917
        %v3919 = vpop.f32.mrf.mxu0
        %v3920 = vadd.f32 %v2958, %v3919
        %3921 = vmatmul.bf16.gmra.mxu0 %v3432
        %v3922 = vpop.f32.mrf.mxu0
        %v3923 = vadd.f32 %v2963, %v3922
        %v3924 = vpop.f32.mrf.mxu0
        %v3925 = vadd.f32 %v2968, %v3924
        %3926 = vmatmul.bf16.gmra.mxu0 %v3434
        %v3927 = vpop.f32.mrf.mxu0
        %v3928 = vadd.f32 %v2973, %v3927
        %v3929 = vpop.f32.mrf.mxu0
        %v3930 = vadd.f32 %v2978, %v3929
        %3931 = vmatmul.bf16.gmra.mxu0 %v3436
        %v3932 = vpop.f32.mrf.mxu0
        %v3933 = vadd.f32 %v2983, %v3932
        %v3934 = vpop.f32.mrf.mxu0
        %v3935 = vadd.f32 %v2988, %v3934
        %3936 = vmatmul.bf16.gmra.mxu0 %v3438
        %v3937 = vpop.f32.mrf.mxu0
        %v3938 = vadd.f32 %v2993, %v3937
        %v3939 = vpop.f32.mrf.mxu0
        %v3940 = vadd.f32 %v2998, %v3939
        %3941 = vmatmul.bf16.gmra.mxu0 %v3440
        %v3942 = vpop.f32.mrf.mxu0
        %v3943 = vadd.f32 %v3003, %v3942
        %v3944 = vpop.f32.mrf.mxu0
        %v3945 = vadd.f32 %v3008, %v3944
        %3946 = vmatmul.bf16.gmra.mxu0 %v3442
        %v3947 = vpop.f32.mrf.mxu0
        %v3948 = vadd.f32 %v3013, %v3947
        %v3949 = vpop.f32.mrf.mxu0
        %v3950 = vadd.f32 %v3018, %v3949
        %3951 = vmatmul.bf16.gmra.mxu0 %v3444
        %v3952 = vpop.f32.mrf.mxu0
        %v3953 = vadd.f32 %v3023, %v3952
        %v3954 = vpop.f32.mrf.mxu0
        %v3955 = vadd.f32 %v3028, %v3954
        %3956 = vmatmul.bf16.gmra.mxu0 %v3446
        %v3957 = vpop.f32.mrf.mxu0
        %v3958 = vadd.f32 %v3033, %v3957
        %v3959 = vpop.f32.mrf.mxu0
        %v3960 = vadd.f32 %v3038, %v3959
        %3961 = vmatmul.bf16.gmra.mxu0 %v3448
        %v3962 = vpop.f32.mrf.mxu0
        %v3963 = vadd.f32 %v3043, %v3962
        %v3964 = vpop.f32.mrf.mxu0
        %v3965 = vadd.f32 %v3048, %v3964
        %3966 = vmatmul.bf16.gmra.mxu0 %v3450
        %v3967 = vpop.f32.mrf.mxu0
        %v3968 = vadd.f32 %v3053, %v3967
        %v3969 = vpop.f32.mrf.mxu0
        %v3970 = vadd.f32 %v3058, %v3969
        %3971 = vmatmul.bf16.gmra.mxu0 %v3452
        %v3972 = vpop.f32.mrf.mxu0
        %v3973 = vadd.f32 %v3063, %v3972
        %v3974 = vpop.f32.mrf.mxu0
        %v3975 = vadd.f32 %v3068, %v3974
        %3976 = vmatmul.bf16.gmra.mxu0 %v3454
        %v3977 = vpop.f32.mrf.mxu0
        %v3978 = vadd.f32 %v3073, %v3977
        %v3979 = vpop.f32.mrf.mxu0
        %v3980 = vadd.f32 %v3078, %v3979
        %3981 = vmatmul.bf16.gmra.mxu0 %v3456
        %v3982 = vpop.f32.mrf.mxu0
        %v3983 = vadd.f32 %v3083, %v3982
        %v3984 = vpop.f32.mrf.mxu0
        %v3985 = vadd.f32 %v3088, %v3984
        %3986 = vmatmul.bf16.gmra.mxu0 %v3458
        %v3987 = vpop.f32.mrf.mxu0
        %v3988 = vadd.f32 %v3093, %v3987
        %v3989 = vpop.f32.mrf.mxu0
        %v3990 = vadd.f32 %v3098, %v3989
        %3991 = vmatmul.bf16.gmra.mxu0 %v3460
        %v3992 = vpop.f32.mrf.mxu0
        %v3993 = vadd.f32 %v3103, %v3992
        %v3994 = vpop.f32.mrf.mxu0
        %v3995 = vadd.f32 %v3108, %v3994
        %3996 = vmatmul.bf16.gmra.mxu0 %v3462
        %v3997 = vpop.f32.mrf.mxu0
        %v3998 = vadd.f32 %v3113, %v3997
        %v3999 = vpop.f32.mrf.mxu0
        %v4000 = vadd.f32 %v3118, %v3999
        %4001 = vmatmul.bf16.gmra.mxu0 %v3464
        %v4002 = vpop.f32.mrf.mxu0
        %v4003 = vadd.f32 %v3123, %v4002
        %v4004 = vpop.f32.mrf.mxu0
        %v4005 = vadd.f32 %v3128, %v4004
        %4006 = vmatmul.bf16.gmra.mxu0 %v3466
        %v4007 = vpop.f32.mrf.mxu0
        %v4008 = vadd.f32 %v3133, %v4007
        %v4009 = vpop.f32.mrf.mxu0
        %v4010 = vadd.f32 %v3138, %v4009
        %4011 = vmatmul.bf16.gmra.mxu0 %v3468
        %v4012 = vpop.f32.mrf.mxu0
        %v4013 = vadd.f32 %v3143, %v4012
        %v4014 = vpop.f32.mrf.mxu0
        %v4015 = vadd.f32 %v3148, %v4014
        %4016 = vmatmul.bf16.gmra.mxu0 %v3470
        %v4017 = vpop.f32.mrf.mxu0
        %v4018 = vadd.f32 %v3153, %v4017
        %v4019 = vpop.f32.mrf.mxu0
        %v4020 = vadd.f32 %v3158, %v4019
        %4021 = vmatmul.bf16.gmra.mxu0 %v3472
        %v4022 = vpop.f32.mrf.mxu0
        %v4023 = vadd.f32 %v3163, %v4022
        %v4024 = vpop.f32.mrf.mxu0
        %v4025 = vadd.f32 %v3168, %v4024
        %4026 = vmatmul.bf16.gmra.mxu0 %v3474
        %v4027 = vpop.f32.mrf.mxu0
        %v4028 = vadd.f32 %v3173, %v4027
        %v4029 = vpop.f32.mrf.mxu0
        %v4030 = vadd.f32 %v3178, %v4029
        %4031 = vmatmul.bf16.gmra.mxu0 %v3476
        %v4032 = vpop.f32.mrf.mxu0
        %v4033 = vadd.f32 %v3183, %v4032
        %v4034 = vpop.f32.mrf.mxu0
        %v4035 = vadd.f32 %v3188, %v4034
        %4036 = vmatmul.bf16.gmra.mxu0 %v3478
        %v4037 = vpop.f32.mrf.mxu0
        %v4038 = vadd.f32 %v3193, %v4037
        %v4039 = vpop.f32.mrf.mxu0
        %v4040 = vadd.f32 %v3198, %v4039
        %4041 = vmatmul.bf16.gmra.mxu0 %v3480
        %v4042 = vpop.f32.mrf.mxu0
        %v4043 = vadd.f32 %v3203, %v4042
        %v4044 = vpop.f32.mrf.mxu0
        %v4045 = vadd.f32 %v3208, %v4044
        %4046 = vmatmul.bf16.gmra.mxu0 %v3482
        %v4047 = vpop.f32.mrf.mxu0
        %v4048 = vadd.f32 %v3213, %v4047
        %v4049 = vpop.f32.mrf.mxu0
        %v4050 = vadd.f32 %v3218, %v4049
        %4051 = vmatmul.bf16.gmra.mxu0 %v3484
        %v4052 = vpop.f32.mrf.mxu0
        %v4053 = vadd.f32 %v3223, %v4052
        %v4054 = vpop.f32.mrf.mxu0
        %v4055 = vadd.f32 %v3228, %v4054
        %4056 = vdwg.mxu0
        %4057 = vmatpush.bf16.msra.mxu0 %v2843
        %4058 = vmatpush.bf16.msra.mxu0 %v2839
        %4059 = vmatpush.bf16.msra.mxu0 %v2835
        %4060 = vmatpush.bf16.msra.mxu0 %v2831
        %4061 = vmatpush.bf16.msra.mxu0 %v2827
        %4062 = vmatpush.bf16.msra.mxu0 %v2823
        %4063 = vmatpush.bf16.msra.mxu0 %v2819
        %4064 = vmatpush.bf16.msra.mxu0 %v2815
        %4065 = vmatmul.bf16.gmra.mxu0 %v3423
        %v4066 = vpop.f32.mrf.mxu0
        %v4067 = vadd.f32 %v3898, %v4066
        %v4068 = vpop.f32.mrf.mxu0
        %v4069 = vadd.f32 %v3900, %v4068
        %4070 = vmatmul.bf16.gmra.mxu0 %v3425
        %v4071 = vpop.f32.mrf.mxu0
        %v4072 = vadd.f32 %v3903, %v4071
        %v4073 = vpop.f32.mrf.mxu0
        %v4074 = vadd.f32 %v3905, %v4073
        %4075 = vmatmul.bf16.gmra.mxu0 %v3427
        %v4076 = vpop.f32.mrf.mxu0
        %v4077 = vadd.f32 %v3908, %v4076
        %v4078 = vpop.f32.mrf.mxu0
        %v4079 = vadd.f32 %v3910, %v4078
        %4080 = vmatmul.bf16.gmra.mxu0 %v3429
        %v4081 = vpop.f32.mrf.mxu0
        %v4082 = vadd.f32 %v3913, %v4081
        %v4083 = vpop.f32.mrf.mxu0
        %v4084 = vadd.f32 %v3915, %v4083
        %4085 = vmatmul.bf16.gmra.mxu0 %v3431
        %v4086 = vpop.f32.mrf.mxu0
        %v4087 = vadd.f32 %v3918, %v4086
        %v4088 = vpop.f32.mrf.mxu0
        %v4089 = vadd.f32 %v3920, %v4088
        %4090 = vmatmul.bf16.gmra.mxu0 %v3433
        %v4091 = vpop.f32.mrf.mxu0
        %v4092 = vadd.f32 %v3923, %v4091
        %v4093 = vpop.f32.mrf.mxu0
        %v4094 = vadd.f32 %v3925, %v4093
        %4095 = vmatmul.bf16.gmra.mxu0 %v3435
        %v4096 = vpop.f32.mrf.mxu0
        %v4097 = vadd.f32 %v3928, %v4096
        %v4098 = vpop.f32.mrf.mxu0
        %v4099 = vadd.f32 %v3930, %v4098
        %4100 = vmatmul.bf16.gmra.mxu0 %v3437
        %v4101 = vpop.f32.mrf.mxu0
        %v4102 = vadd.f32 %v3933, %v4101
        %v4103 = vpop.f32.mrf.mxu0
        %v4104 = vadd.f32 %v3935, %v4103
        %4105 = vmatmul.bf16.gmra.mxu0 %v3439
        %v4106 = vpop.f32.mrf.mxu0
        %v4107 = vadd.f32 %v3938, %v4106
        %v4108 = vpop.f32.mrf.mxu0
        %v4109 = vadd.f32 %v3940, %v4108
        %4110 = vmatmul.bf16.gmra.mxu0 %v3441
        %v4111 = vpop.f32.mrf.mxu0
        %v4112 = vadd.f32 %v3943, %v4111
        %v4113 = vpop.f32.mrf.mxu0
        %v4114 = vadd.f32 %v3945, %v4113
        %4115 = vmatmul.bf16.gmra.mxu0 %v3443
        %v4116 = vpop.f32.mrf.mxu0
        %v4117 = vadd.f32 %v3948, %v4116
        %v4118 = vpop.f32.mrf.mxu0
        %v4119 = vadd.f32 %v3950, %v4118
        %4120 = vmatmul.bf16.gmra.mxu0 %v3445
        %v4121 = vpop.f32.mrf.mxu0
        %v4122 = vadd.f32 %v3953, %v4121
        %v4123 = vpop.f32.mrf.mxu0
        %v4124 = vadd.f32 %v3955, %v4123
        %4125 = vmatmul.bf16.gmra.mxu0 %v3447
        %v4126 = vpop.f32.mrf.mxu0
        %v4127 = vadd.f32 %v3958, %v4126
        %v4128 = vpop.f32.mrf.mxu0
        %v4129 = vadd.f32 %v3960, %v4128
        %4130 = vmatmul.bf16.gmra.mxu0 %v3449
        %v4131 = vpop.f32.mrf.mxu0
        %v4132 = vadd.f32 %v3963, %v4131
        %v4133 = vpop.f32.mrf.mxu0
        %v4134 = vadd.f32 %v3965, %v4133
        %4135 = vmatmul.bf16.gmra.mxu0 %v3451
        %v4136 = vpop.f32.mrf.mxu0
        %v4137 = vadd.f32 %v3968, %v4136
        %v4138 = vpop.f32.mrf.mxu0
        %v4139 = vadd.f32 %v3970, %v4138
        %4140 = vmatmul.bf16.gmra.mxu0 %v3453
        %v4141 = vpop.f32.mrf.mxu0
        %v4142 = vadd.f32 %v3973, %v4141
        %v4143 = vpop.f32.mrf.mxu0
        %v4144 = vadd.f32 %v3975, %v4143
        %4145 = vmatmul.bf16.gmra.mxu0 %v3455
        %v4146 = vpop.f32.mrf.mxu0
        %v4147 = vadd.f32 %v3978, %v4146
        %v4148 = vpop.f32.mrf.mxu0
        %v4149 = vadd.f32 %v3980, %v4148
        %4150 = vmatmul.bf16.gmra.mxu0 %v3457
        %v4151 = vpop.f32.mrf.mxu0
        %v4152 = vadd.f32 %v3983, %v4151
        %v4153 = vpop.f32.mrf.mxu0
        %v4154 = vadd.f32 %v3985, %v4153
        %4155 = vmatmul.bf16.gmra.mxu0 %v3459
        %v4156 = vpop.f32.mrf.mxu0
        %v4157 = vadd.f32 %v3988, %v4156
        %v4158 = vpop.f32.mrf.mxu0
        %v4159 = vadd.f32 %v3990, %v4158
        %4160 = vmatmul.bf16.gmra.mxu0 %v3461
        %v4161 = vpop.f32.mrf.mxu0
        %v4162 = vadd.f32 %v3993, %v4161
        %v4163 = vpop.f32.mrf.mxu0
        %v4164 = vadd.f32 %v3995, %v4163
        %4165 = vmatmul.bf16.gmra.mxu0 %v3463
        %v4166 = vpop.f32.mrf.mxu0
        %v4167 = vadd.f32 %v3998, %v4166
        %v4168 = vpop.f32.mrf.mxu0
        %v4169 = vadd.f32 %v4000, %v4168
        %4170 = vmatmul.bf16.gmra.mxu0 %v3465
        %v4171 = vpop.f32.mrf.mxu0
        %v4172 = vadd.f32 %v4003, %v4171
        %v4173 = vpop.f32.mrf.mxu0
        %v4174 = vadd.f32 %v4005, %v4173
        %4175 = vmatmul.bf16.gmra.mxu0 %v3467
        %v4176 = vpop.f32.mrf.mxu0
        %v4177 = vadd.f32 %v4008, %v4176
        %v4178 = vpop.f32.mrf.mxu0
        %v4179 = vadd.f32 %v4010, %v4178
        %4180 = vmatmul.bf16.gmra.mxu0 %v3469
        %v4181 = vpop.f32.mrf.mxu0
        %v4182 = vadd.f32 %v4013, %v4181
        %v4183 = vpop.f32.mrf.mxu0
        %v4184 = vadd.f32 %v4015, %v4183
        %4185 = vmatmul.bf16.gmra.mxu0 %v3471
        %v4186 = vpop.f32.mrf.mxu0
        %v4187 = vadd.f32 %v4018, %v4186
        %v4188 = vpop.f32.mrf.mxu0
        %v4189 = vadd.f32 %v4020, %v4188
        %4190 = vmatmul.bf16.gmra.mxu0 %v3473
        %v4191 = vpop.f32.mrf.mxu0
        %v4192 = vadd.f32 %v4023, %v4191
        %v4193 = vpop.f32.mrf.mxu0
        %v4194 = vadd.f32 %v4025, %v4193
        %4195 = vmatmul.bf16.gmra.mxu0 %v3475
        %v4196 = vpop.f32.mrf.mxu0
        %v4197 = vadd.f32 %v4028, %v4196
        %v4198 = vpop.f32.mrf.mxu0
        %v4199 = vadd.f32 %v4030, %v4198
        %4200 = vmatmul.bf16.gmra.mxu0 %v3477
        %v4201 = vpop.f32.mrf.mxu0
        %v4202 = vadd.f32 %v4033, %v4201
        %v4203 = vpop.f32.mrf.mxu0
        %v4204 = vadd.f32 %v4035, %v4203
        %4205 = vmatmul.bf16.gmra.mxu0 %v3479
        %v4206 = vpop.f32.mrf.mxu0
        %v4207 = vadd.f32 %v4038, %v4206
        %v4208 = vpop.f32.mrf.mxu0
        %v4209 = vadd.f32 %v4040, %v4208
        %4210 = vmatmul.bf16.gmra.mxu0 %v3481
        %v4211 = vpop.f32.mrf.mxu0
        %v4212 = vadd.f32 %v4043, %v4211
        %v4213 = vpop.f32.mrf.mxu0
        %v4214 = vadd.f32 %v4045, %v4213
        %4215 = vmatmul.bf16.gmra.mxu0 %v3483
        %v4216 = vpop.f32.mrf.mxu0
        %v4217 = vadd.f32 %v4048, %v4216
        %v4218 = vpop.f32.mrf.mxu0
        %v4219 = vadd.f32 %v4050, %v4218
        %4220 = vmatmul.bf16.gmra.mxu0 %v3485
        %v4221 = vpop.f32.mrf.mxu0
        %v4222 = vadd.f32 %v4053, %v4221
        %v4223 = vpop.f32.mrf.mxu0
        %v4224 = vadd.f32 %v4055, %v4223
        %4225 = vdwg.mxu0
        %4226 = vmatpush.bf16.msra.mxu0 %v2812
        %4227 = vmatpush.bf16.msra.mxu0 %v2808
        %4228 = vmatpush.bf16.msra.mxu0 %v2804
        %4229 = vmatpush.bf16.msra.mxu0 %v2800
        %4230 = vmatpush.bf16.msra.mxu0 %v2796
        %4231 = vmatpush.bf16.msra.mxu0 %v2792
        %4232 = vmatpush.bf16.msra.mxu0 %v2788
        %4233 = vmatpush.bf16.msra.mxu0 %v2784
        %4234 = vmatmul.bf16.gmra.mxu0 %v3422
        %v4235 = vpop.f32.mrf.mxu0
        %v4236 = vadd.f32 %v2913, %v4235
        %v4237 = vpop.f32.mrf.mxu0
        %v4238 = vadd.f32 %v2918, %v4237
        %4239 = vmatmul.bf16.gmra.mxu0 %v3424
        %v4240 = vpop.f32.mrf.mxu0
        %v4241 = vadd.f32 %v2923, %v4240
        %v4242 = vpop.f32.mrf.mxu0
        %v4243 = vadd.f32 %v2928, %v4242
        %4244 = vmatmul.bf16.gmra.mxu0 %v3426
        %v4245 = vpop.f32.mrf.mxu0
        %v4246 = vadd.f32 %v2933, %v4245
        %v4247 = vpop.f32.mrf.mxu0
        %v4248 = vadd.f32 %v2938, %v4247
        %4249 = vmatmul.bf16.gmra.mxu0 %v3428
        %v4250 = vpop.f32.mrf.mxu0
        %v4251 = vadd.f32 %v2943, %v4250
        %v4252 = vpop.f32.mrf.mxu0
        %v4253 = vadd.f32 %v2948, %v4252
        %4254 = vmatmul.bf16.gmra.mxu0 %v3430
        %v4255 = vpop.f32.mrf.mxu0
        %v4256 = vadd.f32 %v2953, %v4255
        %v4257 = vpop.f32.mrf.mxu0
        %v4258 = vadd.f32 %v2958, %v4257
        %4259 = vmatmul.bf16.gmra.mxu0 %v3432
        %v4260 = vpop.f32.mrf.mxu0
        %v4261 = vadd.f32 %v2963, %v4260
        %v4262 = vpop.f32.mrf.mxu0
        %v4263 = vadd.f32 %v2968, %v4262
        %4264 = vmatmul.bf16.gmra.mxu0 %v3434
        %v4265 = vpop.f32.mrf.mxu0
        %v4266 = vadd.f32 %v2973, %v4265
        %v4267 = vpop.f32.mrf.mxu0
        %v4268 = vadd.f32 %v2978, %v4267
        %4269 = vmatmul.bf16.gmra.mxu0 %v3436
        %v4270 = vpop.f32.mrf.mxu0
        %v4271 = vadd.f32 %v2983, %v4270
        %v4272 = vpop.f32.mrf.mxu0
        %v4273 = vadd.f32 %v2988, %v4272
        %4274 = vmatmul.bf16.gmra.mxu0 %v3438
        %v4275 = vpop.f32.mrf.mxu0
        %v4276 = vadd.f32 %v2993, %v4275
        %v4277 = vpop.f32.mrf.mxu0
        %v4278 = vadd.f32 %v2998, %v4277
        %4279 = vmatmul.bf16.gmra.mxu0 %v3440
        %v4280 = vpop.f32.mrf.mxu0
        %v4281 = vadd.f32 %v3003, %v4280
        %v4282 = vpop.f32.mrf.mxu0
        %v4283 = vadd.f32 %v3008, %v4282
        %4284 = vmatmul.bf16.gmra.mxu0 %v3442
        %v4285 = vpop.f32.mrf.mxu0
        %v4286 = vadd.f32 %v3013, %v4285
        %v4287 = vpop.f32.mrf.mxu0
        %v4288 = vadd.f32 %v3018, %v4287
        %4289 = vmatmul.bf16.gmra.mxu0 %v3444
        %v4290 = vpop.f32.mrf.mxu0
        %v4291 = vadd.f32 %v3023, %v4290
        %v4292 = vpop.f32.mrf.mxu0
        %v4293 = vadd.f32 %v3028, %v4292
        %4294 = vmatmul.bf16.gmra.mxu0 %v3446
        %v4295 = vpop.f32.mrf.mxu0
        %v4296 = vadd.f32 %v3033, %v4295
        %v4297 = vpop.f32.mrf.mxu0
        %v4298 = vadd.f32 %v3038, %v4297
        %4299 = vmatmul.bf16.gmra.mxu0 %v3448
        %v4300 = vpop.f32.mrf.mxu0
        %v4301 = vadd.f32 %v3043, %v4300
        %v4302 = vpop.f32.mrf.mxu0
        %v4303 = vadd.f32 %v3048, %v4302
        %4304 = vmatmul.bf16.gmra.mxu0 %v3450
        %v4305 = vpop.f32.mrf.mxu0
        %v4306 = vadd.f32 %v3053, %v4305
        %v4307 = vpop.f32.mrf.mxu0
        %v4308 = vadd.f32 %v3058, %v4307
        %4309 = vmatmul.bf16.gmra.mxu0 %v3452
        %v4310 = vpop.f32.mrf.mxu0
        %v4311 = vadd.f32 %v3063, %v4310
        %v4312 = vpop.f32.mrf.mxu0
        %v4313 = vadd.f32 %v3068, %v4312
        %4314 = vmatmul.bf16.gmra.mxu0 %v3454
        %v4315 = vpop.f32.mrf.mxu0
        %v4316 = vadd.f32 %v3073, %v4315
        %v4317 = vpop.f32.mrf.mxu0
        %v4318 = vadd.f32 %v3078, %v4317
        %4319 = vmatmul.bf16.gmra.mxu0 %v3456
        %v4320 = vpop.f32.mrf.mxu0
        %v4321 = vadd.f32 %v3083, %v4320
        %v4322 = vpop.f32.mrf.mxu0
        %v4323 = vadd.f32 %v3088, %v4322
        %4324 = vmatmul.bf16.gmra.mxu0 %v3458
        %v4325 = vpop.f32.mrf.mxu0
        %v4326 = vadd.f32 %v3093, %v4325
        %v4327 = vpop.f32.mrf.mxu0
        %v4328 = vadd.f32 %v3098, %v4327
        %4329 = vmatmul.bf16.gmra.mxu0 %v3460
        %v4330 = vpop.f32.mrf.mxu0
        %v4331 = vadd.f32 %v3103, %v4330
        %v4332 = vpop.f32.mrf.mxu0
        %v4333 = vadd.f32 %v3108, %v4332
        %4334 = vmatmul.bf16.gmra.mxu0 %v3462
        %v4335 = vpop.f32.mrf.mxu0
        %v4336 = vadd.f32 %v3113, %v4335
        %v4337 = vpop.f32.mrf.mxu0
        %v4338 = vadd.f32 %v3118, %v4337
        %4339 = vmatmul.bf16.gmra.mxu0 %v3464
        %v4340 = vpop.f32.mrf.mxu0
        %v4341 = vadd.f32 %v3123, %v4340
        %v4342 = vpop.f32.mrf.mxu0
        %v4343 = vadd.f32 %v3128, %v4342
        %4344 = vmatmul.bf16.gmra.mxu0 %v3466
        %v4345 = vpop.f32.mrf.mxu0
        %v4346 = vadd.f32 %v3133, %v4345
        %v4347 = vpop.f32.mrf.mxu0
        %v4348 = vadd.f32 %v3138, %v4347
        %4349 = vmatmul.bf16.gmra.mxu0 %v3468
        %v4350 = vpop.f32.mrf.mxu0
        %v4351 = vadd.f32 %v3143, %v4350
        %v4352 = vpop.f32.mrf.mxu0
        %v4353 = vadd.f32 %v3148, %v4352
        %4354 = vmatmul.bf16.gmra.mxu0 %v3470
        %v4355 = vpop.f32.mrf.mxu0
        %v4356 = vadd.f32 %v3153, %v4355
        %v4357 = vpop.f32.mrf.mxu0
        %v4358 = vadd.f32 %v3158, %v4357
        %4359 = vmatmul.bf16.gmra.mxu0 %v3472
        %v4360 = vpop.f32.mrf.mxu0
        %v4361 = vadd.f32 %v3163, %v4360
        %v4362 = vpop.f32.mrf.mxu0
        %v4363 = vadd.f32 %v3168, %v4362
        %4364 = vmatmul.bf16.gmra.mxu0 %v3474
        %v4365 = vpop.f32.mrf.mxu0
        %v4366 = vadd.f32 %v3173, %v4365
        %v4367 = vpop.f32.mrf.mxu0
        %v4368 = vadd.f32 %v3178, %v4367
        %4369 = vmatmul.bf16.gmra.mxu0 %v3476
        %v4370 = vpop.f32.mrf.mxu0
        %v4371 = vadd.f32 %v3183, %v4370
        %v4372 = vpop.f32.mrf.mxu0
        %v4373 = vadd.f32 %v3188, %v4372
        %4374 = vmatmul.bf16.gmra.mxu0 %v3478
        %v4375 = vpop.f32.mrf.mxu0
        %v4376 = vadd.f32 %v3193, %v4375
        %v4377 = vpop.f32.mrf.mxu0
        %v4378 = vadd.f32 %v3198, %v4377
        %4379 = vmatmul.bf16.gmra.mxu0 %v3480
        %v4380 = vpop.f32.mrf.mxu0
        %v4381 = vadd.f32 %v3203, %v4380
        %v4382 = vpop.f32.mrf.mxu0
        %v4383 = vadd.f32 %v3208, %v4382
        %4384 = vmatmul.bf16.gmra.mxu0 %v3482
        %v4385 = vpop.f32.mrf.mxu0
        %v4386 = vadd.f32 %v3213, %v4385
        %v4387 = vpop.f32.mrf.mxu0
        %v4388 = vadd.f32 %v3218, %v4387
        %4389 = vmatmul.bf16.gmra.mxu0 %v3484
        %v4390 = vpop.f32.mrf.mxu0
        %v4391 = vadd.f32 %v3223, %v4390
        %v4392 = vpop.f32.mrf.mxu0
        %v4393 = vadd.f32 %v3228, %v4392
        %4394 = vdwg.mxu0
        %4395 = vmatpush.bf16.msra.mxu0 %v2844
        %4396 = vmatpush.bf16.msra.mxu0 %v2840
        %4397 = vmatpush.bf16.msra.mxu0 %v2836
        %4398 = vmatpush.bf16.msra.mxu0 %v2832
        %4399 = vmatpush.bf16.msra.mxu0 %v2828
        %4400 = vmatpush.bf16.msra.mxu0 %v2824
        %4401 = vmatpush.bf16.msra.mxu0 %v2820
        %4402 = vmatpush.bf16.msra.mxu0 %v2816
        %4403 = vmatmul.bf16.gmra.mxu0 %v3423
        %v4404 = vpop.f32.mrf.mxu0
        %v4405 = vadd.f32 %v4236, %v4404
        %v4406 = vpop.f32.mrf.mxu0
        %v4407 = vadd.f32 %v4238, %v4406
        %4408 = vmatmul.bf16.gmra.mxu0 %v3425
        %v4409 = vpop.f32.mrf.mxu0
        %v4410 = vadd.f32 %v4241, %v4409
        %v4411 = vpop.f32.mrf.mxu0
        %v4412 = vadd.f32 %v4243, %v4411
        %4413 = vmatmul.bf16.gmra.mxu0 %v3427
        %v4414 = vpop.f32.mrf.mxu0
        %v4415 = vadd.f32 %v4246, %v4414
        %v4416 = vpop.f32.mrf.mxu0
        %v4417 = vadd.f32 %v4248, %v4416
        %4418 = vmatmul.bf16.gmra.mxu0 %v3429
        %v4419 = vpop.f32.mrf.mxu0
        %v4420 = vadd.f32 %v4251, %v4419
        %v4421 = vpop.f32.mrf.mxu0
        %v4422 = vadd.f32 %v4253, %v4421
        %4423 = vmatmul.bf16.gmra.mxu0 %v3431
        %v4424 = vpop.f32.mrf.mxu0
        %v4425 = vadd.f32 %v4256, %v4424
        %v4426 = vpop.f32.mrf.mxu0
        %v4427 = vadd.f32 %v4258, %v4426
        %4428 = vmatmul.bf16.gmra.mxu0 %v3433
        %v4429 = vpop.f32.mrf.mxu0
        %v4430 = vadd.f32 %v4261, %v4429
        %v4431 = vpop.f32.mrf.mxu0
        %v4432 = vadd.f32 %v4263, %v4431
        %4433 = vmatmul.bf16.gmra.mxu0 %v3435
        %v4434 = vpop.f32.mrf.mxu0
        %v4435 = vadd.f32 %v4266, %v4434
        %v4436 = vpop.f32.mrf.mxu0
        %v4437 = vadd.f32 %v4268, %v4436
        %4438 = vmatmul.bf16.gmra.mxu0 %v3437
        %v4439 = vpop.f32.mrf.mxu0
        %v4440 = vadd.f32 %v4271, %v4439
        %v4441 = vpop.f32.mrf.mxu0
        %v4442 = vadd.f32 %v4273, %v4441
        %4443 = vmatmul.bf16.gmra.mxu0 %v3439
        %v4444 = vpop.f32.mrf.mxu0
        %v4445 = vadd.f32 %v4276, %v4444
        %v4446 = vpop.f32.mrf.mxu0
        %v4447 = vadd.f32 %v4278, %v4446
        %4448 = vmatmul.bf16.gmra.mxu0 %v3441
        %v4449 = vpop.f32.mrf.mxu0
        %v4450 = vadd.f32 %v4281, %v4449
        %v4451 = vpop.f32.mrf.mxu0
        %v4452 = vadd.f32 %v4283, %v4451
        %4453 = vmatmul.bf16.gmra.mxu0 %v3443
        %v4454 = vpop.f32.mrf.mxu0
        %v4455 = vadd.f32 %v4286, %v4454
        %v4456 = vpop.f32.mrf.mxu0
        %v4457 = vadd.f32 %v4288, %v4456
        %4458 = vmatmul.bf16.gmra.mxu0 %v3445
        %v4459 = vpop.f32.mrf.mxu0
        %v4460 = vadd.f32 %v4291, %v4459
        %v4461 = vpop.f32.mrf.mxu0
        %v4462 = vadd.f32 %v4293, %v4461
        %4463 = vmatmul.bf16.gmra.mxu0 %v3447
        %v4464 = vpop.f32.mrf.mxu0
        %v4465 = vadd.f32 %v4296, %v4464
        %v4466 = vpop.f32.mrf.mxu0
        %v4467 = vadd.f32 %v4298, %v4466
        %4468 = vmatmul.bf16.gmra.mxu0 %v3449
        %v4469 = vpop.f32.mrf.mxu0
        %v4470 = vadd.f32 %v4301, %v4469
        %v4471 = vpop.f32.mrf.mxu0
        %v4472 = vadd.f32 %v4303, %v4471
        %4473 = vmatmul.bf16.gmra.mxu0 %v3451
        %v4474 = vpop.f32.mrf.mxu0
        %v4475 = vadd.f32 %v4306, %v4474
        %v4476 = vpop.f32.mrf.mxu0
        %v4477 = vadd.f32 %v4308, %v4476
        %4478 = vmatmul.bf16.gmra.mxu0 %v3453
        %v4479 = vpop.f32.mrf.mxu0
        %v4480 = vadd.f32 %v4311, %v4479
        %v4481 = vpop.f32.mrf.mxu0
        %v4482 = vadd.f32 %v4313, %v4481
        %4483 = vmatmul.bf16.gmra.mxu0 %v3455
        %v4484 = vpop.f32.mrf.mxu0
        %v4485 = vadd.f32 %v4316, %v4484
        %v4486 = vpop.f32.mrf.mxu0
        %v4487 = vadd.f32 %v4318, %v4486
        %4488 = vmatmul.bf16.gmra.mxu0 %v3457
        %v4489 = vpop.f32.mrf.mxu0
        %v4490 = vadd.f32 %v4321, %v4489
        %v4491 = vpop.f32.mrf.mxu0
        %v4492 = vadd.f32 %v4323, %v4491
        %4493 = vmatmul.bf16.gmra.mxu0 %v3459
        %v4494 = vpop.f32.mrf.mxu0
        %v4495 = vadd.f32 %v4326, %v4494
        %v4496 = vpop.f32.mrf.mxu0
        %v4497 = vadd.f32 %v4328, %v4496
        %4498 = vmatmul.bf16.gmra.mxu0 %v3461
        %v4499 = vpop.f32.mrf.mxu0
        %v4500 = vadd.f32 %v4331, %v4499
        %v4501 = vpop.f32.mrf.mxu0
        %v4502 = vadd.f32 %v4333, %v4501
        %4503 = vmatmul.bf16.gmra.mxu0 %v3463
        %v4504 = vpop.f32.mrf.mxu0
        %v4505 = vadd.f32 %v4336, %v4504
        %v4506 = vpop.f32.mrf.mxu0
        %v4507 = vadd.f32 %v4338, %v4506
        %4508 = vmatmul.bf16.gmra.mxu0 %v3465
        %v4509 = vpop.f32.mrf.mxu0
        %v4510 = vadd.f32 %v4341, %v4509
        %v4511 = vpop.f32.mrf.mxu0
        %v4512 = vadd.f32 %v4343, %v4511
        %4513 = vmatmul.bf16.gmra.mxu0 %v3467
        %v4514 = vpop.f32.mrf.mxu0
        %v4515 = vadd.f32 %v4346, %v4514
        %v4516 = vpop.f32.mrf.mxu0
        %v4517 = vadd.f32 %v4348, %v4516
        %4518 = vmatmul.bf16.gmra.mxu0 %v3469
        %v4519 = vpop.f32.mrf.mxu0
        %v4520 = vadd.f32 %v4351, %v4519
        %v4521 = vpop.f32.mrf.mxu0
        %v4522 = vadd.f32 %v4353, %v4521
        %4523 = vmatmul.bf16.gmra.mxu0 %v3471
        %v4524 = vpop.f32.mrf.mxu0
        %v4525 = vadd.f32 %v4356, %v4524
        %v4526 = vpop.f32.mrf.mxu0
        %v4527 = vadd.f32 %v4358, %v4526
        %4528 = vmatmul.bf16.gmra.mxu0 %v3473
        %v4529 = vpop.f32.mrf.mxu0
        %v4530 = vadd.f32 %v4361, %v4529
        %v4531 = vpop.f32.mrf.mxu0
        %v4532 = vadd.f32 %v4363, %v4531
        %4533 = vmatmul.bf16.gmra.mxu0 %v3475
        %v4534 = vpop.f32.mrf.mxu0
        %v4535 = vadd.f32 %v4366, %v4534
        %v4536 = vpop.f32.mrf.mxu0
        %v4537 = vadd.f32 %v4368, %v4536
        %4538 = vmatmul.bf16.gmra.mxu0 %v3477
        %v4539 = vpop.f32.mrf.mxu0
        %v4540 = vadd.f32 %v4371, %v4539
        %v4541 = vpop.f32.mrf.mxu0
        %v4542 = vadd.f32 %v4373, %v4541
        %4543 = vmatmul.bf16.gmra.mxu0 %v3479
        %v4544 = vpop.f32.mrf.mxu0
        %v4545 = vadd.f32 %v4376, %v4544
        %v4546 = vpop.f32.mrf.mxu0
        %v4547 = vadd.f32 %v4378, %v4546
        %4548 = vmatmul.bf16.gmra.mxu0 %v3481
        %v4549 = vpop.f32.mrf.mxu0
        %v4550 = vadd.f32 %v4381, %v4549
        %v4551 = vpop.f32.mrf.mxu0
        %v4552 = vadd.f32 %v4383, %v4551
        %4553 = vmatmul.bf16.gmra.mxu0 %v3483
        %v4554 = vpop.f32.mrf.mxu0
        %v4555 = vadd.f32 %v4386, %v4554
        %v4556 = vpop.f32.mrf.mxu0
        %v4557 = vadd.f32 %v4388, %v4556
        %4558 = vmatmul.bf16.gmra.mxu0 %v3485
        %v4559 = vpop.f32.mrf.mxu0
        %v4560 = vadd.f32 %v4391, %v4559
        %v4561 = vpop.f32.mrf.mxu0
        %v4562 = vadd.f32 %v4393, %v4561
        %4563 = vdwg.mxu0
        %4564 = vmatpush.bf16.msra.mxu0 %v2813
        %4565 = vmatpush.bf16.msra.mxu0 %v2809
        %4566 = vmatpush.bf16.msra.mxu0 %v2805
        %4567 = vmatpush.bf16.msra.mxu0 %v2801
        %4568 = vmatpush.bf16.msra.mxu0 %v2797
        %4569 = vmatpush.bf16.msra.mxu0 %v2793
        %4570 = vmatpush.bf16.msra.mxu0 %v2789
        %4571 = vmatpush.bf16.msra.mxu0 %v2785
        %4572 = vmatmul.bf16.gmra.mxu0 %v3422
        %v4573 = vpop.f32.mrf.mxu0
        %v4574 = vadd.f32 %v2913, %v4573
        %v4575 = vpop.f32.mrf.mxu0
        %v4576 = vadd.f32 %v2918, %v4575
        %4577 = vmatmul.bf16.gmra.mxu0 %v3424
        %v4578 = vpop.f32.mrf.mxu0
        %v4579 = vadd.f32 %v2923, %v4578
        %v4580 = vpop.f32.mrf.mxu0
        %v4581 = vadd.f32 %v2928, %v4580
        %4582 = vmatmul.bf16.gmra.mxu0 %v3426
        %v4583 = vpop.f32.mrf.mxu0
        %v4584 = vadd.f32 %v2933, %v4583
        %v4585 = vpop.f32.mrf.mxu0
        %v4586 = vadd.f32 %v2938, %v4585
        %4587 = vmatmul.bf16.gmra.mxu0 %v3428
        %v4588 = vpop.f32.mrf.mxu0
        %v4589 = vadd.f32 %v2943, %v4588
        %v4590 = vpop.f32.mrf.mxu0
        %v4591 = vadd.f32 %v2948, %v4590
        %4592 = vmatmul.bf16.gmra.mxu0 %v3430
        %v4593 = vpop.f32.mrf.mxu0
        %v4594 = vadd.f32 %v2953, %v4593
        %v4595 = vpop.f32.mrf.mxu0
        %v4596 = vadd.f32 %v2958, %v4595
        %4597 = vmatmul.bf16.gmra.mxu0 %v3432
        %v4598 = vpop.f32.mrf.mxu0
        %v4599 = vadd.f32 %v2963, %v4598
        %v4600 = vpop.f32.mrf.mxu0
        %v4601 = vadd.f32 %v2968, %v4600
        %4602 = vmatmul.bf16.gmra.mxu0 %v3434
        %v4603 = vpop.f32.mrf.mxu0
        %v4604 = vadd.f32 %v2973, %v4603
        %v4605 = vpop.f32.mrf.mxu0
        %v4606 = vadd.f32 %v2978, %v4605
        %4607 = vmatmul.bf16.gmra.mxu0 %v3436
        %v4608 = vpop.f32.mrf.mxu0
        %v4609 = vadd.f32 %v2983, %v4608
        %v4610 = vpop.f32.mrf.mxu0
        %v4611 = vadd.f32 %v2988, %v4610
        %4612 = vmatmul.bf16.gmra.mxu0 %v3438
        %v4613 = vpop.f32.mrf.mxu0
        %v4614 = vadd.f32 %v2993, %v4613
        %v4615 = vpop.f32.mrf.mxu0
        %v4616 = vadd.f32 %v2998, %v4615
        %4617 = vmatmul.bf16.gmra.mxu0 %v3440
        %v4618 = vpop.f32.mrf.mxu0
        %v4619 = vadd.f32 %v3003, %v4618
        %v4620 = vpop.f32.mrf.mxu0
        %v4621 = vadd.f32 %v3008, %v4620
        %4622 = vmatmul.bf16.gmra.mxu0 %v3442
        %v4623 = vpop.f32.mrf.mxu0
        %v4624 = vadd.f32 %v3013, %v4623
        %v4625 = vpop.f32.mrf.mxu0
        %v4626 = vadd.f32 %v3018, %v4625
        %4627 = vmatmul.bf16.gmra.mxu0 %v3444
        %v4628 = vpop.f32.mrf.mxu0
        %v4629 = vadd.f32 %v3023, %v4628
        %v4630 = vpop.f32.mrf.mxu0
        %v4631 = vadd.f32 %v3028, %v4630
        %4632 = vmatmul.bf16.gmra.mxu0 %v3446
        %v4633 = vpop.f32.mrf.mxu0
        %v4634 = vadd.f32 %v3033, %v4633
        %v4635 = vpop.f32.mrf.mxu0
        %v4636 = vadd.f32 %v3038, %v4635
        %4637 = vmatmul.bf16.gmra.mxu0 %v3448
        %v4638 = vpop.f32.mrf.mxu0
        %v4639 = vadd.f32 %v3043, %v4638
        %v4640 = vpop.f32.mrf.mxu0
        %v4641 = vadd.f32 %v3048, %v4640
        %4642 = vmatmul.bf16.gmra.mxu0 %v3450
        %v4643 = vpop.f32.mrf.mxu0
        %v4644 = vadd.f32 %v3053, %v4643
        %v4645 = vpop.f32.mrf.mxu0
        %v4646 = vadd.f32 %v3058, %v4645
        %4647 = vmatmul.bf16.gmra.mxu0 %v3452
        %v4648 = vpop.f32.mrf.mxu0
        %v4649 = vadd.f32 %v3063, %v4648
        %v4650 = vpop.f32.mrf.mxu0
        %v4651 = vadd.f32 %v3068, %v4650
        %4652 = vmatmul.bf16.gmra.mxu0 %v3454
        %v4653 = vpop.f32.mrf.mxu0
        %v4654 = vadd.f32 %v3073, %v4653
        %v4655 = vpop.f32.mrf.mxu0
        %v4656 = vadd.f32 %v3078, %v4655
        %4657 = vmatmul.bf16.gmra.mxu0 %v3456
        %v4658 = vpop.f32.mrf.mxu0
        %v4659 = vadd.f32 %v3083, %v4658
        %v4660 = vpop.f32.mrf.mxu0
        %v4661 = vadd.f32 %v3088, %v4660
        %4662 = vmatmul.bf16.gmra.mxu0 %v3458
        %v4663 = vpop.f32.mrf.mxu0
        %v4664 = vadd.f32 %v3093, %v4663
        %v4665 = vpop.f32.mrf.mxu0
        %v4666 = vadd.f32 %v3098, %v4665
        %4667 = vmatmul.bf16.gmra.mxu0 %v3460
        %v4668 = vpop.f32.mrf.mxu0
        %v4669 = vadd.f32 %v3103, %v4668
        %v4670 = vpop.f32.mrf.mxu0
        %v4671 = vadd.f32 %v3108, %v4670
        %4672 = vmatmul.bf16.gmra.mxu0 %v3462
        %v4673 = vpop.f32.mrf.mxu0
        %v4674 = vadd.f32 %v3113, %v4673
        %v4675 = vpop.f32.mrf.mxu0
        %v4676 = vadd.f32 %v3118, %v4675
        %4677 = vmatmul.bf16.gmra.mxu0 %v3464
        %v4678 = vpop.f32.mrf.mxu0
        %v4679 = vadd.f32 %v3123, %v4678
        %v4680 = vpop.f32.mrf.mxu0
        %v4681 = vadd.f32 %v3128, %v4680
        %4682 = vmatmul.bf16.gmra.mxu0 %v3466
        %v4683 = vpop.f32.mrf.mxu0
        %v4684 = vadd.f32 %v3133, %v4683
        %v4685 = vpop.f32.mrf.mxu0
        %v4686 = vadd.f32 %v3138, %v4685
        %4687 = vmatmul.bf16.gmra.mxu0 %v3468
        %v4688 = vpop.f32.mrf.mxu0
        %v4689 = vadd.f32 %v3143, %v4688
        %v4690 = vpop.f32.mrf.mxu0
        %v4691 = vadd.f32 %v3148, %v4690
        %4692 = vmatmul.bf16.gmra.mxu0 %v3470
        %v4693 = vpop.f32.mrf.mxu0
        %v4694 = vadd.f32 %v3153, %v4693
        %v4695 = vpop.f32.mrf.mxu0
        %v4696 = vadd.f32 %v3158, %v4695
        %4697 = vmatmul.bf16.gmra.mxu0 %v3472
        %v4698 = vpop.f32.mrf.mxu0
        %v4699 = vadd.f32 %v3163, %v4698
        %v4700 = vpop.f32.mrf.mxu0
        %v4701 = vadd.f32 %v3168, %v4700
        %4702 = vmatmul.bf16.gmra.mxu0 %v3474
        %v4703 = vpop.f32.mrf.mxu0
        %v4704 = vadd.f32 %v3173, %v4703
        %v4705 = vpop.f32.mrf.mxu0
        %v4706 = vadd.f32 %v3178, %v4705
        %4707 = vmatmul.bf16.gmra.mxu0 %v3476
        %v4708 = vpop.f32.mrf.mxu0
        %v4709 = vadd.f32 %v3183, %v4708
        %v4710 = vpop.f32.mrf.mxu0
        %v4711 = vadd.f32 %v3188, %v4710
        %4712 = vmatmul.bf16.gmra.mxu0 %v3478
        %v4713 = vpop.f32.mrf.mxu0
        %v4714 = vadd.f32 %v3193, %v4713
        %v4715 = vpop.f32.mrf.mxu0
        %v4716 = vadd.f32 %v3198, %v4715
        %4717 = vmatmul.bf16.gmra.mxu0 %v3480
        %v4718 = vpop.f32.mrf.mxu0
        %v4719 = vadd.f32 %v3203, %v4718
        %v4720 = vpop.f32.mrf.mxu0
        %v4721 = vadd.f32 %v3208, %v4720
        %4722 = vmatmul.bf16.gmra.mxu0 %v3482
        %v4723 = vpop.f32.mrf.mxu0
        %v4724 = vadd.f32 %v3213, %v4723
        %v4725 = vpop.f32.mrf.mxu0
        %v4726 = vadd.f32 %v3218, %v4725
        %4727 = vmatmul.bf16.gmra.mxu0 %v3484
        %v4728 = vpop.f32.mrf.mxu0
        %v4729 = vadd.f32 %v3223, %v4728
        %v4730 = vpop.f32.mrf.mxu0
        %v4731 = vadd.f32 %v3228, %v4730
        %4732 = vdwg.mxu0
        %4733 = vmatpush.bf16.msra.mxu0 %v2845
        %4734 = vmatpush.bf16.msra.mxu0 %v2841
        %4735 = vmatpush.bf16.msra.mxu0 %v2837
        %4736 = vmatpush.bf16.msra.mxu0 %v2833
        %4737 = vmatpush.bf16.msra.mxu0 %v2829
        %4738 = vmatpush.bf16.msra.mxu0 %v2825
        %4739 = vmatpush.bf16.msra.mxu0 %v2821
        %4740 = vmatpush.bf16.msra.mxu0 %v2817
        %4741 = vmatmul.bf16.gmra.mxu0 %v3423
        %v4742 = vpop.f32.mrf.mxu0
        %v4743 = vadd.f32 %v4574, %v4742
        %v4744 = vpop.f32.mrf.mxu0
        %v4745 = vadd.f32 %v4576, %v4744
        %4746 = vmatmul.bf16.gmra.mxu0 %v3425
        %v4747 = vpop.f32.mrf.mxu0
        %v4748 = vadd.f32 %v4579, %v4747
        %v4749 = vpop.f32.mrf.mxu0
        %v4750 = vadd.f32 %v4581, %v4749
        %4751 = vmatmul.bf16.gmra.mxu0 %v3427
        %v4752 = vpop.f32.mrf.mxu0
        %v4753 = vadd.f32 %v4584, %v4752
        %v4754 = vpop.f32.mrf.mxu0
        %v4755 = vadd.f32 %v4586, %v4754
        %4756 = vmatmul.bf16.gmra.mxu0 %v3429
        %v4757 = vpop.f32.mrf.mxu0
        %v4758 = vadd.f32 %v4589, %v4757
        %v4759 = vpop.f32.mrf.mxu0
        %v4760 = vadd.f32 %v4591, %v4759
        %4761 = vmatmul.bf16.gmra.mxu0 %v3431
        %v4762 = vpop.f32.mrf.mxu0
        %v4763 = vadd.f32 %v4594, %v4762
        %v4764 = vpop.f32.mrf.mxu0
        %v4765 = vadd.f32 %v4596, %v4764
        %4766 = vmatmul.bf16.gmra.mxu0 %v3433
        %v4767 = vpop.f32.mrf.mxu0
        %v4768 = vadd.f32 %v4599, %v4767
        %v4769 = vpop.f32.mrf.mxu0
        %v4770 = vadd.f32 %v4601, %v4769
        %4771 = vmatmul.bf16.gmra.mxu0 %v3435
        %v4772 = vpop.f32.mrf.mxu0
        %v4773 = vadd.f32 %v4604, %v4772
        %v4774 = vpop.f32.mrf.mxu0
        %v4775 = vadd.f32 %v4606, %v4774
        %4776 = vmatmul.bf16.gmra.mxu0 %v3437
        %v4777 = vpop.f32.mrf.mxu0
        %v4778 = vadd.f32 %v4609, %v4777
        %v4779 = vpop.f32.mrf.mxu0
        %v4780 = vadd.f32 %v4611, %v4779
        %4781 = vmatmul.bf16.gmra.mxu0 %v3439
        %v4782 = vpop.f32.mrf.mxu0
        %v4783 = vadd.f32 %v4614, %v4782
        %v4784 = vpop.f32.mrf.mxu0
        %v4785 = vadd.f32 %v4616, %v4784
        %4786 = vmatmul.bf16.gmra.mxu0 %v3441
        %v4787 = vpop.f32.mrf.mxu0
        %v4788 = vadd.f32 %v4619, %v4787
        %v4789 = vpop.f32.mrf.mxu0
        %v4790 = vadd.f32 %v4621, %v4789
        %4791 = vmatmul.bf16.gmra.mxu0 %v3443
        %v4792 = vpop.f32.mrf.mxu0
        %v4793 = vadd.f32 %v4624, %v4792
        %v4794 = vpop.f32.mrf.mxu0
        %v4795 = vadd.f32 %v4626, %v4794
        %4796 = vmatmul.bf16.gmra.mxu0 %v3445
        %v4797 = vpop.f32.mrf.mxu0
        %v4798 = vadd.f32 %v4629, %v4797
        %v4799 = vpop.f32.mrf.mxu0
        %v4800 = vadd.f32 %v4631, %v4799
        %4801 = vmatmul.bf16.gmra.mxu0 %v3447
        %v4802 = vpop.f32.mrf.mxu0
        %v4803 = vadd.f32 %v4634, %v4802
        %v4804 = vpop.f32.mrf.mxu0
        %v4805 = vadd.f32 %v4636, %v4804
        %4806 = vmatmul.bf16.gmra.mxu0 %v3449
        %v4807 = vpop.f32.mrf.mxu0
        %v4808 = vadd.f32 %v4639, %v4807
        %v4809 = vpop.f32.mrf.mxu0
        %v4810 = vadd.f32 %v4641, %v4809
        %4811 = vmatmul.bf16.gmra.mxu0 %v3451
        %v4812 = vpop.f32.mrf.mxu0
        %v4813 = vadd.f32 %v4644, %v4812
        %v4814 = vpop.f32.mrf.mxu0
        %v4815 = vadd.f32 %v4646, %v4814
        %4816 = vmatmul.bf16.gmra.mxu0 %v3453
        %v4817 = vpop.f32.mrf.mxu0
        %v4818 = vadd.f32 %v4649, %v4817
        %v4819 = vpop.f32.mrf.mxu0
        %v4820 = vadd.f32 %v4651, %v4819
        %4821 = vmatmul.bf16.gmra.mxu0 %v3455
        %v4822 = vpop.f32.mrf.mxu0
        %v4823 = vadd.f32 %v4654, %v4822
        %v4824 = vpop.f32.mrf.mxu0
        %v4825 = vadd.f32 %v4656, %v4824
        %4826 = vmatmul.bf16.gmra.mxu0 %v3457
        %v4827 = vpop.f32.mrf.mxu0
        %v4828 = vadd.f32 %v4659, %v4827
        %v4829 = vpop.f32.mrf.mxu0
        %v4830 = vadd.f32 %v4661, %v4829
        %4831 = vmatmul.bf16.gmra.mxu0 %v3459
        %v4832 = vpop.f32.mrf.mxu0
        %v4833 = vadd.f32 %v4664, %v4832
        %v4834 = vpop.f32.mrf.mxu0
        %v4835 = vadd.f32 %v4666, %v4834
        %4836 = vmatmul.bf16.gmra.mxu0 %v3461
        %v4837 = vpop.f32.mrf.mxu0
        %v4838 = vadd.f32 %v4669, %v4837
        %v4839 = vpop.f32.mrf.mxu0
        %v4840 = vadd.f32 %v4671, %v4839
        %4841 = vmatmul.bf16.gmra.mxu0 %v3463
        %v4842 = vpop.f32.mrf.mxu0
        %v4843 = vadd.f32 %v4674, %v4842
        %v4844 = vpop.f32.mrf.mxu0
        %v4845 = vadd.f32 %v4676, %v4844
        %4846 = vmatmul.bf16.gmra.mxu0 %v3465
        %v4847 = vpop.f32.mrf.mxu0
        %v4848 = vadd.f32 %v4679, %v4847
        %v4849 = vpop.f32.mrf.mxu0
        %v4850 = vadd.f32 %v4681, %v4849
        %4851 = vmatmul.bf16.gmra.mxu0 %v3467
        %v4852 = vpop.f32.mrf.mxu0
        %v4853 = vadd.f32 %v4684, %v4852
        %v4854 = vpop.f32.mrf.mxu0
        %v4855 = vadd.f32 %v4686, %v4854
        %4856 = vmatmul.bf16.gmra.mxu0 %v3469
        %v4857 = vpop.f32.mrf.mxu0
        %v4858 = vadd.f32 %v4689, %v4857
        %v4859 = vpop.f32.mrf.mxu0
        %v4860 = vadd.f32 %v4691, %v4859
        %4861 = vmatmul.bf16.gmra.mxu0 %v3471
        %v4862 = vpop.f32.mrf.mxu0
        %v4863 = vadd.f32 %v4694, %v4862
        %v4864 = vpop.f32.mrf.mxu0
        %v4865 = vadd.f32 %v4696, %v4864
        %4866 = vmatmul.bf16.gmra.mxu0 %v3473
        %v4867 = vpop.f32.mrf.mxu0
        %v4868 = vadd.f32 %v4699, %v4867
        %v4869 = vpop.f32.mrf.mxu0
        %v4870 = vadd.f32 %v4701, %v4869
        %4871 = vmatmul.bf16.gmra.mxu0 %v3475
        %v4872 = vpop.f32.mrf.mxu0
        %v4873 = vadd.f32 %v4704, %v4872
        %v4874 = vpop.f32.mrf.mxu0
        %v4875 = vadd.f32 %v4706, %v4874
        %4876 = vmatmul.bf16.gmra.mxu0 %v3477
        %v4877 = vpop.f32.mrf.mxu0
        %v4878 = vadd.f32 %v4709, %v4877
        %v4879 = vpop.f32.mrf.mxu0
        %v4880 = vadd.f32 %v4711, %v4879
        %4881 = vmatmul.bf16.gmra.mxu0 %v3479
        %v4882 = vpop.f32.mrf.mxu0
        %v4883 = vadd.f32 %v4714, %v4882
        %v4884 = vpop.f32.mrf.mxu0
        %v4885 = vadd.f32 %v4716, %v4884
        %4886 = vmatmul.bf16.gmra.mxu0 %v3481
        %v4887 = vpop.f32.mrf.mxu0
        %v4888 = vadd.f32 %v4719, %v4887
        %v4889 = vpop.f32.mrf.mxu0
        %v4890 = vadd.f32 %v4721, %v4889
        %4891 = vmatmul.bf16.gmra.mxu0 %v3483
        %v4892 = vpop.f32.mrf.mxu0
        %v4893 = vadd.f32 %v4724, %v4892
        %v4894 = vpop.f32.mrf.mxu0
        %v4895 = vadd.f32 %v4726, %v4894
        %4896 = vmatmul.bf16.gmra.mxu0 %v3485
        %v4897 = vpop.f32.mrf.mxu0
        %v4898 = vadd.f32 %v4729, %v4897
        %v4899 = vpop.f32.mrf.mxu0
        %v4900 = vadd.f32 %v4731, %v4899
        %4901 = vdwg.mxu0
        %v4902 = vmax.f32 %v3729, %v4067
        %v4903 = vmax.f32 %v3731, %v4069
        %v4904 = vmax.f32 %v3734, %v4072
        %v4905 = vmax.f32 %v3736, %v4074
        %v4906 = vmax.f32 %v3739, %v4077
        %v4907 = vmax.f32 %v3741, %v4079
        %v4908 = vmax.f32 %v3744, %v4082
        %v4909 = vmax.f32 %v3746, %v4084
        %v4910 = vmax.f32 %v3749, %v4087
        %v4911 = vmax.f32 %v3751, %v4089
        %v4912 = vmax.f32 %v3754, %v4092
        %v4913 = vmax.f32 %v3756, %v4094
        %v4914 = vmax.f32 %v3759, %v4097
        %v4915 = vmax.f32 %v3761, %v4099
        %v4916 = vmax.f32 %v3764, %v4102
        %v4917 = vmax.f32 %v3766, %v4104
        %v4918 = vmax.f32 %v3769, %v4107
        %v4919 = vmax.f32 %v3771, %v4109
        %v4920 = vmax.f32 %v3774, %v4112
        %v4921 = vmax.f32 %v3776, %v4114
        %v4922 = vmax.f32 %v3779, %v4117
        %v4923 = vmax.f32 %v3781, %v4119
        %v4924 = vmax.f32 %v3784, %v4122
        %v4925 = vmax.f32 %v3786, %v4124
        %v4926 = vmax.f32 %v3789, %v4127
        %v4927 = vmax.f32 %v3791, %v4129
        %v4928 = vmax.f32 %v3794, %v4132
        %v4929 = vmax.f32 %v3796, %v4134
        %v4930 = vmax.f32 %v3799, %v4137
        %v4931 = vmax.f32 %v3801, %v4139
        %v4932 = vmax.f32 %v3804, %v4142
        %v4933 = vmax.f32 %v3806, %v4144
        %v4934 = vmax.f32 %v3809, %v4147
        %v4935 = vmax.f32 %v3811, %v4149
        %v4936 = vmax.f32 %v3814, %v4152
        %v4937 = vmax.f32 %v3816, %v4154
        %v4938 = vmax.f32 %v3819, %v4157
        %v4939 = vmax.f32 %v3821, %v4159
        %v4940 = vmax.f32 %v3824, %v4162
        %v4941 = vmax.f32 %v3826, %v4164
        %v4942 = vmax.f32 %v3829, %v4167
        %v4943 = vmax.f32 %v3831, %v4169
        %v4944 = vmax.f32 %v3834, %v4172
        %v4945 = vmax.f32 %v3836, %v4174
        %v4946 = vmax.f32 %v3839, %v4177
        %v4947 = vmax.f32 %v3841, %v4179
        %v4948 = vmax.f32 %v3844, %v4182
        %v4949 = vmax.f32 %v3846, %v4184
        %v4950 = vmax.f32 %v3849, %v4187
        %v4951 = vmax.f32 %v3851, %v4189
        %v4952 = vmax.f32 %v3854, %v4192
        %v4953 = vmax.f32 %v3856, %v4194
        %v4954 = vmax.f32 %v3859, %v4197
        %v4955 = vmax.f32 %v3861, %v4199
        %v4956 = vmax.f32 %v3864, %v4202
        %v4957 = vmax.f32 %v3866, %v4204
        %v4958 = vmax.f32 %v3869, %v4207
        %v4959 = vmax.f32 %v3871, %v4209
        %v4960 = vmax.f32 %v3874, %v4212
        %v4961 = vmax.f32 %v3876, %v4214
        %v4962 = vmax.f32 %v3879, %v4217
        %v4963 = vmax.f32 %v3881, %v4219
        %v4964 = vmax.f32 %v3884, %v4222
        %v4965 = vmax.f32 %v3886, %v4224
        %v4966 = vmax.f32 %v4902, %v4405
        %v4967 = vmax.f32 %v4903, %v4407
        %v4968 = vmax.f32 %v4904, %v4410
        %v4969 = vmax.f32 %v4905, %v4412
        %v4970 = vmax.f32 %v4906, %v4415
        %v4971 = vmax.f32 %v4907, %v4417
        %v4972 = vmax.f32 %v4908, %v4420
        %v4973 = vmax.f32 %v4909, %v4422
        %v4974 = vmax.f32 %v4910, %v4425
        %v4975 = vmax.f32 %v4911, %v4427
        %v4976 = vmax.f32 %v4912, %v4430
        %v4977 = vmax.f32 %v4913, %v4432
        %v4978 = vmax.f32 %v4914, %v4435
        %v4979 = vmax.f32 %v4915, %v4437
        %v4980 = vmax.f32 %v4916, %v4440
        %v4981 = vmax.f32 %v4917, %v4442
        %v4982 = vmax.f32 %v4918, %v4445
        %v4983 = vmax.f32 %v4919, %v4447
        %v4984 = vmax.f32 %v4920, %v4450
        %v4985 = vmax.f32 %v4921, %v4452
        %v4986 = vmax.f32 %v4922, %v4455
        %v4987 = vmax.f32 %v4923, %v4457
        %v4988 = vmax.f32 %v4924, %v4460
        %v4989 = vmax.f32 %v4925, %v4462
        %v4990 = vmax.f32 %v4926, %v4465
        %v4991 = vmax.f32 %v4927, %v4467
        %v4992 = vmax.f32 %v4928, %v4470
        %v4993 = vmax.f32 %v4929, %v4472
        %v4994 = vmax.f32 %v4930, %v4475
        %v4995 = vmax.f32 %v4931, %v4477
        %v4996 = vmax.f32 %v4932, %v4480
        %v4997 = vmax.f32 %v4933, %v4482
        %v4998 = vmax.f32 %v4934, %v4485
        %v4999 = vmax.f32 %v4935, %v4487
        %v5000 = vmax.f32 %v4936, %v4490
        %v5001 = vmax.f32 %v4937, %v4492
        %v5002 = vmax.f32 %v4938, %v4495
        %v5003 = vmax.f32 %v4939, %v4497
        %v5004 = vmax.f32 %v4940, %v4500
        %v5005 = vmax.f32 %v4941, %v4502
        %v5006 = vmax.f32 %v4942, %v4505
        %v5007 = vmax.f32 %v4943, %v4507
        %v5008 = vmax.f32 %v4944, %v4510
        %v5009 = vmax.f32 %v4945, %v4512
        %v5010 = vmax.f32 %v4946, %v4515
        %v5011 = vmax.f32 %v4947, %v4517
        %v5012 = vmax.f32 %v4948, %v4520
        %v5013 = vmax.f32 %v4949, %v4522
        %v5014 = vmax.f32 %v4950, %v4525
        %v5015 = vmax.f32 %v4951, %v4527
        %v5016 = vmax.f32 %v4952, %v4530
        %v5017 = vmax.f32 %v4953, %v4532
        %v5018 = vmax.f32 %v4954, %v4535
        %v5019 = vmax.f32 %v4955, %v4537
        %v5020 = vmax.f32 %v4956, %v4540
        %v5021 = vmax.f32 %v4957, %v4542
        %v5022 = vmax.f32 %v4958, %v4545
        %v5023 = vmax.f32 %v4959, %v4547
        %v5024 = vmax.f32 %v4960, %v4550
        %v5025 = vmax.f32 %v4961, %v4552
        %v5026 = vmax.f32 %v4962, %v4555
        %v5027 = vmax.f32 %v4963, %v4557
        %v5028 = vmax.f32 %v4964, %v4560
        %v5029 = vmax.f32 %v4965, %v4562
        %v5030 = vmax.f32 %v4966, %v4743
        %v5031 = vmax.f32 %v4967, %v4745
        %v5032 = vmax.f32 %v4968, %v4748
        %v5033 = vmax.f32 %v4969, %v4750
        %v5034 = vmax.f32 %v4970, %v4753
        %v5035 = vmax.f32 %v4971, %v4755
        %v5036 = vmax.f32 %v4972, %v4758
        %v5037 = vmax.f32 %v4973, %v4760
        %v5038 = vmax.f32 %v4974, %v4763
        %v5039 = vmax.f32 %v4975, %v4765
        %v5040 = vmax.f32 %v4976, %v4768
        %v5041 = vmax.f32 %v4977, %v4770
        %v5042 = vmax.f32 %v4978, %v4773
        %v5043 = vmax.f32 %v4979, %v4775
        %v5044 = vmax.f32 %v4980, %v4778
        %v5045 = vmax.f32 %v4981, %v4780
        %v5046 = vmax.f32 %v4982, %v4783
        %v5047 = vmax.f32 %v4983, %v4785
        %v5048 = vmax.f32 %v4984, %v4788
        %v5049 = vmax.f32 %v4985, %v4790
        %v5050 = vmax.f32 %v4986, %v4793
        %v5051 = vmax.f32 %v4987, %v4795
        %v5052 = vmax.f32 %v4988, %v4798
        %v5053 = vmax.f32 %v4989, %v4800
        %v5054 = vmax.f32 %v4990, %v4803
        %v5055 = vmax.f32 %v4991, %v4805
        %v5056 = vmax.f32 %v4992, %v4808
        %v5057 = vmax.f32 %v4993, %v4810
        %v5058 = vmax.f32 %v4994, %v4813
        %v5059 = vmax.f32 %v4995, %v4815
        %v5060 = vmax.f32 %v4996, %v4818
        %v5061 = vmax.f32 %v4997, %v4820
        %v5062 = vmax.f32 %v4998, %v4823
        %v5063 = vmax.f32 %v4999, %v4825
        %v5064 = vmax.f32 %v5000, %v4828
        %v5065 = vmax.f32 %v5001, %v4830
        %v5066 = vmax.f32 %v5002, %v4833
        %v5067 = vmax.f32 %v5003, %v4835
        %v5068 = vmax.f32 %v5004, %v4838
        %v5069 = vmax.f32 %v5005, %v4840
        %v5070 = vmax.f32 %v5006, %v4843
        %v5071 = vmax.f32 %v5007, %v4845
        %v5072 = vmax.f32 %v5008, %v4848
        %v5073 = vmax.f32 %v5009, %v4850
        %v5074 = vmax.f32 %v5010, %v4853
        %v5075 = vmax.f32 %v5011, %v4855
        %v5076 = vmax.f32 %v5012, %v4858
        %v5077 = vmax.f32 %v5013, %v4860
        %v5078 = vmax.f32 %v5014, %v4863
        %v5079 = vmax.f32 %v5015, %v4865
        %v5080 = vmax.f32 %v5016, %v4868
        %v5081 = vmax.f32 %v5017, %v4870
        %v5082 = vmax.f32 %v5018, %v4873
        %v5083 = vmax.f32 %v5019, %v4875
        %v5084 = vmax.f32 %v5020, %v4878
        %v5085 = vmax.f32 %v5021, %v4880
        %v5086 = vmax.f32 %v5022, %v4883
        %v5087 = vmax.f32 %v5023, %v4885
        %v5088 = vmax.f32 %v5024, %v4888
        %v5089 = vmax.f32 %v5025, %v4890
        %v5090 = vmax.f32 %v5026, %v4893
        %v5091 = vmax.f32 %v5027, %v4895
        %v5092 = vmax.f32 %v5028, %v4898
        %v5093 = vmax.f32 %v5029, %v4900
        %v5094 = vld [vmem:[#allocation2] sm:$0xff]
        %v5095 = vld [vmem:[#allocation2 + $0x8] sm:$0xff]
        %v5096 = vld [vmem:[#allocation2 + $0x10] sm:$0xff]
        %v5097 = vld [vmem:[#allocation2 + $0x18] sm:$0xff]
        %v5098 = vld [vmem:[#allocation2 + $0x20] sm:$0xff]
        %v5099 = vld [vmem:[#allocation2 + $0x28] sm:$0xff]
        %v5100 = vld [vmem:[#allocation2 + $0x30] sm:$0xff]
        %v5101 = vld [vmem:[#allocation2 + $0x38] sm:$0xff]
        %v5102 = vld [vmem:[#allocation2 + $0x40] sm:$0xff]
        %v5103 = vld [vmem:[#allocation2 + $0x48] sm:$0xff]
        %v5104 = vld [vmem:[#allocation2 + $0x50] sm:$0xff]
        %v5105 = vld [vmem:[#allocation2 + $0x58] sm:$0xff]
        %v5106 = vld [vmem:[#allocation2 + $0x60] sm:$0xff]
        %v5107 = vld [vmem:[#allocation2 + $0x68] sm:$0xff]
        %v5108 = vld [vmem:[#allocation2 + $0x70] sm:$0xff]
        %v5109 = vld [vmem:[#allocation2 + $0x78] sm:$0xff]
        %v5110 = vld [vmem:[#allocation2 + $0x80] sm:$0xff]
        %v5111 = vld [vmem:[#allocation2 + $0x88] sm:$0xff]
        %v5112 = vld [vmem:[#allocation2 + $0x90] sm:$0xff]
        %v5113 = vld [vmem:[#allocation2 + $0x98] sm:$0xff]
        %v5114 = vld [vmem:[#allocation2 + $0xa0] sm:$0xff]
        %v5115 = vld [vmem:[#allocation2 + $0xa8] sm:$0xff]
        %v5116 = vld [vmem:[#allocation2 + $0xb0] sm:$0xff]
        %v5117 = vld [vmem:[#allocation2 + $0xb8] sm:$0xff]
        %v5118 = vld [vmem:[#allocation2 + $0xc0] sm:$0xff]
        %v5119 = vld [vmem:[#allocation2 + $0xc8] sm:$0xff]
        %v5120 = vld [vmem:[#allocation2 + $0xd0] sm:$0xff]
        %v5121 = vld [vmem:[#allocation2 + $0xd8] sm:$0xff]
        %v5122 = vld [vmem:[#allocation2 + $0xe0] sm:$0xff]
        %v5123 = vld [vmem:[#allocation2 + $0xe8] sm:$0xff]
        %v5124 = vld [vmem:[#allocation2 + $0xf0] sm:$0xff]
        %v5125 = vld [vmem:[#allocation2 + $0xf8] sm:$0xff]
        %v5126 = vld [vmem:[#allocation2 + $0x100] sm:$0xff]
        %v5127 = vld [vmem:[#allocation2 + $0x108] sm:$0xff]
        %v5128 = vld [vmem:[#allocation2 + $0x110] sm:$0xff]
        %v5129 = vld [vmem:[#allocation2 + $0x118] sm:$0xff]
        %v5130 = vld [vmem:[#allocation2 + $0x120] sm:$0xff]
        %v5131 = vld [vmem:[#allocation2 + $0x128] sm:$0xff]
        %v5132 = vld [vmem:[#allocation2 + $0x130] sm:$0xff]
        %v5133 = vld [vmem:[#allocation2 + $0x138] sm:$0xff]
        %v5134 = vld [vmem:[#allocation2 + $0x140] sm:$0xff]
        %v5135 = vld [vmem:[#allocation2 + $0x148] sm:$0xff]
        %v5136 = vld [vmem:[#allocation2 + $0x150] sm:$0xff]
        %v5137 = vld [vmem:[#allocation2 + $0x158] sm:$0xff]
        %v5138 = vld [vmem:[#allocation2 + $0x160] sm:$0xff]
        %v5139 = vld [vmem:[#allocation2 + $0x168] sm:$0xff]
        %v5140 = vld [vmem:[#allocation2 + $0x170] sm:$0xff]
        %v5141 = vld [vmem:[#allocation2 + $0x178] sm:$0xff]
        %v5142 = vld [vmem:[#allocation2 + $0x180] sm:$0xff]
        %v5143 = vld [vmem:[#allocation2 + $0x188] sm:$0xff]
        %v5144 = vld [vmem:[#allocation2 + $0x190] sm:$0xff]
        %v5145 = vld [vmem:[#allocation2 + $0x198] sm:$0xff]
        %v5146 = vld [vmem:[#allocation2 + $0x1a0] sm:$0xff]
        %v5147 = vld [vmem:[#allocation2 + $0x1a8] sm:$0xff]
        %v5148 = vld [vmem:[#allocation2 + $0x1b0] sm:$0xff]
        %v5149 = vld [vmem:[#allocation2 + $0x1b8] sm:$0xff]
        %v5150 = vld [vmem:[#allocation2 + $0x1c0] sm:$0xff]
        %v5151 = vld [vmem:[#allocation2 + $0x1c8] sm:$0xff]
        %v5152 = vld [vmem:[#allocation2 + $0x1d0] sm:$0xff]
        %v5153 = vld [vmem:[#allocation2 + $0x1d8] sm:$0xff]
        %v5154 = vld [vmem:[#allocation2 + $0x1e0] sm:$0xff]
        %v5155 = vld [vmem:[#allocation2 + $0x1e8] sm:$0xff]
        %v5156 = vld [vmem:[#allocation2 + $0x1f0] sm:$0xff]
        %v5157 = vld [vmem:[#allocation2 + $0x1f8] sm:$0xff]
        %v5158 = vmax.f32 %v5094, %v5030
        %v5159 = vmax.f32 %v5095, %v5031
        %v5160 = vmax.f32 %v5096, %v5032
        %v5161 = vmax.f32 %v5097, %v5033
        %v5162 = vmax.f32 %v5098, %v5034
        %v5163 = vmax.f32 %v5099, %v5035
        %v5164 = vmax.f32 %v5100, %v5036
        %v5165 = vmax.f32 %v5101, %v5037
        %v5166 = vmax.f32 %v5102, %v5038
        %v5167 = vmax.f32 %v5103, %v5039
        %v5168 = vmax.f32 %v5104, %v5040
        %v5169 = vmax.f32 %v5105, %v5041
        %v5170 = vmax.f32 %v5106, %v5042
        %v5171 = vmax.f32 %v5107, %v5043
        %v5172 = vmax.f32 %v5108, %v5044
        %v5173 = vmax.f32 %v5109, %v5045
        %v5174 = vmax.f32 %v5110, %v5046
        %v5175 = vmax.f32 %v5111, %v5047
        %v5176 = vmax.f32 %v5112, %v5048
        %v5177 = vmax.f32 %v5113, %v5049
        %v5178 = vmax.f32 %v5114, %v5050
        %v5179 = vmax.f32 %v5115, %v5051
        %v5180 = vmax.f32 %v5116, %v5052
        %v5181 = vmax.f32 %v5117, %v5053
        %v5182 = vmax.f32 %v5118, %v5054
        %v5183 = vmax.f32 %v5119, %v5055
        %v5184 = vmax.f32 %v5120, %v5056
        %v5185 = vmax.f32 %v5121, %v5057
        %v5186 = vmax.f32 %v5122, %v5058
        %v5187 = vmax.f32 %v5123, %v5059
        %v5188 = vmax.f32 %v5124, %v5060
        %v5189 = vmax.f32 %v5125, %v5061
        %v5190 = vmax.f32 %v5126, %v5062
        %v5191 = vmax.f32 %v5127, %v5063
        %v5192 = vmax.f32 %v5128, %v5064
        %v5193 = vmax.f32 %v5129, %v5065
        %v5194 = vmax.f32 %v5130, %v5066
        %v5195 = vmax.f32 %v5131, %v5067
        %v5196 = vmax.f32 %v5132, %v5068
        %v5197 = vmax.f32 %v5133, %v5069
        %v5198 = vmax.f32 %v5134, %v5070
        %v5199 = vmax.f32 %v5135, %v5071
        %v5200 = vmax.f32 %v5136, %v5072
        %v5201 = vmax.f32 %v5137, %v5073
        %v5202 = vmax.f32 %v5138, %v5074
        %v5203 = vmax.f32 %v5139, %v5075
        %v5204 = vmax.f32 %v5140, %v5076
        %v5205 = vmax.f32 %v5141, %v5077
        %v5206 = vmax.f32 %v5142, %v5078
        %v5207 = vmax.f32 %v5143, %v5079
        %v5208 = vmax.f32 %v5144, %v5080
        %v5209 = vmax.f32 %v5145, %v5081
        %v5210 = vmax.f32 %v5146, %v5082
        %v5211 = vmax.f32 %v5147, %v5083
        %v5212 = vmax.f32 %v5148, %v5084
        %v5213 = vmax.f32 %v5149, %v5085
        %v5214 = vmax.f32 %v5150, %v5086
        %v5215 = vmax.f32 %v5151, %v5087
        %v5216 = vmax.f32 %v5152, %v5088
        %v5217 = vmax.f32 %v5153, %v5089
        %v5218 = vmax.f32 %v5154, %v5090
        %v5219 = vmax.f32 %v5155, %v5091
        %v5220 = vmax.f32 %v5156, %v5092
        %v5221 = vmax.f32 %v5157, %v5093
        %5222 = vst [vmem:[#allocation2] sm:$0xff] %v5158
        %5223 = vst [vmem:[#allocation2 + $0x8] sm:$0xff] %v5159
        %5224 = vst [vmem:[#allocation2 + $0x10] sm:$0xff] %v5160
        %5225 = vst [vmem:[#allocation2 + $0x18] sm:$0xff] %v5161
        %5226 = vst [vmem:[#allocation2 + $0x20] sm:$0xff] %v5162
        %5227 = vst [vmem:[#allocation2 + $0x28] sm:$0xff] %v5163
        %5228 = vst [vmem:[#allocation2 + $0x30] sm:$0xff] %v5164
        %5229 = vst [vmem:[#allocation2 + $0x38] sm:$0xff] %v5165
        %5230 = vst [vmem:[#allocation2 + $0x40] sm:$0xff] %v5166
        %5231 = vst [vmem:[#allocation2 + $0x48] sm:$0xff] %v5167
        %5232 = vst [vmem:[#allocation2 + $0x50] sm:$0xff] %v5168
        %5233 = vst [vmem:[#allocation2 + $0x58] sm:$0xff] %v5169
        %5234 = vst [vmem:[#allocation2 + $0x60] sm:$0xff] %v5170
        %5235 = vst [vmem:[#allocation2 + $0x68] sm:$0xff] %v5171
        %5236 = vst [vmem:[#allocation2 + $0x70] sm:$0xff] %v5172
        %5237 = vst [vmem:[#allocation2 + $0x78] sm:$0xff] %v5173
        %5238 = vst [vmem:[#allocation2 + $0x80] sm:$0xff] %v5174
        %5239 = vst [vmem:[#allocation2 + $0x88] sm:$0xff] %v5175
        %5240 = vst [vmem:[#allocation2 + $0x90] sm:$0xff] %v5176
        %5241 = vst [vmem:[#allocation2 + $0x98] sm:$0xff] %v5177
        %5242 = vst [vmem:[#allocation2 + $0xa0] sm:$0xff] %v5178
        %5243 = vst [vmem:[#allocation2 + $0xa8] sm:$0xff] %v5179
        %5244 = vst [vmem:[#allocation2 + $0xb0] sm:$0xff] %v5180
        %5245 = vst [vmem:[#allocation2 + $0xb8] sm:$0xff] %v5181
        %5246 = vst [vmem:[#allocation2 + $0xc0] sm:$0xff] %v5182
        %5247 = vst [vmem:[#allocation2 + $0xc8] sm:$0xff] %v5183
        %5248 = vst [vmem:[#allocation2 + $0xd0] sm:$0xff] %v5184
        %5249 = vst [vmem:[#allocation2 + $0xd8] sm:$0xff] %v5185
        %5250 = vst [vmem:[#allocation2 + $0xe0] sm:$0xff] %v5186
        %5251 = vst [vmem:[#allocation2 + $0xe8] sm:$0xff] %v5187
        %5252 = vst [vmem:[#allocation2 + $0xf0] sm:$0xff] %v5188
        %5253 = vst [vmem:[#allocation2 + $0xf8] sm:$0xff] %v5189
        %5254 = vst [vmem:[#allocation2 + $0x100] sm:$0xff] %v5190
        %5255 = vst [vmem:[#allocation2 + $0x108] sm:$0xff] %v5191
        %5256 = vst [vmem:[#allocation2 + $0x110] sm:$0xff] %v5192
        %5257 = vst [vmem:[#allocation2 + $0x118] sm:$0xff] %v5193
        %5258 = vst [vmem:[#allocation2 + $0x120] sm:$0xff] %v5194
        %5259 = vst [vmem:[#allocation2 + $0x128] sm:$0xff] %v5195
        %5260 = vst [vmem:[#allocation2 + $0x130] sm:$0xff] %v5196
        %5261 = vst [vmem:[#allocation2 + $0x138] sm:$0xff] %v5197
        %5262 = vst [vmem:[#allocation2 + $0x140] sm:$0xff] %v5198
        %5263 = vst [vmem:[#allocation2 + $0x148] sm:$0xff] %v5199
        %5264 = vst [vmem:[#allocation2 + $0x150] sm:$0xff] %v5200
        %5265 = vst [vmem:[#allocation2 + $0x158] sm:$0xff] %v5201
        %5266 = vst [vmem:[#allocation2 + $0x160] sm:$0xff] %v5202
        %5267 = vst [vmem:[#allocation2 + $0x168] sm:$0xff] %v5203
        %5268 = vst [vmem:[#allocation2 + $0x170] sm:$0xff] %v5204
        %5269 = vst [vmem:[#allocation2 + $0x178] sm:$0xff] %v5205
        %5270 = vst [vmem:[#allocation2 + $0x180] sm:$0xff] %v5206
        %5271 = vst [vmem:[#allocation2 + $0x188] sm:$0xff] %v5207
        %5272 = vst [vmem:[#allocation2 + $0x190] sm:$0xff] %v5208
        %5273 = vst [vmem:[#allocation2 + $0x198] sm:$0xff] %v5209
        %5274 = vst [vmem:[#allocation2 + $0x1a0] sm:$0xff] %v5210
        %5275 = vst [vmem:[#allocation2 + $0x1a8] sm:$0xff] %v5211
        %5276 = vst [vmem:[#allocation2 + $0x1b0] sm:$0xff] %v5212
        %5277 = vst [vmem:[#allocation2 + $0x1b8] sm:$0xff] %v5213
        %5278 = vst [vmem:[#allocation2 + $0x1c0] sm:$0xff] %v5214
        %5279 = vst [vmem:[#allocation2 + $0x1c8] sm:$0xff] %v5215
        %5280 = vst [vmem:[#allocation2 + $0x1d0] sm:$0xff] %v5216
        %5281 = vst [vmem:[#allocation2 + $0x1d8] sm:$0xff] %v5217
        %5282 = vst [vmem:[#allocation2 + $0x1e0] sm:$0xff] %v5218
        %5283 = vst [vmem:[#allocation2 + $0x1e8] sm:$0xff] %v5219
        %5284 = vst [vmem:[#allocation2 + $0x1f0] sm:$0xff] %v5220
        %5285 = vst [vmem:[#allocation2 + $0x1f8] sm:$0xff] %v5221
        %p5286 = scmp.eq.s32.totalorder %s36, 4
        // Predicated region
        $region93: #{tpu_custom_call.1} parent=79 // pred_check
          %p5287 = pneg %p5286
        $region94: #{tpu_custom_call.1} parent=79 // pred_check_branch
          %5289 = sbr.rel (%p5287) target = $region96
        $region95: #{tpu_custom_call.1} parent=79 // pred_region
          %v5290 = vld [vmem:[#allocation2] sm:$0xff]
          %v5291 = vld [vmem:[#allocation2 + $0x8] sm:$0xff]
          %v5292 = vld [vmem:[#allocation2 + $0x10] sm:$0xff]
          %v5293 = vld [vmem:[#allocation2 + $0x18] sm:$0xff]
          %v5294 = vld [vmem:[#allocation2 + $0x20] sm:$0xff]
          %v5295 = vld [vmem:[#allocation2 + $0x28] sm:$0xff]
          %v5296 = vld [vmem:[#allocation2 + $0x30] sm:$0xff]
          %v5297 = vld [vmem:[#allocation2 + $0x38] sm:$0xff]
          %v5298 = vld [vmem:[#allocation2 + $0x40] sm:$0xff]
          %v5299 = vld [vmem:[#allocation2 + $0x48] sm:$0xff]
          %v5300 = vld [vmem:[#allocation2 + $0x50] sm:$0xff]
          %v5301 = vld [vmem:[#allocation2 + $0x58] sm:$0xff]
          %v5302 = vld [vmem:[#allocation2 + $0x60] sm:$0xff]
          %v5303 = vld [vmem:[#allocation2 + $0x68] sm:$0xff]
          %v5304 = vld [vmem:[#allocation2 + $0x70] sm:$0xff]
          %v5305 = vld [vmem:[#allocation2 + $0x78] sm:$0xff]
          %v5306 = vld [vmem:[#allocation2 + $0x80] sm:$0xff]
          %v5307 = vld [vmem:[#allocation2 + $0x88] sm:$0xff]
          %v5308 = vld [vmem:[#allocation2 + $0x90] sm:$0xff]
          %v5309 = vld [vmem:[#allocation2 + $0x98] sm:$0xff]
          %v5310 = vld [vmem:[#allocation2 + $0xa0] sm:$0xff]
          %v5311 = vld [vmem:[#allocation2 + $0xa8] sm:$0xff]
          %v5312 = vld [vmem:[#allocation2 + $0xb0] sm:$0xff]
          %v5313 = vld [vmem:[#allocation2 + $0xb8] sm:$0xff]
          %v5314 = vld [vmem:[#allocation2 + $0xc0] sm:$0xff]
          %v5315 = vld [vmem:[#allocation2 + $0xc8] sm:$0xff]
          %v5316 = vld [vmem:[#allocation2 + $0xd0] sm:$0xff]
          %v5317 = vld [vmem:[#allocation2 + $0xd8] sm:$0xff]
          %v5318 = vld [vmem:[#allocation2 + $0xe0] sm:$0xff]
          %v5319 = vld [vmem:[#allocation2 + $0xe8] sm:$0xff]
          %v5320 = vld [vmem:[#allocation2 + $0xf0] sm:$0xff]
          %v5321 = vld [vmem:[#allocation2 + $0xf8] sm:$0xff]
          %v5322 = vld [vmem:[#allocation2 + $0x100] sm:$0xff]
          %v5323 = vld [vmem:[#allocation2 + $0x108] sm:$0xff]
          %v5324 = vld [vmem:[#allocation2 + $0x110] sm:$0xff]
          %v5325 = vld [vmem:[#allocation2 + $0x118] sm:$0xff]
          %v5326 = vld [vmem:[#allocation2 + $0x120] sm:$0xff]
          %v5327 = vld [vmem:[#allocation2 + $0x128] sm:$0xff]
          %v5328 = vld [vmem:[#allocation2 + $0x130] sm:$0xff]
          %v5329 = vld [vmem:[#allocation2 + $0x138] sm:$0xff]
          %v5330 = vld [vmem:[#allocation2 + $0x140] sm:$0xff]
          %v5331 = vld [vmem:[#allocation2 + $0x148] sm:$0xff]
          %v5332 = vld [vmem:[#allocation2 + $0x150] sm:$0xff]
          %v5333 = vld [vmem:[#allocation2 + $0x158] sm:$0xff]
          %v5334 = vld [vmem:[#allocation2 + $0x160] sm:$0xff]
          %v5335 = vld [vmem:[#allocation2 + $0x168] sm:$0xff]
          %v5336 = vld [vmem:[#allocation2 + $0x170] sm:$0xff]
          %v5337 = vld [vmem:[#allocation2 + $0x178] sm:$0xff]
          %v5338 = vld [vmem:[#allocation2 + $0x180] sm:$0xff]
          %v5339 = vld [vmem:[#allocation2 + $0x188] sm:$0xff]
          %v5340 = vld [vmem:[#allocation2 + $0x190] sm:$0xff]
          %v5341 = vld [vmem:[#allocation2 + $0x198] sm:$0xff]
          %v5342 = vld [vmem:[#allocation2 + $0x1a0] sm:$0xff]
          %v5343 = vld [vmem:[#allocation2 + $0x1a8] sm:$0xff]
          %v5344 = vld [vmem:[#allocation2 + $0x1b0] sm:$0xff]
          %v5345 = vld [vmem:[#allocation2 + $0x1b8] sm:$0xff]
          %v5346 = vld [vmem:[#allocation2 + $0x1c0] sm:$0xff]
          %v5347 = vld [vmem:[#allocation2 + $0x1c8] sm:$0xff]
          %v5348 = vld [vmem:[#allocation2 + $0x1d0] sm:$0xff]
          %v5349 = vld [vmem:[#allocation2 + $0x1d8] sm:$0xff]
          %v5350 = vld [vmem:[#allocation2 + $0x1e0] sm:$0xff]
          %v5351 = vld [vmem:[#allocation2 + $0x1e8] sm:$0xff]
          %v5352 = vld [vmem:[#allocation2 + $0x1f0] sm:$0xff]
          %v5353 = vld [vmem:[#allocation2 + $0x1f8] sm:$0xff]
          %5354 = vxpose.xlu0.b32.start [1/16] %v5290, 128
          %5355 = vxpose.xlu0.b32.cont [2/16] %v5291, 128
          %5356 = vxpose.xlu0.b32.cont [3/16] %v5292, 128
          %5357 = vxpose.xlu0.b32.cont [4/16] %v5293, 128
          %5358 = vxpose.xlu0.b32.cont [5/16] %v5294, 128
          %5359 = vxpose.xlu0.b32.cont [6/16] %v5295, 128
          %5360 = vxpose.xlu0.b32.cont [7/16] %v5296, 128
          %5361 = vxpose.xlu0.b32.cont [8/16] %v5297, 128
          %5362 = vxpose.xlu0.b32.cont [9/16] %v5298, 128
          %5363 = vxpose.xlu0.b32.cont [10/16] %v5299, 128
          %5364 = vxpose.xlu0.b32.cont [11/16] %v5300, 128
          %5365 = vxpose.xlu0.b32.cont [12/16] %v5301, 128
          %5366 = vxpose.xlu0.b32.cont [13/16] %v5302, 128
          %5367 = vxpose.xlu0.b32.cont [14/16] %v5303, 128
          %5368 = vxpose.xlu0.b32.cont [15/16] %v5304, 128
          %5369 = vxpose.xlu0.b32.end [16/16] %v5305, 128
          %v5370 = vpop.trf.xlu0
          %v5371 = vpop.trf.xlu0
          %v5372 = vpop.trf.xlu0
          %v5373 = vpop.trf.xlu0
          %v5374 = vpop.trf.xlu0
          %v5375 = vpop.trf.xlu0
          %v5376 = vpop.trf.xlu0
          %v5377 = vpop.trf.xlu0
          %v5378 = vpop.trf.xlu0
          %v5379 = vpop.trf.xlu0
          %v5380 = vpop.trf.xlu0
          %v5381 = vpop.trf.xlu0
          %v5382 = vpop.trf.xlu0
          %v5383 = vpop.trf.xlu0
          %v5384 = vpop.trf.xlu0
          %v5385 = vpop.trf.xlu0
          %5386 = vxpose.xlu0.b32.start [1/16] %v5306, 128
          %5387 = vxpose.xlu0.b32.cont [2/16] %v5307, 128
          %5388 = vxpose.xlu0.b32.cont [3/16] %v5308, 128
          %5389 = vxpose.xlu0.b32.cont [4/16] %v5309, 128
          %5390 = vxpose.xlu0.b32.cont [5/16] %v5310, 128
          %5391 = vxpose.xlu0.b32.cont [6/16] %v5311, 128
          %5392 = vxpose.xlu0.b32.cont [7/16] %v5312, 128
          %5393 = vxpose.xlu0.b32.cont [8/16] %v5313, 128
          %5394 = vxpose.xlu0.b32.cont [9/16] %v5314, 128
          %5395 = vxpose.xlu0.b32.cont [10/16] %v5315, 128
          %5396 = vxpose.xlu0.b32.cont [11/16] %v5316, 128
          %5397 = vxpose.xlu0.b32.cont [12/16] %v5317, 128
          %5398 = vxpose.xlu0.b32.cont [13/16] %v5318, 128
          %5399 = vxpose.xlu0.b32.cont [14/16] %v5319, 128
          %5400 = vxpose.xlu0.b32.cont [15/16] %v5320, 128
          %5401 = vxpose.xlu0.b32.end [16/16] %v5321, 128
          %v5402 = vpop.trf.xlu0
          %v5403 = vpop.trf.xlu0
          %v5404 = vpop.trf.xlu0
          %v5405 = vpop.trf.xlu0
          %v5406 = vpop.trf.xlu0
          %v5407 = vpop.trf.xlu0
          %v5408 = vpop.trf.xlu0
          %v5409 = vpop.trf.xlu0
          %v5410 = vpop.trf.xlu0
          %v5411 = vpop.trf.xlu0
          %v5412 = vpop.trf.xlu0
          %v5413 = vpop.trf.xlu0
          %v5414 = vpop.trf.xlu0
          %v5415 = vpop.trf.xlu0
          %v5416 = vpop.trf.xlu0
          %v5417 = vpop.trf.xlu0
          %5418 = vxpose.xlu0.b32.start [1/16] %v5322, 128
          %5419 = vxpose.xlu0.b32.cont [2/16] %v5323, 128
          %5420 = vxpose.xlu0.b32.cont [3/16] %v5324, 128
          %5421 = vxpose.xlu0.b32.cont [4/16] %v5325, 128
          %5422 = vxpose.xlu0.b32.cont [5/16] %v5326, 128
          %5423 = vxpose.xlu0.b32.cont [6/16] %v5327, 128
          %5424 = vxpose.xlu0.b32.cont [7/16] %v5328, 128
          %5425 = vxpose.xlu0.b32.cont [8/16] %v5329, 128
          %5426 = vxpose.xlu0.b32.cont [9/16] %v5330, 128
          %5427 = vxpose.xlu0.b32.cont [10/16] %v5331, 128
          %5428 = vxpose.xlu0.b32.cont [11/16] %v5332, 128
          %5429 = vxpose.xlu0.b32.cont [12/16] %v5333, 128
          %5430 = vxpose.xlu0.b32.cont [13/16] %v5334, 128
          %5431 = vxpose.xlu0.b32.cont [14/16] %v5335, 128
          %5432 = vxpose.xlu0.b32.cont [15/16] %v5336, 128
          %5433 = vxpose.xlu0.b32.end [16/16] %v5337, 128
          %v5434 = vpop.trf.xlu0
          %v5435 = vpop.trf.xlu0
          %v5436 = vpop.trf.xlu0
          %v5437 = vpop.trf.xlu0
          %v5438 = vpop.trf.xlu0
          %v5439 = vpop.trf.xlu0
          %v5440 = vpop.trf.xlu0
          %v5441 = vpop.trf.xlu0
          %v5442 = vpop.trf.xlu0
          %v5443 = vpop.trf.xlu0
          %v5444 = vpop.trf.xlu0
          %v5445 = vpop.trf.xlu0
          %v5446 = vpop.trf.xlu0
          %v5447 = vpop.trf.xlu0
          %v5448 = vpop.trf.xlu0
          %v5449 = vpop.trf.xlu0
          %5450 = vxpose.xlu0.b32.start [1/16] %v5338, 128
          %5451 = vxpose.xlu0.b32.cont [2/16] %v5339, 128
          %5452 = vxpose.xlu0.b32.cont [3/16] %v5340, 128
          %5453 = vxpose.xlu0.b32.cont [4/16] %v5341, 128
          %5454 = vxpose.xlu0.b32.cont [5/16] %v5342, 128
          %5455 = vxpose.xlu0.b32.cont [6/16] %v5343, 128
          %5456 = vxpose.xlu0.b32.cont [7/16] %v5344, 128
          %5457 = vxpose.xlu0.b32.cont [8/16] %v5345, 128
          %5458 = vxpose.xlu0.b32.cont [9/16] %v5346, 128
          %5459 = vxpose.xlu0.b32.cont [10/16] %v5347, 128
          %5460 = vxpose.xlu0.b32.cont [11/16] %v5348, 128
          %5461 = vxpose.xlu0.b32.cont [12/16] %v5349, 128
          %5462 = vxpose.xlu0.b32.cont [13/16] %v5350, 128
          %5463 = vxpose.xlu0.b32.cont [14/16] %v5351, 128
          %5464 = vxpose.xlu0.b32.cont [15/16] %v5352, 128
          %5465 = vxpose.xlu0.b32.end [16/16] %v5353, 128
          %v5466 = vpop.trf.xlu0
          %v5467 = vpop.trf.xlu0
          %v5468 = vpop.trf.xlu0
          %v5469 = vpop.trf.xlu0
          %v5470 = vpop.trf.xlu0
          %v5471 = vpop.trf.xlu0
          %v5472 = vpop.trf.xlu0
          %v5473 = vpop.trf.xlu0
          %v5474 = vpop.trf.xlu0
          %v5475 = vpop.trf.xlu0
          %v5476 = vpop.trf.xlu0
          %v5477 = vpop.trf.xlu0
          %v5478 = vpop.trf.xlu0
          %v5479 = vpop.trf.xlu0
          %v5480 = vpop.trf.xlu0
          %v5481 = vpop.trf.xlu0
          %v5482 = vmax.f32 %v5370, %v5371
          %v5483 = vmax.f32 %v5482, %v5372
          %v5484 = vmax.f32 %v5483, %v5373
          %v5485 = vmax.f32 %v5484, %v5374
          %v5486 = vmax.f32 %v5485, %v5375
          %v5487 = vmax.f32 %v5486, %v5376
          %v5488 = vmax.f32 %v5487, %v5377
          %v5489 = vmax.f32 %v5488, %v5378
          %v5490 = vmax.f32 %v5489, %v5379
          %v5491 = vmax.f32 %v5490, %v5380
          %v5492 = vmax.f32 %v5491, %v5381
          %v5493 = vmax.f32 %v5492, %v5382
          %v5494 = vmax.f32 %v5493, %v5383
          %v5495 = vmax.f32 %v5494, %v5384
          %v5496 = vmax.f32 %v5495, %v5385
          %v5497 = vrot.slane %v5496, 4
          %v5498 = vmax.f32 %v5496, %v5497
          %v5499 = vrot.slane %v5498, 2
          %v5500 = vmax.f32 %v5498, %v5499
          %v5501 = vrot.slane %v5500, 1
          %v5502 = vmax.f32 %v5500, %v5501
          %v5503 = vmax.f32 %v5402, %v5403
          %v5504 = vmax.f32 %v5503, %v5404
          %v5505 = vmax.f32 %v5504, %v5405
          %v5506 = vmax.f32 %v5505, %v5406
          %v5507 = vmax.f32 %v5506, %v5407
          %v5508 = vmax.f32 %v5507, %v5408
          %v5509 = vmax.f32 %v5508, %v5409
          %v5510 = vmax.f32 %v5509, %v5410
          %v5511 = vmax.f32 %v5510, %v5411
          %v5512 = vmax.f32 %v5511, %v5412
          %v5513 = vmax.f32 %v5512, %v5413
          %v5514 = vmax.f32 %v5513, %v5414
          %v5515 = vmax.f32 %v5514, %v5415
          %v5516 = vmax.f32 %v5515, %v5416
          %v5517 = vmax.f32 %v5516, %v5417
          %v5518 = vrot.slane %v5517, 4
          %v5519 = vmax.f32 %v5517, %v5518
          %v5520 = vrot.slane %v5519, 2
          %v5521 = vmax.f32 %v5519, %v5520
          %v5522 = vrot.slane %v5521, 1
          %v5523 = vmax.f32 %v5521, %v5522
          %v5524 = vmax.f32 %v5434, %v5435
          %v5525 = vmax.f32 %v5524, %v5436
          %v5526 = vmax.f32 %v5525, %v5437
          %v5527 = vmax.f32 %v5526, %v5438
          %v5528 = vmax.f32 %v5527, %v5439
          %v5529 = vmax.f32 %v5528, %v5440
          %v5530 = vmax.f32 %v5529, %v5441
          %v5531 = vmax.f32 %v5530, %v5442
          %v5532 = vmax.f32 %v5531, %v5443
          %v5533 = vmax.f32 %v5532, %v5444
          %v5534 = vmax.f32 %v5533, %v5445
          %v5535 = vmax.f32 %v5534, %v5446
          %v5536 = vmax.f32 %v5535, %v5447
          %v5537 = vmax.f32 %v5536, %v5448
          %v5538 = vmax.f32 %v5537, %v5449
          %v5539 = vrot.slane %v5538, 4
          %v5540 = vmax.f32 %v5538, %v5539
          %v5541 = vrot.slane %v5540, 2
          %v5542 = vmax.f32 %v5540, %v5541
          %v5543 = vrot.slane %v5542, 1
          %v5544 = vmax.f32 %v5542, %v5543
          %v5545 = vmax.f32 %v5466, %v5467
          %v5546 = vmax.f32 %v5545, %v5468
          %v5547 = vmax.f32 %v5546, %v5469
          %v5548 = vmax.f32 %v5547, %v5470
          %v5549 = vmax.f32 %v5548, %v5471
          %v5550 = vmax.f32 %v5549, %v5472
          %v5551 = vmax.f32 %v5550, %v5473
          %v5552 = vmax.f32 %v5551, %v5474
          %v5553 = vmax.f32 %v5552, %v5475
          %v5554 = vmax.f32 %v5553, %v5476
          %v5555 = vmax.f32 %v5554, %v5477
          %v5556 = vmax.f32 %v5555, %v5478
          %v5557 = vmax.f32 %v5556, %v5479
          %v5558 = vmax.f32 %v5557, %v5480
          %v5559 = vmax.f32 %v5558, %v5481
          %v5560 = vrot.slane %v5559, 4
          %v5561 = vmax.f32 %v5559, %v5560
          %v5562 = vrot.slane %v5561, 2
          %v5563 = vmax.f32 %v5561, %v5562
          %v5564 = vrot.slane %v5563, 1
          %v5565 = vmax.f32 %v5563, %v5564
          %v5566 = vpack.c.bf16 %v5502, %v5502
          %v5567 = vpack.c.bf16 %v5523, %v5523
          %v5568 = vpack.c.bf16 %v5544, %v5544
          %v5569 = vpack.c.bf16 %v5565, %v5565
          %v5570 = vld [vmem:[%s9] sm:$0xff]
          %v5571 = vld [vmem:[%s9 + $0x8] sm:$0xff]
          %v5572 = vld [vmem:[%s9 + $0x10] sm:$0xff]
          %v5573 = vld [vmem:[%s9 + $0x18] sm:$0xff]
          %v5574 = vld [vmem:[%s9 + $0x20] sm:$0xff]
          %v5575 = vld [vmem:[%s9 + $0x28] sm:$0xff]
          %v5576 = vld [vmem:[%s9 + $0x30] sm:$0xff]
          %v5577 = vld [vmem:[%s9 + $0x38] sm:$0xff]
          %v5578 = vld [vmem:[%s9 + $0x40] sm:$0xff]
          %v5579 = vld [vmem:[%s9 + $0x48] sm:$0xff]
          %v5580 = vld [vmem:[%s9 + $0x50] sm:$0xff]
          %v5581 = vld [vmem:[%s9 + $0x58] sm:$0xff]
          %v5582 = vld [vmem:[%s9 + $0x60] sm:$0xff]
          %v5583 = vld [vmem:[%s9 + $0x68] sm:$0xff]
          %v5584 = vld [vmem:[%s9 + $0x70] sm:$0xff]
          %v5585 = vld [vmem:[%s9 + $0x78] sm:$0xff]
          %v5586 = vld [vmem:[%s9 + $0x80] sm:$0xff]
          %v5587 = vld [vmem:[%s9 + $0x88] sm:$0xff]
          %v5588 = vld [vmem:[%s9 + $0x90] sm:$0xff]
          %v5589 = vld [vmem:[%s9 + $0x98] sm:$0xff]
          %v5590 = vld [vmem:[%s9 + $0xa0] sm:$0xff]
          %v5591 = vld [vmem:[%s9 + $0xa8] sm:$0xff]
          %v5592 = vld [vmem:[%s9 + $0xb0] sm:$0xff]
          %v5593 = vld [vmem:[%s9 + $0xb8] sm:$0xff]
          %v5594 = vld [vmem:[%s9 + $0xc0] sm:$0xff]
          %v5595 = vld [vmem:[%s9 + $0xc8] sm:$0xff]
          %v5596 = vld [vmem:[%s9 + $0xd0] sm:$0xff]
          %v5597 = vld [vmem:[%s9 + $0xd8] sm:$0xff]
          %v5598 = vld [vmem:[%s9 + $0xe0] sm:$0xff]
          %v5599 = vld [vmem:[%s9 + $0xe8] sm:$0xff]
          %v5600 = vld [vmem:[%s9 + $0xf0] sm:$0xff]
          %v5601 = vld [vmem:[%s9 + $0xf8] sm:$0xff]
          %v5602 = vld [vmem:[%s9 + $0x100] sm:$0xff]
          %v5603 = vld [vmem:[%s9 + $0x108] sm:$0xff]
          %v5604 = vld [vmem:[%s9 + $0x110] sm:$0xff]
          %v5605 = vld [vmem:[%s9 + $0x118] sm:$0xff]
          %v5606 = vld [vmem:[%s9 + $0x120] sm:$0xff]
          %v5607 = vld [vmem:[%s9 + $0x128] sm:$0xff]
          %v5608 = vld [vmem:[%s9 + $0x130] sm:$0xff]
          %v5609 = vld [vmem:[%s9 + $0x138] sm:$0xff]
          %v5610 = vld [vmem:[%s9 + $0x140] sm:$0xff]
          %v5611 = vld [vmem:[%s9 + $0x148] sm:$0xff]
          %v5612 = vld [vmem:[%s9 + $0x150] sm:$0xff]
          %v5613 = vld [vmem:[%s9 + $0x158] sm:$0xff]
          %v5614 = vld [vmem:[%s9 + $0x160] sm:$0xff]
          %v5615 = vld [vmem:[%s9 + $0x168] sm:$0xff]
          %v5616 = vld [vmem:[%s9 + $0x170] sm:$0xff]
          %v5617 = vld [vmem:[%s9 + $0x178] sm:$0xff]
          %v5618 = vld [vmem:[%s9 + $0x180] sm:$0xff]
          %v5619 = vld [vmem:[%s9 + $0x188] sm:$0xff]
          %v5620 = vld [vmem:[%s9 + $0x190] sm:$0xff]
          %v5621 = vld [vmem:[%s9 + $0x198] sm:$0xff]
          %v5622 = vld [vmem:[%s9 + $0x1a0] sm:$0xff]
          %v5623 = vld [vmem:[%s9 + $0x1a8] sm:$0xff]
          %v5624 = vld [vmem:[%s9 + $0x1b0] sm:$0xff]
          %v5625 = vld [vmem:[%s9 + $0x1b8] sm:$0xff]
          %v5626 = vld [vmem:[%s9 + $0x1c0] sm:$0xff]
          %v5627 = vld [vmem:[%s9 + $0x1c8] sm:$0xff]
          %v5628 = vld [vmem:[%s9 + $0x1d0] sm:$0xff]
          %v5629 = vld [vmem:[%s9 + $0x1d8] sm:$0xff]
          %v5630 = vld [vmem:[%s9 + $0x1e0] sm:$0xff]
          %v5631 = vld [vmem:[%s9 + $0x1e8] sm:$0xff]
          %v5632 = vld [vmem:[%s9 + $0x1f0] sm:$0xff]
          %v5633 = vld [vmem:[%s9 + $0x1f8] sm:$0xff]
          %v5634 = vld [vmem:[%s10] sm:$0x3]
          %v5699 = vunpack.c.l.b16 %v5570
          %v5700 = vunpack.c.h.b16 %v5570
          %v5701 = vunpack.c.l.b16 %v5571
          %v5702 = vunpack.c.h.b16 %v5571
          %v5703 = vunpack.c.l.b16 %v5572
          %v5704 = vunpack.c.h.b16 %v5572
          %v5705 = vunpack.c.l.b16 %v5573
          %v5706 = vunpack.c.h.b16 %v5573
          %v5707 = vunpack.c.l.b16 %v5574
          %v5708 = vunpack.c.h.b16 %v5574
          %v5709 = vunpack.c.l.b16 %v5575
          %v5710 = vunpack.c.h.b16 %v5575
          %v5711 = vunpack.c.l.b16 %v5576
          %v5712 = vunpack.c.h.b16 %v5576
          %v5713 = vunpack.c.l.b16 %v5577
          %v5714 = vunpack.c.h.b16 %v5577
          %v5715 = vunpack.c.l.b16 %v5578
          %v5716 = vunpack.c.h.b16 %v5578
          %v5717 = vunpack.c.l.b16 %v5579
          %v5718 = vunpack.c.h.b16 %v5579
          %v5719 = vunpack.c.l.b16 %v5580
          %v5720 = vunpack.c.h.b16 %v5580
          %v5721 = vunpack.c.l.b16 %v5581
          %v5722 = vunpack.c.h.b16 %v5581
          %v5723 = vunpack.c.l.b16 %v5582
          %v5724 = vunpack.c.h.b16 %v5582
          %v5725 = vunpack.c.l.b16 %v5583
          %v5726 = vunpack.c.h.b16 %v5583
          %v5727 = vunpack.c.l.b16 %v5584
          %v5728 = vunpack.c.h.b16 %v5584
          %v5729 = vunpack.c.l.b16 %v5585
          %v5730 = vunpack.c.h.b16 %v5585
          %v5731 = vunpack.c.l.b16 %v5586
          %v5732 = vunpack.c.h.b16 %v5586
          %v5733 = vunpack.c.l.b16 %v5587
          %v5734 = vunpack.c.h.b16 %v5587
          %v5735 = vunpack.c.l.b16 %v5588
          %v5736 = vunpack.c.h.b16 %v5588
          %v5737 = vunpack.c.l.b16 %v5589
          %v5738 = vunpack.c.h.b16 %v5589
          %v5739 = vunpack.c.l.b16 %v5590
          %v5740 = vunpack.c.h.b16 %v5590
          %v5741 = vunpack.c.l.b16 %v5591
          %v5742 = vunpack.c.h.b16 %v5591
          %v5743 = vunpack.c.l.b16 %v5592
          %v5744 = vunpack.c.h.b16 %v5592
          %v5745 = vunpack.c.l.b16 %v5593
          %v5746 = vunpack.c.h.b16 %v5593
          %v5747 = vunpack.c.l.b16 %v5594
          %v5748 = vunpack.c.h.b16 %v5594
          %v5749 = vunpack.c.l.b16 %v5595
          %v5750 = vunpack.c.h.b16 %v5595
          %v5751 = vunpack.c.l.b16 %v5596
          %v5752 = vunpack.c.h.b16 %v5596
          %v5753 = vunpack.c.l.b16 %v5597
          %v5754 = vunpack.c.h.b16 %v5597
          %v5755 = vunpack.c.l.b16 %v5598
          %v5756 = vunpack.c.h.b16 %v5598
          %v5757 = vunpack.c.l.b16 %v5599
          %v5758 = vunpack.c.h.b16 %v5599
          %v5759 = vunpack.c.l.b16 %v5600
          %v5760 = vunpack.c.h.b16 %v5600
          %v5761 = vunpack.c.l.b16 %v5601
          %v5762 = vunpack.c.h.b16 %v5601
          %v5763 = vunpack.c.l.b16 %v5602
          %v5764 = vunpack.c.h.b16 %v5602
          %v5765 = vunpack.c.l.b16 %v5603
          %v5766 = vunpack.c.h.b16 %v5603
          %v5767 = vunpack.c.l.b16 %v5604
          %v5768 = vunpack.c.h.b16 %v5604
          %v5769 = vunpack.c.l.b16 %v5605
          %v5770 = vunpack.c.h.b16 %v5605
          %v5771 = vunpack.c.l.b16 %v5606
          %v5772 = vunpack.c.h.b16 %v5606
          %v5773 = vunpack.c.l.b16 %v5607
          %v5774 = vunpack.c.h.b16 %v5607
          %v5775 = vunpack.c.l.b16 %v5608
          %v5776 = vunpack.c.h.b16 %v5608
          %v5777 = vunpack.c.l.b16 %v5609
          %v5778 = vunpack.c.h.b16 %v5609
          %v5779 = vunpack.c.l.b16 %v5610
          %v5780 = vunpack.c.h.b16 %v5610
          %v5781 = vunpack.c.l.b16 %v5611
          %v5782 = vunpack.c.h.b16 %v5611
          %v5783 = vunpack.c.l.b16 %v5612
          %v5784 = vunpack.c.h.b16 %v5612
          %v5785 = vunpack.c.l.b16 %v5613
          %v5786 = vunpack.c.h.b16 %v5613
          %v5787 = vunpack.c.l.b16 %v5614
          %v5788 = vunpack.c.h.b16 %v5614
          %v5789 = vunpack.c.l.b16 %v5615
          %v5790 = vunpack.c.h.b16 %v5615
          %v5791 = vunpack.c.l.b16 %v5616
          %v5792 = vunpack.c.h.b16 %v5616
          %v5793 = vunpack.c.l.b16 %v5617
          %v5794 = vunpack.c.h.b16 %v5617
          %v5795 = vunpack.c.l.b16 %v5618
          %v5796 = vunpack.c.h.b16 %v5618
          %v5797 = vunpack.c.l.b16 %v5619
          %v5798 = vunpack.c.h.b16 %v5619
          %v5799 = vunpack.c.l.b16 %v5620
          %v5800 = vunpack.c.h.b16 %v5620
          %v5801 = vunpack.c.l.b16 %v5621
          %v5802 = vunpack.c.h.b16 %v5621
          %v5803 = vunpack.c.l.b16 %v5622
          %v5804 = vunpack.c.h.b16 %v5622
          %v5805 = vunpack.c.l.b16 %v5623
          %v5806 = vunpack.c.h.b16 %v5623
          %v5807 = vunpack.c.l.b16 %v5624
          %v5808 = vunpack.c.h.b16 %v5624
          %v5809 = vunpack.c.l.b16 %v5625
          %v5810 = vunpack.c.h.b16 %v5625
          %v5811 = vunpack.c.l.b16 %v5626
          %v5812 = vunpack.c.h.b16 %v5626
          %v5813 = vunpack.c.l.b16 %v5627
          %v5814 = vunpack.c.h.b16 %v5627
          %v5815 = vunpack.c.l.b16 %v5628
          %v5816 = vunpack.c.h.b16 %v5628
          %v5817 = vunpack.c.l.b16 %v5629
          %v5818 = vunpack.c.h.b16 %v5629
          %v5819 = vunpack.c.l.b16 %v5630
          %v5820 = vunpack.c.h.b16 %v5630
          %v5821 = vunpack.c.l.b16 %v5631
          %v5822 = vunpack.c.h.b16 %v5631
          %v5823 = vunpack.c.l.b16 %v5632
          %v5824 = vunpack.c.h.b16 %v5632
          %v5825 = vunpack.c.l.b16 %v5633
          %v5826 = vunpack.c.h.b16 %v5633
          %v5827 = vpack.c.b16 %v5701, %v5699
          %v5828 = vpack.c.b16 %v5702, %v5700
          %v5829 = vpack.c.b16 %v5705, %v5703
          %v5830 = vpack.c.b16 %v5706, %v5704
          %v5831 = vpack.c.b16 %v5709, %v5707
          %v5832 = vpack.c.b16 %v5710, %v5708
          %v5833 = vpack.c.b16 %v5713, %v5711
          %v5834 = vpack.c.b16 %v5714, %v5712
          %v5835 = vpack.c.b16 %v5717, %v5715
          %v5836 = vpack.c.b16 %v5718, %v5716
          %v5837 = vpack.c.b16 %v5721, %v5719
          %v5838 = vpack.c.b16 %v5722, %v5720
          %v5839 = vpack.c.b16 %v5725, %v5723
          %v5840 = vpack.c.b16 %v5726, %v5724
          %v5841 = vpack.c.b16 %v5729, %v5727
          %v5842 = vpack.c.b16 %v5730, %v5728
          %v5843 = vpack.c.b16 %v5733, %v5731
          %v5844 = vpack.c.b16 %v5734, %v5732
          %v5845 = vpack.c.b16 %v5737, %v5735
          %v5846 = vpack.c.b16 %v5738, %v5736
          %v5847 = vpack.c.b16 %v5741, %v5739
          %v5848 = vpack.c.b16 %v5742, %v5740
          %v5849 = vpack.c.b16 %v5745, %v5743
          %v5850 = vpack.c.b16 %v5746, %v5744
          %v5851 = vpack.c.b16 %v5749, %v5747
          %v5852 = vpack.c.b16 %v5750, %v5748
          %v5853 = vpack.c.b16 %v5753, %v5751
          %v5854 = vpack.c.b16 %v5754, %v5752
          %v5855 = vpack.c.b16 %v5757, %v5755
          %v5856 = vpack.c.b16 %v5758, %v5756
          %v5857 = vpack.c.b16 %v5761, %v5759
          %v5858 = vpack.c.b16 %v5762, %v5760
          %v5859 = vpack.c.b16 %v5765, %v5763
          %v5860 = vpack.c.b16 %v5766, %v5764
          %v5861 = vpack.c.b16 %v5769, %v5767
          %v5862 = vpack.c.b16 %v5770, %v5768
          %v5863 = vpack.c.b16 %v5773, %v5771
          %v5864 = vpack.c.b16 %v5774, %v5772
          %v5865 = vpack.c.b16 %v5777, %v5775
          %v5866 = vpack.c.b16 %v5778, %v5776
          %v5867 = vpack.c.b16 %v5781, %v5779
          %v5868 = vpack.c.b16 %v5782, %v5780
          %v5869 = vpack.c.b16 %v5785, %v5783
          %v5870 = vpack.c.b16 %v5786, %v5784
          %v5871 = vpack.c.b16 %v5789, %v5787
          %v5872 = vpack.c.b16 %v5790, %v5788
          %v5873 = vpack.c.b16 %v5793, %v5791
          %v5874 = vpack.c.b16 %v5794, %v5792
          %v5875 = vpack.c.b16 %v5797, %v5795
          %v5876 = vpack.c.b16 %v5798, %v5796
          %v5877 = vpack.c.b16 %v5801, %v5799
          %v5878 = vpack.c.b16 %v5802, %v5800
          %v5879 = vpack.c.b16 %v5805, %v5803
          %v5880 = vpack.c.b16 %v5806, %v5804
          %v5881 = vpack.c.b16 %v5809, %v5807
          %v5882 = vpack.c.b16 %v5810, %v5808
          %v5883 = vpack.c.b16 %v5813, %v5811
          %v5884 = vpack.c.b16 %v5814, %v5812
          %v5885 = vpack.c.b16 %v5817, %v5815
          %v5886 = vpack.c.b16 %v5818, %v5816
          %v5887 = vpack.c.b16 %v5821, %v5819
          %v5888 = vpack.c.b16 %v5822, %v5820
          %v5889 = vpack.c.b16 %v5825, %v5823
          %v5890 = vpack.c.b16 %v5826, %v5824
          %v5956 = vperm.slane %v5634, 0
          %v5957 = vperm.slane %v5634, 1
          %5960 = vmatpush.bf16.msra.mxu0 %v5841
          %5961 = vmatpush.bf16.msra.mxu0 %v5839
          %5962 = vmatpush.bf16.msra.mxu0 %v5837
          %5963 = vmatpush.bf16.msra.mxu0 %v5835
          %5964 = vmatpush.bf16.msra.mxu0 %v5833
          %5965 = vmatpush.bf16.msra.mxu0 %v5831
          %5966 = vmatpush.bf16.msra.mxu0 %v5829
          %5967 = vmatpush.bf16.msra.mxu0 %v5827
          %5968 = vmatmul.bf16.gmra.mxu0 %v5566
          %v5969 = vpop.f32.mrf.mxu0
          %v5970 = vadd.f32 %v5956, %v5969
          %v5971 = vpop.f32.mrf.mxu0
          %5972 = vdwg.mxu0
          %5973 = vmatpush.bf16.msra.mxu0 %v5857
          %5974 = vmatpush.bf16.msra.mxu0 %v5855
          %5975 = vmatpush.bf16.msra.mxu0 %v5853
          %5976 = vmatpush.bf16.msra.mxu0 %v5851
          %5977 = vmatpush.bf16.msra.mxu0 %v5849
          %5978 = vmatpush.bf16.msra.mxu0 %v5847
          %5979 = vmatpush.bf16.msra.mxu0 %v5845
          %5980 = vmatpush.bf16.msra.mxu0 %v5843
          %5981 = vmatmul.bf16.gmra.mxu0 %v5567
          %v5982 = vpop.f32.mrf.mxu0
          %v5983 = vadd.f32 %v5970, %v5982
          %v5984 = vpop.f32.mrf.mxu0
          %5985 = vdwg.mxu0
          %5986 = vmatpush.bf16.msra.mxu0 %v5873
          %5987 = vmatpush.bf16.msra.mxu0 %v5871
          %5988 = vmatpush.bf16.msra.mxu0 %v5869
          %5989 = vmatpush.bf16.msra.mxu0 %v5867
          %5990 = vmatpush.bf16.msra.mxu0 %v5865
          %5991 = vmatpush.bf16.msra.mxu0 %v5863
          %5992 = vmatpush.bf16.msra.mxu0 %v5861
          %5993 = vmatpush.bf16.msra.mxu0 %v5859
          %5994 = vmatmul.bf16.gmra.mxu0 %v5568
          %v5995 = vpop.f32.mrf.mxu0
          %v5996 = vadd.f32 %v5983, %v5995
          %v5997 = vpop.f32.mrf.mxu0
          %5998 = vdwg.mxu0
          %5999 = vmatpush.bf16.msra.mxu0 %v5889
          %6000 = vmatpush.bf16.msra.mxu0 %v5887
          %6001 = vmatpush.bf16.msra.mxu0 %v5885
          %6002 = vmatpush.bf16.msra.mxu0 %v5883
          %6003 = vmatpush.bf16.msra.mxu0 %v5881
          %6004 = vmatpush.bf16.msra.mxu0 %v5879
          %6005 = vmatpush.bf16.msra.mxu0 %v5877
          %6006 = vmatpush.bf16.msra.mxu0 %v5875
          %6007 = vmatmul.bf16.gmra.mxu0 %v5569
          %v6008 = vpop.f32.mrf.mxu0
          %v6009 = vadd.f32 %v5996, %v6008
          %v6010 = vpop.f32.mrf.mxu0
          %6011 = vdwg.mxu0
          %6012 = vmatpush.bf16.msra.mxu0 %v5842
          %6013 = vmatpush.bf16.msra.mxu0 %v5840
          %6014 = vmatpush.bf16.msra.mxu0 %v5838
          %6015 = vmatpush.bf16.msra.mxu0 %v5836
          %6016 = vmatpush.bf16.msra.mxu0 %v5834
          %6017 = vmatpush.bf16.msra.mxu0 %v5832
          %6018 = vmatpush.bf16.msra.mxu0 %v5830
          %6019 = vmatpush.bf16.msra.mxu0 %v5828
          %6020 = vmatmul.bf16.gmra.mxu0 %v5566
          %v6021 = vpop.f32.mrf.mxu0
          %v6022 = vadd.f32 %v5957, %v6021
          %v6023 = vpop.f32.mrf.mxu0
          %6024 = vdwg.mxu0
          %6025 = vmatpush.bf16.msra.mxu0 %v5858
          %6026 = vmatpush.bf16.msra.mxu0 %v5856
          %6027 = vmatpush.bf16.msra.mxu0 %v5854
          %6028 = vmatpush.bf16.msra.mxu0 %v5852
          %6029 = vmatpush.bf16.msra.mxu0 %v5850
          %6030 = vmatpush.bf16.msra.mxu0 %v5848
          %6031 = vmatpush.bf16.msra.mxu0 %v5846
          %6032 = vmatpush.bf16.msra.mxu0 %v5844
          %6033 = vmatmul.bf16.gmra.mxu0 %v5567
          %v6034 = vpop.f32.mrf.mxu0
          %v6035 = vadd.f32 %v6022, %v6034
          %v6036 = vpop.f32.mrf.mxu0
          %6037 = vdwg.mxu0
          %6038 = vmatpush.bf16.msra.mxu0 %v5874
          %6039 = vmatpush.bf16.msra.mxu0 %v5872
          %6040 = vmatpush.bf16.msra.mxu0 %v5870
          %6041 = vmatpush.bf16.msra.mxu0 %v5868
          %6042 = vmatpush.bf16.msra.mxu0 %v5866
          %6043 = vmatpush.bf16.msra.mxu0 %v5864
          %6044 = vmatpush.bf16.msra.mxu0 %v5862
          %6045 = vmatpush.bf16.msra.mxu0 %v5860
          %6046 = vmatmul.bf16.gmra.mxu0 %v5568
          %v6047 = vpop.f32.mrf.mxu0
          %v6048 = vadd.f32 %v6035, %v6047
          %v6049 = vpop.f32.mrf.mxu0
          %6050 = vdwg.mxu0
          %6051 = vmatpush.bf16.msra.mxu0 %v5890
          %6052 = vmatpush.bf16.msra.mxu0 %v5888
          %6053 = vmatpush.bf16.msra.mxu0 %v5886
          %6054 = vmatpush.bf16.msra.mxu0 %v5884
          %6055 = vmatpush.bf16.msra.mxu0 %v5882
          %6056 = vmatpush.bf16.msra.mxu0 %v5880
          %6057 = vmatpush.bf16.msra.mxu0 %v5878
          %6058 = vmatpush.bf16.msra.mxu0 %v5876
          %6059 = vmatmul.bf16.gmra.mxu0 %v5569
          %v6060 = vpop.f32.mrf.mxu0
          %v6061 = vadd.f32 %v6048, %v6060
          %v6062 = vpop.f32.mrf.mxu0
          %6063 = vdwg.mxu0
          %v6064 = vmax.f32 %v6009, 0.0
          %v6065 = vmax.f32 %v6061, 0.0
          %v6066 = vpack.c.bf16 %v6064, %v6064
          %v6067 = vpack.c.bf16 %v6065, %v6065
          %v6068 = vld [vmem:[%s11] sm:$0xf]
          %v6069 = vld [vmem:[%s11 + $0x4] sm:$0xf]
          %v6070 = vld [vmem:[%s11 + $0x8] sm:$0xf]
          %v6071 = vld [vmem:[%s11 + $0xc] sm:$0xf]
          %v6072 = vld [vmem:[%s11 + $0x10] sm:$0xf]
          %v6073 = vld [vmem:[%s11 + $0x14] sm:$0xf]
          %v6074 = vld [vmem:[%s11 + $0x18] sm:$0xf]
          %v6075 = vld [vmem:[%s11 + $0x1c] sm:$0xf]
          %v6076 = vld [vmem:[%s11 + $0x20] sm:$0xf]
          %v6077 = vld [vmem:[%s11 + $0x24] sm:$0xf]
          %v6078 = vld [vmem:[%s11 + $0x28] sm:$0xf]
          %v6079 = vld [vmem:[%s11 + $0x2c] sm:$0xf]
          %v6080 = vld [vmem:[%s11 + $0x30] sm:$0xf]
          %v6081 = vld [vmem:[%s11 + $0x34] sm:$0xf]
          %v6082 = vld [vmem:[%s11 + $0x38] sm:$0xf]
          %v6083 = vld [vmem:[%s11 + $0x3c] sm:$0xf]
          %v6084 = vld [vmem:[%s11 + $0x40] sm:$0xf]
          %v6085 = vld [vmem:[%s11 + $0x44] sm:$0xf]
          %v6086 = vld [vmem:[%s11 + $0x48] sm:$0xf]
          %v6087 = vld [vmem:[%s11 + $0x4c] sm:$0xf]
          %v6088 = vld [vmem:[%s11 + $0x50] sm:$0xf]
          %v6089 = vld [vmem:[%s11 + $0x54] sm:$0xf]
          %v6090 = vld [vmem:[%s11 + $0x58] sm:$0xf]
          %v6091 = vld [vmem:[%s11 + $0x5c] sm:$0xf]
          %v6092 = vld [vmem:[%s11 + $0x60] sm:$0xf]
          %v6093 = vld [vmem:[%s11 + $0x64] sm:$0xf]
          %v6094 = vld [vmem:[%s11 + $0x68] sm:$0xf]
          %v6095 = vld [vmem:[%s11 + $0x6c] sm:$0xf]
          %v6096 = vld [vmem:[%s11 + $0x70] sm:$0xf]
          %v6097 = vld [vmem:[%s11 + $0x74] sm:$0xf]
          %v6098 = vld [vmem:[%s11 + $0x78] sm:$0xf]
          %v6099 = vld [vmem:[%s11 + $0x7c] sm:$0xf]
          %v6100 = vld [vmem:[%s12] sm:$0x1]
          %v6133 = vunpack.c.l.b16 %v6068
          %v6134 = vunpack.c.l.b16 %v6069
          %v6135 = vunpack.c.l.b16 %v6070
          %v6136 = vunpack.c.l.b16 %v6071
          %v6137 = vunpack.c.l.b16 %v6072
          %v6138 = vunpack.c.l.b16 %v6073
          %v6139 = vunpack.c.l.b16 %v6074
          %v6140 = vunpack.c.l.b16 %v6075
          %v6141 = vunpack.c.l.b16 %v6076
          %v6142 = vunpack.c.l.b16 %v6077
          %v6143 = vunpack.c.l.b16 %v6078
          %v6144 = vunpack.c.l.b16 %v6079
          %v6145 = vunpack.c.l.b16 %v6080
          %v6146 = vunpack.c.l.b16 %v6081
          %v6147 = vunpack.c.l.b16 %v6082
          %v6148 = vunpack.c.l.b16 %v6083
          %v6149 = vunpack.c.l.b16 %v6084
          %v6150 = vunpack.c.l.b16 %v6085
          %v6151 = vunpack.c.l.b16 %v6086
          %v6152 = vunpack.c.l.b16 %v6087
          %v6153 = vunpack.c.l.b16 %v6088
          %v6154 = vunpack.c.l.b16 %v6089
          %v6155 = vunpack.c.l.b16 %v6090
          %v6156 = vunpack.c.l.b16 %v6091
          %v6157 = vunpack.c.l.b16 %v6092
          %v6158 = vunpack.c.l.b16 %v6093
          %v6159 = vunpack.c.l.b16 %v6094
          %v6160 = vunpack.c.l.b16 %v6095
          %v6161 = vunpack.c.l.b16 %v6096
          %v6162 = vunpack.c.l.b16 %v6097
          %v6163 = vunpack.c.l.b16 %v6098
          %v6164 = vunpack.c.l.b16 %v6099
          %v6165 = vpack.c.b16 %v6134, %v6133
          %v6166 = vpack.c.b16 %v6136, %v6135
          %v6167 = vpack.c.b16 %v6138, %v6137
          %v6168 = vpack.c.b16 %v6140, %v6139
          %v6169 = vpack.c.b16 %v6142, %v6141
          %v6170 = vpack.c.b16 %v6144, %v6143
          %v6171 = vpack.c.b16 %v6146, %v6145
          %v6172 = vpack.c.b16 %v6148, %v6147
          %v6173 = vpack.c.b16 %v6150, %v6149
          %v6174 = vpack.c.b16 %v6152, %v6151
          %v6175 = vpack.c.b16 %v6154, %v6153
          %v6176 = vpack.c.b16 %v6156, %v6155
          %v6177 = vpack.c.b16 %v6158, %v6157
          %v6178 = vpack.c.b16 %v6160, %v6159
          %v6179 = vpack.c.b16 %v6162, %v6161
          %v6180 = vpack.c.b16 %v6164, %v6163
          %6197 = vmatpush.bf16.msra.mxu0 %v6172
          %6198 = vmatpush.bf16.msra.mxu0 %v6171
          %6199 = vmatpush.bf16.msra.mxu0 %v6170
          %6200 = vmatpush.bf16.msra.mxu0 %v6169
          %6201 = vmatpush.bf16.msra.mxu0 %v6168
          %6202 = vmatpush.bf16.msra.mxu0 %v6167
          %6203 = vmatpush.bf16.msra.mxu0 %v6166
          %6204 = vmatpush.bf16.msra.mxu0 %v6165
          %6205 = vmatmul.bf16.gmra.mxu0 %v6066
          %v6206 = vpop.f32.mrf.mxu0
          %v6207 = vadd.f32 %v6100, %v6206
          %v6208 = vpop.f32.mrf.mxu0
          %6209 = vdwg.mxu0
          %6210 = vmatpush.bf16.msra.mxu0 %v6180
          %6211 = vmatpush.bf16.msra.mxu0 %v6179
          %6212 = vmatpush.bf16.msra.mxu0 %v6178
          %6213 = vmatpush.bf16.msra.mxu0 %v6177
          %6214 = vmatpush.bf16.msra.mxu0 %v6176
          %6215 = vmatpush.bf16.msra.mxu0 %v6175
          %6216 = vmatpush.bf16.msra.mxu0 %v6174
          %6217 = vmatpush.bf16.msra.mxu0 %v6173
          %6218 = vmatmul.bf16.gmra.mxu0 %v6067
          %v6219 = vpop.f32.mrf.mxu0
          %v6220 = vadd.f32 %v6207, %v6219
          %v6221 = vpop.f32.mrf.mxu0
          %6222 = vdwg.mxu0
          %v6223 = vmax.f32 %v6220, 0.0
          %v6224 = vpack.c.bf16 %v6223, %v6223
          %v6225 = vld [vmem:[#allocation6] sm:$0xf]
          %v6226 = vld [vmem:[#allocation6 + $0x4] sm:$0xf]
          %v6227 = vld [vmem:[#allocation6 + $0x8] sm:$0xf]
          %v6228 = vld [vmem:[#allocation6 + $0xc] sm:$0xf]
          %v6229 = vld [vmem:[#allocation6 + $0x10] sm:$0xf]
          %v6230 = vld [vmem:[#allocation6 + $0x14] sm:$0xf]
          %v6231 = vld [vmem:[#allocation6 + $0x18] sm:$0xf]
          %v6232 = vld [vmem:[#allocation6 + $0x1c] sm:$0xf]
          %v6233 = vld [vmem:[#allocation6 + $0x20] sm:$0xf]
          %v6234 = vld [vmem:[#allocation6 + $0x24] sm:$0xf]
          %v6235 = vld [vmem:[#allocation6 + $0x28] sm:$0xf]
          %v6236 = vld [vmem:[#allocation6 + $0x2c] sm:$0xf]
          %v6237 = vld [vmem:[#allocation6 + $0x30] sm:$0xf]
          %v6238 = vld [vmem:[#allocation6 + $0x34] sm:$0xf]
          %v6239 = vld [vmem:[#allocation6 + $0x38] sm:$0xf]
          %v6240 = vld [vmem:[#allocation6 + $0x3c] sm:$0xf]
          %v6241 = vld [vmem:[%s14] sm:$0x1]
          %v6258 = vunpack.c.l.b16 %v6225
          %v6259 = vunpack.c.l.b16 %v6226
          %v6260 = vunpack.c.l.b16 %v6227
          %v6261 = vunpack.c.l.b16 %v6228
          %v6262 = vunpack.c.l.b16 %v6229
          %v6263 = vunpack.c.l.b16 %v6230
          %v6264 = vunpack.c.l.b16 %v6231
          %v6265 = vunpack.c.l.b16 %v6232
          %v6266 = vunpack.c.l.b16 %v6233
          %v6267 = vunpack.c.l.b16 %v6234
          %v6268 = vunpack.c.l.b16 %v6235
          %v6269 = vunpack.c.l.b16 %v6236
          %v6270 = vunpack.c.l.b16 %v6237
          %v6271 = vunpack.c.l.b16 %v6238
          %v6272 = vunpack.c.l.b16 %v6239
          %v6273 = vunpack.c.l.b16 %v6240
          %v6274 = vpack.c.b16 %v6259, %v6258
          %v6275 = vpack.c.b16 %v6261, %v6260
          %v6276 = vpack.c.b16 %v6263, %v6262
          %v6277 = vpack.c.b16 %v6265, %v6264
          %v6278 = vpack.c.b16 %v6267, %v6266
          %v6279 = vpack.c.b16 %v6269, %v6268
          %v6280 = vpack.c.b16 %v6271, %v6270
          %v6281 = vpack.c.b16 %v6273, %v6272
          %6290 = vmatpush.bf16.msra.mxu0 %v6281
          %6291 = vmatpush.bf16.msra.mxu0 %v6280
          %6292 = vmatpush.bf16.msra.mxu0 %v6279
          %6293 = vmatpush.bf16.msra.mxu0 %v6278
          %6294 = vmatpush.bf16.msra.mxu0 %v6277
          %6295 = vmatpush.bf16.msra.mxu0 %v6276
          %6296 = vmatpush.bf16.msra.mxu0 %v6275
          %6297 = vmatpush.bf16.msra.mxu0 %v6274
          %6298 = vmatmul.bf16.gmra.mxu0 %v6224
          %v6299 = vpop.f32.mrf.mxu0
          %v6300 = vadd.f32 %v6241, %v6299
          %v6301 = vpop.f32.mrf.mxu0
          %6302 = vdwg.mxu0
          %6303 = vst [vmem:[%s543] sm:$0x1] %v6300
        $region96: #{tpu_custom_call.1} parent=79 // pred_fallthru
          _
        %s6304 = sand.u32 %s373, 1
        %s6305 = scalar_lea.sflag [#allocation5], %s6304
        %s6306 = sand.u32 %s373, 1
        %s6307 = scalar_lea.vmem [#allocation8], %s6306
        // Predicated region
        $region97: #{tpu_custom_call.1} parent=79 // pred_check
          %p6308 = pneg %p383
        $region98: #{tpu_custom_call.1} parent=79 // pred_check_branch
          %6310 = sbr.rel (%p6308) target = $region100
        $region99: #{tpu_custom_call.1} parent=79 // pred_region
          %6312 = vsyncadd %s6305, 0
          %s6313 = scalar_lea.hbm %s15, %s35
          %s6315 = sshll.u32 %s6307, 4
          %s6316 = int_to_ptr.vmem [resolvable:$true] %s6315
          %s6317 = sshll.u32 %s6313, 4
          %s6318 = int_to_ptr.hbm [resolvable:$true] %s6317
          %6320 = dma.vmem_to_hbm [thread:$0]  %s6316, 16, %s6318, %s6305
        $region100: #{tpu_custom_call.1} parent=79 // pred_fallthru
          _
      $region80: #{tpu_custom_call.1} parent=5 // pred_fallthru
        _
      %p6321 = scmp.le.s32.totalorder 2, %s26
      // Predicated region
      $region101: #{tpu_custom_call.1} parent=5 // pred_check
        %p6322 = pneg %p6321
      $region102: #{tpu_custom_call.1} parent=5 // pred_check_branch
        %6324 = sbr.rel (%p6322) target = $region104
      $region103: #{tpu_custom_call.1} parent=5 // pred_region
        %s6325 = ssub.s32 %s26, 2
        // Predicated region
        $region105: #{tpu_custom_call.1} parent=103 // pred_check
          %p6326 = pneg %p389
        $region106: #{tpu_custom_call.1} parent=103 // pred_check_branch
          %6328 = sbr.rel (%p6326) target = $region108
        $region107: #{tpu_custom_call.1} parent=103 // pred_region
          %s6329 = sand.u32 %s374, 1
          %s6330 = scalar_lea.sflag [#allocation5], %s6329
          %s6331 = sand.u32 %s374, 1
          %s6332 = scalar_lea.vmem [#allocation8], %s6331
          %6334 = dma.done %s6330, 16
        $region108: #{tpu_custom_call.1} parent=103 // pred_fallthru
          _
      $region104: #{tpu_custom_call.1} parent=5 // pred_fallthru
        _
    $region6: #{tpu_custom_call.1} parent=1 // loop_footer
      %s30 = sadd.s32 1, %s26
    $region7: #{tpu_custom_call.1} parent=1 // loop_footer_branch
      %25 = sbr.rel target = $region3
    $region8: #{tpu_custom_call.1} parent=1 // loop_exit
      _
    %6335 = vsyncpa [#allocation4], 1
    %s6336 = scalar_lea.sflag [#allocation4], 1
    %6337 = vsyncpa %s6336, 1
    %6338 = vsyncpa [#allocation7], 1
    %6339 = vsyncpa [#allocation5], 1
    %s6340 = scalar_lea.sflag [#allocation5], 1
    %6341 = vsyncpa %s6340, 1

</llo_original>
